<compile_context>
chip_gen: v7x
topology: tpu7x:2x2x1
jax: 0.10.0
libtpu: 0.0.40
codegen_flags: <defaults>
</compile_context>

<pallas_src>
import math

import jax
import jax.numpy as jnp
from jax.experimental import pallas as pl
from jax.experimental.pallas import tpu as pltpu  # noqa: F401  (TPU backend assumed)

# ---- hyperparameters consistent with the module (d_model % num_heads == 0) ----
B = 2
S = 8
D_MODEL = 48
NUM_HEADS = 6
D_K = D_MODEL // NUM_HEADS
D_FF = 4 * D_MODEL
LN_EPS = 1e-5                 # torch.nn.LayerNorm default
MASK_VAL = -1e30              # float32 masking value, as in the PyTorch module
_INV_SQRT2 = 0.7071067811865476


def _layer_norm(z, g, b):
    mu = jnp.mean(z, axis=-1, keepdims=True)
    var = jnp.mean((z - mu) * (z - mu), axis=-1, keepdims=True)
    return (z - mu) * jax.lax.rsqrt(var + LN_EPS) * g + b


# ----------------------------- fused Pallas kernel -----------------------------
def _encoder_layer_kernel(x_ref, madd_ref, wqkv_ref, bqkv_ref, wo_ref, bo_ref,
                          g1_ref, be1_ref, w1_ref, bf1_ref, w2_ref, bf2_ref,
                          g2_ref, be2_ref, o_ref):
    bsz, s, d = x_ref.shape
    x = x_ref[...].reshape(bsz * s, d)                       # (B*S, D) flattened rows

    # fused Q/K/V projection; 1/sqrt(d_k) already folded into the Q slice host-side
    qkv = jnp.dot(x, wqkv_ref[...],
                  preferred_element_type=jnp.float32) + bqkv_ref[...]    # (B*S, 3D)

    # attention: softmax is per batch element (mask differs); heads statically unrolled as
    # 2-D MXU matmuls; combine_heads is fused into W_o by accumulating per-head
    # (S, Dk) @ (Dk, D) contributions (no lane-offset concatenate).
    rows = []
    for b in range(bsz):
        qkv_b = qkv[b * s:(b + 1) * s, :]                    # (S, 3D) sublane-aligned slice
        madd_b = madd_ref[b]                                 # (1, S) additive mask (hoisted)
        ctx = None
        for h in range(NUM_HEADS):
            q_h = qkv_b[:, h * D_K:(h + 1) * D_K]                            # (S, Dk)
            k_h = qkv_b[:, d + h * D_K:d + (h + 1) * D_K]                    # (S, Dk)
            v_h = qkv_b[:, 2 * d + h * D_K:2 * d + (h + 1) * D_K]            # (S, Dk)
            sc = jax.lax.dot_general(q_h, k_h, (((1,), (1,)), ((), ())),
                                     preferred_element_type=jnp.float32)     # (S, S)
            sc = sc + madd_b                                 # masked keys -> -1e30
            sc = sc - jnp.max(sc, axis=-1, keepdims=True)
            p = jnp.exp(sc)
            p = p / jnp.sum(p, axis=-1, keepdims=True)       # exact softmax denominator
            o_h = jnp.dot(p, v_h, preferred_element_type=jnp.float32)        # (S, Dk)
            c_h = jnp.dot(o_h, wo_ref[h * D_K:(h + 1) * D_K, :],
                          preferred_element_type=jnp.float32)                # (S, D)
            ctx = c_h if ctx is None else ctx + c_h
        rows.append(ctx)
    attn = jnp.concatenate(rows, axis=0) + bo_ref[...]       # (B*S, D), sublane-aligned concat

    # residual + LayerNorm 1 (dropout is identity at inference)
    x1 = _layer_norm(x + attn, g1_ref[...], be1_ref[...])

    # feed-forward: Linear -> exact (erf) GELU -> Linear, over all B*S rows at once
    hid = jnp.dot(x1, w1_ref[...], preferred_element_type=jnp.float32) + bf1_ref[...]
    hid = 0.5 * hid * (1.0 + jax.lax.erf(hid * _INV_SQRT2))
    ff = jnp.dot(hid, w2_ref[...], preferred_element_type=jnp.float32) + bf2_ref[...]

    # residual + LayerNorm 2
    out = _layer_norm(x1 + ff, g2_ref[...], be2_ref[...])
    o_ref[...] = out.reshape(bsz, s, d)


# ----------------------------- one-time parameter prep (host side) -----------------------------
def prepare_params(p):
    """Fuse Q/K/V weights (with 1/sqrt(d_k) folded into Q) and reshape biases/LN params.
    Done once at init, not per forward call."""
    scale = 1.0 / math.sqrt(D_K)
    d = D_MODEL
    return {
        'wqkv': jnp.concatenate([p['wq'] * scale, p['wk'], p['wv']], axis=1),    # (D, 3D)
        'bqkv': jnp.concatenate([p['bq'] * scale, p['bk'], p['bv']]).reshape(1, 3 * d),
        'wo': p['wo'],                                                           # (D, D)
        'bo': p['bo'].reshape(1, d),
        'ln1_g': p['ln1_g'].reshape(1, d), 'ln1_b': p['ln1_b'].reshape(1, d),
        'w1': p['w1'], 'b1': p['b1'].reshape(1, D_FF),
        'w2': p['w2'], 'b2': p['b2'].reshape(1, d),
        'ln2_g': p['ln2_g'].reshape(1, d), 'ln2_b': p['ln2_b'].reshape(1, d),
    }


# ----------------------------- wrapper -----------------------------
def encoder_layer(kp, x, mask):
    """x: (B, S, D) f32, mask: (B, S) f32 (1=keep, 0=masked).  kp = prepare_params(params)."""
    bsz, s, d = x.shape
    # additive mask precomputed once per call (matches torch `mask == 0` semantics)
    madd = jnp.where(mask == 0.0, jnp.float32(MASK_VAL), jnp.float32(0.0)).reshape(bsz, 1, s)

    args = (x, madd, kp['wqkv'], kp['bqkv'], kp['wo'], kp['bo'],
            kp['ln1_g'], kp['ln1_b'], kp['w1'], kp['b1'],
            kp['w2'], kp['b2'], kp['ln2_g'], kp['ln2_b'])

    bs = bsz * s
    flops = (2 * bs * d * 3 * d                       # fused QKV projection
             + 4 * bsz * NUM_HEADS * s * s * D_K      # QK^T + P@V
             + 2 * bs * d * d                         # combine_heads fused with W_o
             + 4 * bs * d * D_FF)                     # FFN (two matmuls)
    transcendentals = bsz * NUM_HEADS * s * s + bs * D_FF + 2 * bs
    bytes_accessed = 4 * (sum(int(a.size) for a in args) + bs * d)

    # single invocation: no grid, every operand fully VMEM-resident (<0.5 MB total)
    return pl.pallas_call(
        _encoder_layer_kernel,
        out_shape=jax.ShapeDtypeStruct((bsz, s, d), jnp.float32),
        cost_estimate=pl.CostEstimate(flops=flops,
                                      transcendentals=transcendentals,
                                      bytes_accessed=bytes_accessed),
    )(*args)


# ----------------------------- plain-JAX reference (for validation) -----------------------------
def encoder_layer_ref(params, x, mask):
    def lin(t, w, b):
        return t @ w + b

    def ln(z, g, be):
        mu = z.mean(-1, keepdims=True)
        var = ((z - mu) ** 2).mean(-1, keepdims=True)
        return (z - mu) / jnp.sqrt(var + LN_EPS) * g + be

    b_, s_, d_ = x.shape

    def split(t):
        return t.reshape(b_, s_, NUM_HEADS, D_K).transpose(0, 2, 1, 3)

    q = split(lin(x, params['wq'], params['bq']))
    k = split(lin(x, params['wk'], params['bk']))
    v = split(lin(x, params['wv'], params['bv']))
    scores = jnp.einsum('bhqd,bhkd->bhqk', q, k) / math.sqrt(D_K)
    scores = jnp.where(mask[:, None, None, :] == 0.0, MASK_VAL, scores)
    p = jax.nn.softmax(scores, axis=-1)
    o = jnp.einsum('bhqk,bhkd->bhqd', p, v).transpose(0, 2, 1, 3).reshape(b_, s_, d_)
    attn = lin(o, params['wo'], params['bo'])
    x1 = ln(x + attn, params['ln1_g'], params['ln1_b'])
    h = lin(x1, params['w1'], params['b1'])
    h = 0.5 * h * (1.0 + jax.lax.erf(h * _INV_SQRT2))
    ff = lin(h, params['w2'], params['b2'])
    return ln(x1 + ff, params['ln2_g'], params['ln2_b'])


# ----------------------------- deterministic parameter init -----------------------------
def init_linear(key, din, dout):
    k1, k2 = jax.random.split(key)
    bound = 1.0 / math.sqrt(din)
    w = jax.random.uniform(k1, (din, dout), jnp.float32, -bound, bound)   # stored (Din, Dout)
    b = jax.random.uniform(k2, (dout,), jnp.float32, -bound, bound)
    return w, b


def init_params(key):
    ks = jax.random.split(key, 6)          # exactly the number of linear layers
    p = {}
    for name, kk in zip(('q', 'k', 'v', 'o'), ks[:4]):
        w, b = init_linear(kk, D_MODEL, D_MODEL)
        p['w' + name] = w
        p['b' + name] = b
    p['w1'], p['b1'] = init_linear(ks[4], D_MODEL, D_FF)
    p['w2'], p['b2'] = init_linear(ks[5], D_FF, D_MODEL)
    p['ln1_g'] = jnp.ones((D_MODEL,), jnp.float32)
    p['ln1_b'] = jnp.zeros((D_MODEL,), jnp.float32)
    p['ln2_g'] = jnp.ones((D_MODEL,), jnp.float32)
    p['ln2_b'] = jnp.zeros((D_MODEL,), jnp.float32)
    return p


if __name__ == "__main__":
    key = jax.random.PRNGKey(0)
    kparam, kx = jax.random.split(key)
    params = init_params(kparam)
    kernel_params = prepare_params(params)       # one-time host-side weight fusion

    x = jax.random.normal(kx, (B, S, D_MODEL), jnp.float32)
    mask = jnp.ones((B, S), jnp.float32).at[:, -2:].set(0.0)   # mask last two key positions

    out = jax.jit(encoder_layer)(kernel_params, x, mask)
    out = jax.block_until_ready(out)

    ref = encoder_layer_ref(params, x, mask)
    assert out.shape == (B, S, D_MODEL)
    assert bool(jnp.all(jnp.isfinite(out)))
    # exact softmax denominator now -> tight tolerance (was 2e-2 with approx reciprocal)
    assert bool(jnp.allclose(out, ref, atol=1e-3, rtol=1e-3)), \
        float(jnp.max(jnp.abs(out - ref)))
    print("KERNEL_OK")
</pallas_src>

<mosaic_0001>
module attributes {stable_mosaic.version = 11 : i64} {
  func.func @_encoder_layer_kernel(%arg0: memref<2x8x48xf32, #tpu.memory_space<vmem>>, %arg1: memref<2x1x8xf32, #tpu.memory_space<vmem>>, %arg2: memref<48x144xf32, #tpu.memory_space<vmem>>, %arg3: memref<1x144xf32, #tpu.memory_space<vmem>>, %arg4: memref<48x48xf32, #tpu.memory_space<vmem>>, %arg5: memref<1x48xf32, #tpu.memory_space<vmem>>, %arg6: memref<1x48xf32, #tpu.memory_space<vmem>>, %arg7: memref<1x48xf32, #tpu.memory_space<vmem>>, %arg8: memref<48x192xf32, #tpu.memory_space<vmem>>, %arg9: memref<1x192xf32, #tpu.memory_space<vmem>>, %arg10: memref<192x48xf32, #tpu.memory_space<vmem>>, %arg11: memref<1x48xf32, #tpu.memory_space<vmem>>, %arg12: memref<1x48xf32, #tpu.memory_space<vmem>>, %arg13: memref<1x48xf32, #tpu.memory_space<vmem>>, %arg14: memref<2x8x48xf32, #tpu.memory_space<vmem>>) attributes {dimension_semantics = [], scalar_prefetch = 0 : i64, scratch_operands = 0 : i64, tpu.core_type = #tpu.core_type<tc>} {
    %c0 = arith.constant 0 : index
    %c0_0 = arith.constant 0 : index
    %c0_1 = arith.constant 0 : index
    %0 = vector.load %arg0[%c0, %c0_0, %c0_1] : memref<2x8x48xf32, #tpu.memory_space<vmem>>, vector<2x8x48xf32>
    %1 = vector.shape_cast %0 : vector<2x8x48xf32> to vector<16x48xf32>
    %c0_2 = arith.constant 0 : index
    %c0_3 = arith.constant 0 : index
    %2 = vector.load %arg2[%c0_2, %c0_3] : memref<48x144xf32, #tpu.memory_space<vmem>>, vector<48x144xf32>
    %cst = arith.constant dense<0.000000e+00> : vector<16x144xf32>
    %3 = tpu.matmul %1, %2, %cst {dimension_numbers = #tpu.dot_dimension_numbers<[1], [0], [0], [1], [0, 0, 1, 1], [], []>} : vector<16x48xf32>, vector<48x144xf32>, vector<16x144xf32> -> vector<16x144xf32>
    %c0_4 = arith.constant 0 : index
    %c0_5 = arith.constant 0 : index
    %4 = vector.load %arg3[%c0_4, %c0_5] : memref<1x144xf32, #tpu.memory_space<vmem>>, vector<1x144xf32>
    %5 = vector.broadcast %4 : vector<1x144xf32> to vector<16x144xf32>
    %6 = arith.addf %3, %5 : vector<16x144xf32>
    %7 = vector.extract_strided_slice %6 {offsets = [0, 0], sizes = [8, 144], strides = [1, 1]} : vector<16x144xf32> to vector<8x144xf32>
    %c0_6 = arith.constant 0 : index
    %c0_7 = arith.constant 0 : index
    %c0_8 = arith.constant 0 : index
    %8 = vector.load %arg1[%c0_6, %c0_7, %c0_8] : memref<2x1x8xf32, #tpu.memory_space<vmem>>, vector<1x1x8xf32>
    %9 = vector.shape_cast %8 : vector<1x1x8xf32> to vector<1x8xf32>
    %10 = vector.extract_strided_slice %7 {offsets = [0, 0], sizes = [8, 8], strides = [1, 1]} : vector<8x144xf32> to vector<8x8xf32>
    %11 = vector.extract_strided_slice %7 {offsets = [0, 48], sizes = [8, 8], strides = [1, 1]} : vector<8x144xf32> to vector<8x8xf32>
    %12 = vector.extract_strided_slice %7 {offsets = [0, 96], sizes = [8, 8], strides = [1, 1]} : vector<8x144xf32> to vector<8x8xf32>
    %cst_9 = arith.constant dense<0.000000e+00> : vector<8x8xf32>
    %13 = tpu.matmul %10, %11, %cst_9 {dimension_numbers = #tpu.dot_dimension_numbers<[1], [1], [0], [0], [0, 0, 1, 0], [], []>} : vector<8x8xf32>, vector<8x8xf32>, vector<8x8xf32> -> vector<8x8xf32>
    %14 = vector.broadcast %9 : vector<1x8xf32> to vector<8x8xf32>
    %15 = arith.addf %13, %14 : vector<8x8xf32>
    %cst_10 = arith.constant dense<0xFF800000> : vector<8xf32>
    %16 = vector.multi_reduction <maximumf>, %15, %cst_10 [1] : vector<8x8xf32> to vector<8xf32>
    %17 = vector.shape_cast %16 : vector<8xf32> to vector<8x1xf32>
    %18 = vector.broadcast %17 : vector<8x1xf32> to vector<8x8xf32>
    %19 = arith.subf %15, %18 : vector<8x8xf32>
    %20 = math.exp %19 : vector<8x8xf32>
    %cst_11 = arith.constant dense<0.000000e+00> : vector<8xf32>
    %21 = vector.multi_reduction <add>, %20, %cst_11 [1] : vector<8x8xf32> to vector<8xf32>
    %22 = vector.shape_cast %21 : vector<8xf32> to vector<8x1xf32>
    %23 = vector.broadcast %22 : vector<8x1xf32> to vector<8x8xf32>
    %24 = arith.divf %20, %23 : vector<8x8xf32>
    %cst_12 = arith.constant dense<0.000000e+00> : vector<8x8xf32>
    %25 = tpu.matmul %24, %12, %cst_12 {dimension_numbers = #tpu.dot_dimension_numbers<[1], [0], [0], [1], [0, 0, 1, 1], [], []>} : vector<8x8xf32>, vector<8x8xf32>, vector<8x8xf32> -> vector<8x8xf32>
    %c0_13 = arith.constant 0 : index
    %c0_14 = arith.constant 0 : index
    %26 = vector.load %arg4[%c0_13, %c0_14] : memref<48x48xf32, #tpu.memory_space<vmem>>, vector<8x48xf32>
    %cst_15 = arith.constant dense<0.000000e+00> : vector<8x48xf32>
    %27 = tpu.matmul %25, %26, %cst_15 {dimension_numbers = #tpu.dot_dimension_numbers<[1], [0], [0], [1], [0, 0, 1, 1], [], []>} : vector<8x8xf32>, vector<8x48xf32>, vector<8x48xf32> -> vector<8x48xf32>
    %28 = vector.extract_strided_slice %7 {offsets = [0, 8], sizes = [8, 8], strides = [1, 1]} : vector<8x144xf32> to vector<8x8xf32>
    %29 = vector.extract_strided_slice %7 {offsets = [0, 56], sizes = [8, 8], strides = [1, 1]} : vector<8x144xf32> to vector<8x8xf32>
    %30 = vector.extract_strided_slice %7 {offsets = [0, 104], sizes = [8, 8], strides = [1, 1]} : vector<8x144xf32> to vector<8x8xf32>
    %cst_16 = arith.constant dense<0.000000e+00> : vector<8x8xf32>
    %31 = tpu.matmul %28, %29, %cst_16 {dimension_numbers = #tpu.dot_dimension_numbers<[1], [1], [0], [0], [0, 0, 1, 0], [], []>} : vector<8x8xf32>, vector<8x8xf32>, vector<8x8xf32> -> vector<8x8xf32>
    %32 = vector.broadcast %9 : vector<1x8xf32> to vector<8x8xf32>
    %33 = arith.addf %31, %32 : vector<8x8xf32>
    %cst_17 = arith.constant dense<0xFF800000> : vector<8xf32>
    %34 = vector.multi_reduction <maximumf>, %33, %cst_17 [1] : vector<8x8xf32> to vector<8xf32>
    %35 = vector.shape_cast %34 : vector<8xf32> to vector<8x1xf32>
    %36 = vector.broadcast %35 : vector<8x1xf32> to vector<8x8xf32>
    %37 = arith.subf %33, %36 : vector<8x8xf32>
    %38 = math.exp %37 : vector<8x8xf32>
    %cst_18 = arith.constant dense<0.000000e+00> : vector<8xf32>
    %39 = vector.multi_reduction <add>, %38, %cst_18 [1] : vector<8x8xf32> to vector<8xf32>
    %40 = vector.shape_cast %39 : vector<8xf32> to vector<8x1xf32>
    %41 = vector.broadcast %40 : vector<8x1xf32> to vector<8x8xf32>
    %42 = arith.divf %38, %41 : vector<8x8xf32>
    %cst_19 = arith.constant dense<0.000000e+00> : vector<8x8xf32>
    %43 = tpu.matmul %42, %30, %cst_19 {dimension_numbers = #tpu.dot_dimension_numbers<[1], [0], [0], [1], [0, 0, 1, 1], [], []>} : vector<8x8xf32>, vector<8x8xf32>, vector<8x8xf32> -> vector<8x8xf32>
    %c8 = arith.constant 8 : index
    %c0_20 = arith.constant 0 : index
    %44 = vector.load %arg4[%c8, %c0_20] : memref<48x48xf32, #tpu.memory_space<vmem>>, vector<8x48xf32>
    %cst_21 = arith.constant dense<0.000000e+00> : vector<8x48xf32>
    %45 = tpu.matmul %43, %44, %cst_21 {dimension_numbers = #tpu.dot_dimension_numbers<[1], [0], [0], [1], [0, 0, 1, 1], [], []>} : vector<8x8xf32>, vector<8x48xf32>, vector<8x48xf32> -> vector<8x48xf32>
    %46 = arith.addf %27, %45 : vector<8x48xf32>
    %47 = vector.extract_strided_slice %7 {offsets = [0, 16], sizes = [8, 8], strides = [1, 1]} : vector<8x144xf32> to vector<8x8xf32>
    %48 = vector.extract_strided_slice %7 {offsets = [0, 64], sizes = [8, 8], strides = [1, 1]} : vector<8x144xf32> to vector<8x8xf32>
    %49 = vector.extract_strided_slice %7 {offsets = [0, 112], sizes = [8, 8], strides = [1, 1]} : vector<8x144xf32> to vector<8x8xf32>
    %cst_22 = arith.constant dense<0.000000e+00> : vector<8x8xf32>
    %50 = tpu.matmul %47, %48, %cst_22 {dimension_numbers = #tpu.dot_dimension_numbers<[1], [1], [0], [0], [0, 0, 1, 0], [], []>} : vector<8x8xf32>, vector<8x8xf32>, vector<8x8xf32> -> vector<8x8xf32>
    %51 = vector.broadcast %9 : vector<1x8xf32> to vector<8x8xf32>
    %52 = arith.addf %50, %51 : vector<8x8xf32>
    %cst_23 = arith.constant dense<0xFF800000> : vector<8xf32>
    %53 = vector.multi_reduction <maximumf>, %52, %cst_23 [1] : vector<8x8xf32> to vector<8xf32>
    %54 = vector.shape_cast %53 : vector<8xf32> to vector<8x1xf32>
    %55 = vector.broadcast %54 : vector<8x1xf32> to vector<8x8xf32>
    %56 = arith.subf %52, %55 : vector<8x8xf32>
    %57 = math.exp %56 : vector<8x8xf32>
    %cst_24 = arith.constant dense<0.000000e+00> : vector<8xf32>
    %58 = vector.multi_reduction <add>, %57, %cst_24 [1] : vector<8x8xf32> to vector<8xf32>
    %59 = vector.shape_cast %58 : vector<8xf32> to vector<8x1xf32>
    %60 = vector.broadcast %59 : vector<8x1xf32> to vector<8x8xf32>
    %61 = arith.divf %57, %60 : vector<8x8xf32>
    %cst_25 = arith.constant dense<0.000000e+00> : vector<8x8xf32>
    %62 = tpu.matmul %61, %49, %cst_25 {dimension_numbers = #tpu.dot_dimension_numbers<[1], [0], [0], [1], [0, 0, 1, 1], [], []>} : vector<8x8xf32>, vector<8x8xf32>, vector<8x8xf32> -> vector<8x8xf32>
    %c16 = arith.constant 16 : index
    %c0_26 = arith.constant 0 : index
    %63 = vector.load %arg4[%c16, %c0_26] : memref<48x48xf32, #tpu.memory_space<vmem>>, vector<8x48xf32>
    %cst_27 = arith.constant dense<0.000000e+00> : vector<8x48xf32>
    %64 = tpu.matmul %62, %63, %cst_27 {dimension_numbers = #tpu.dot_dimension_numbers<[1], [0], [0], [1], [0, 0, 1, 1], [], []>} : vector<8x8xf32>, vector<8x48xf32>, vector<8x48xf32> -> vector<8x48xf32>
    %65 = arith.addf %46, %64 : vector<8x48xf32>
    %66 = vector.extract_strided_slice %7 {offsets = [0, 24], sizes = [8, 8], strides = [1, 1]} : vector<8x144xf32> to vector<8x8xf32>
    %67 = vector.extract_strided_slice %7 {offsets = [0, 72], sizes = [8, 8], strides = [1, 1]} : vector<8x144xf32> to vector<8x8xf32>
    %68 = vector.extract_strided_slice %7 {offsets = [0, 120], sizes = [8, 8], strides = [1, 1]} : vector<8x144xf32> to vector<8x8xf32>
    %cst_28 = arith.constant dense<0.000000e+00> : vector<8x8xf32>
    %69 = tpu.matmul %66, %67, %cst_28 {dimension_numbers = #tpu.dot_dimension_numbers<[1], [1], [0], [0], [0, 0, 1, 0], [], []>} : vector<8x8xf32>, vector<8x8xf32>, vector<8x8xf32> -> vector<8x8xf32>
    %70 = vector.broadcast %9 : vector<1x8xf32> to vector<8x8xf32>
    %71 = arith.addf %69, %70 : vector<8x8xf32>
    %cst_29 = arith.constant dense<0xFF800000> : vector<8xf32>
    %72 = vector.multi_reduction <maximumf>, %71, %cst_29 [1] : vector<8x8xf32> to vector<8xf32>
    %73 = vector.shape_cast %72 : vector<8xf32> to vector<8x1xf32>
    %74 = vector.broadcast %73 : vector<8x1xf32> to vector<8x8xf32>
    %75 = arith.subf %71, %74 : vector<8x8xf32>
    %76 = math.exp %75 : vector<8x8xf32>
    %cst_30 = arith.constant dense<0.000000e+00> : vector<8xf32>
    %77 = vector.multi_reduction <add>, %76, %cst_30 [1] : vector<8x8xf32> to vector<8xf32>
    %78 = vector.shape_cast %77 : vector<8xf32> to vector<8x1xf32>
    %79 = vector.broadcast %78 : vector<8x1xf32> to vector<8x8xf32>
    %80 = arith.divf %76, %79 : vector<8x8xf32>
    %cst_31 = arith.constant dense<0.000000e+00> : vector<8x8xf32>
    %81 = tpu.matmul %80, %68, %cst_31 {dimension_numbers = #tpu.dot_dimension_numbers<[1], [0], [0], [1], [0, 0, 1, 1], [], []>} : vector<8x8xf32>, vector<8x8xf32>, vector<8x8xf32> -> vector<8x8xf32>
    %c24 = arith.constant 24 : index
    %c0_32 = arith.constant 0 : index
    %82 = vector.load %arg4[%c24, %c0_32] : memref<48x48xf32, #tpu.memory_space<vmem>>, vector<8x48xf32>
    %cst_33 = arith.constant dense<0.000000e+00> : vector<8x48xf32>
    %83 = tpu.matmul %81, %82, %cst_33 {dimension_numbers = #tpu.dot_dimension_numbers<[1], [0], [0], [1], [0, 0, 1, 1], [], []>} : vector<8x8xf32>, vector<8x48xf32>, vector<8x48xf32> -> vector<8x48xf32>
    %84 = arith.addf %65, %83 : vector<8x48xf32>
    %85 = vector.extract_strided_slice %7 {offsets = [0, 32], sizes = [8, 8], strides = [1, 1]} : vector<8x144xf32> to vector<8x8xf32>
    %86 = vector.extract_strided_slice %7 {offsets = [0, 80], sizes = [8, 8], strides = [1, 1]} : vector<8x144xf32> to vector<8x8xf32>
    %87 = vector.extract_strided_slice %7 {offsets = [0, 128], sizes = [8, 8], strides = [1, 1]} : vector<8x144xf32> to vector<8x8xf32>
    %cst_34 = arith.constant dense<0.000000e+00> : vector<8x8xf32>
    %88 = tpu.matmul %85, %86, %cst_34 {dimension_numbers = #tpu.dot_dimension_numbers<[1], [1], [0], [0], [0, 0, 1, 0], [], []>} : vector<8x8xf32>, vector<8x8xf32>, vector<8x8xf32> -> vector<8x8xf32>
    %89 = vector.broadcast %9 : vector<1x8xf32> to vector<8x8xf32>
    %90 = arith.addf %88, %89 : vector<8x8xf32>
    %cst_35 = arith.constant dense<0xFF800000> : vector<8xf32>
    %91 = vector.multi_reduction <maximumf>, %90, %cst_35 [1] : vector<8x8xf32> to vector<8xf32>
    %92 = vector.shape_cast %91 : vector<8xf32> to vector<8x1xf32>
    %93 = vector.broadcast %92 : vector<8x1xf32> to vector<8x8xf32>
    %94 = arith.subf %90, %93 : vector<8x8xf32>
    %95 = math.exp %94 : vector<8x8xf32>
    %cst_36 = arith.constant dense<0.000000e+00> : vector<8xf32>
    %96 = vector.multi_reduction <add>, %95, %cst_36 [1] : vector<8x8xf32> to vector<8xf32>
    %97 = vector.shape_cast %96 : vector<8xf32> to vector<8x1xf32>
    %98 = vector.broadcast %97 : vector<8x1xf32> to vector<8x8xf32>
    %99 = arith.divf %95, %98 : vector<8x8xf32>
    %cst_37 = arith.constant dense<0.000000e+00> : vector<8x8xf32>
    %100 = tpu.matmul %99, %87, %cst_37 {dimension_numbers = #tpu.dot_dimension_numbers<[1], [0], [0], [1], [0, 0, 1, 1], [], []>} : vector<8x8xf32>, vector<8x8xf32>, vector<8x8xf32> -> vector<8x8xf32>
    %c32 = arith.constant 32 : index
    %c0_38 = arith.constant 0 : index
    %101 = vector.load %arg4[%c32, %c0_38] : memref<48x48xf32, #tpu.memory_space<vmem>>, vector<8x48xf32>
    %cst_39 = arith.constant dense<0.000000e+00> : vector<8x48xf32>
    %102 = tpu.matmul %100, %101, %cst_39 {dimension_numbers = #tpu.dot_dimension_numbers<[1], [0], [0], [1], [0, 0, 1, 1], [], []>} : vector<8x8xf32>, vector<8x48xf32>, vector<8x48xf32> -> vector<8x48xf32>
    %103 = arith.addf %84, %102 : vector<8x48xf32>
    %104 = vector.extract_strided_slice %7 {offsets = [0, 40], sizes = [8, 8], strides = [1, 1]} : vector<8x144xf32> to vector<8x8xf32>
    %105 = vector.extract_strided_slice %7 {offsets = [0, 88], sizes = [8, 8], strides = [1, 1]} : vector<8x144xf32> to vector<8x8xf32>
    %106 = vector.extract_strided_slice %7 {offsets = [0, 136], sizes = [8, 8], strides = [1, 1]} : vector<8x144xf32> to vector<8x8xf32>
    %cst_40 = arith.constant dense<0.000000e+00> : vector<8x8xf32>
    %107 = tpu.matmul %104, %105, %cst_40 {dimension_numbers = #tpu.dot_dimension_numbers<[1], [1], [0], [0], [0, 0, 1, 0], [], []>} : vector<8x8xf32>, vector<8x8xf32>, vector<8x8xf32> -> vector<8x8xf32>
    %108 = vector.broadcast %9 : vector<1x8xf32> to vector<8x8xf32>
    %109 = arith.addf %107, %108 : vector<8x8xf32>
    %cst_41 = arith.constant dense<0xFF800000> : vector<8xf32>
    %110 = vector.multi_reduction <maximumf>, %109, %cst_41 [1] : vector<8x8xf32> to vector<8xf32>
    %111 = vector.shape_cast %110 : vector<8xf32> to vector<8x1xf32>
    %112 = vector.broadcast %111 : vector<8x1xf32> to vector<8x8xf32>
    %113 = arith.subf %109, %112 : vector<8x8xf32>
    %114 = math.exp %113 : vector<8x8xf32>
    %cst_42 = arith.constant dense<0.000000e+00> : vector<8xf32>
    %115 = vector.multi_reduction <add>, %114, %cst_42 [1] : vector<8x8xf32> to vector<8xf32>
    %116 = vector.shape_cast %115 : vector<8xf32> to vector<8x1xf32>
    %117 = vector.broadcast %116 : vector<8x1xf32> to vector<8x8xf32>
    %118 = arith.divf %114, %117 : vector<8x8xf32>
    %cst_43 = arith.constant dense<0.000000e+00> : vector<8x8xf32>
    %119 = tpu.matmul %118, %106, %cst_43 {dimension_numbers = #tpu.dot_dimension_numbers<[1], [0], [0], [1], [0, 0, 1, 1], [], []>} : vector<8x8xf32>, vector<8x8xf32>, vector<8x8xf32> -> vector<8x8xf32>
    %c40 = arith.constant 40 : index
    %c0_44 = arith.constant 0 : index
    %120 = vector.load %arg4[%c40, %c0_44] : memref<48x48xf32, #tpu.memory_space<vmem>>, vector<8x48xf32>
    %cst_45 = arith.constant dense<0.000000e+00> : vector<8x48xf32>
    %121 = tpu.matmul %119, %120, %cst_45 {dimension_numbers = #tpu.dot_dimension_numbers<[1], [0], [0], [1], [0, 0, 1, 1], [], []>} : vector<8x8xf32>, vector<8x48xf32>, vector<8x48xf32> -> vector<8x48xf32>
    %122 = arith.addf %103, %121 : vector<8x48xf32>
    %123 = vector.extract_strided_slice %6 {offsets = [8, 0], sizes = [8, 144], strides = [1, 1]} : vector<16x144xf32> to vector<8x144xf32>
    %c1 = arith.constant 1 : index
    %c0_46 = arith.constant 0 : index
    %c0_47 = arith.constant 0 : index
    %124 = vector.load %arg1[%c1, %c0_46, %c0_47] : memref<2x1x8xf32, #tpu.memory_space<vmem>>, vector<1x1x8xf32>
    %125 = vector.shape_cast %124 : vector<1x1x8xf32> to vector<1x8xf32>
    %126 = vector.extract_strided_slice %123 {offsets = [0, 0], sizes = [8, 8], strides = [1, 1]} : vector<8x144xf32> to vector<8x8xf32>
    %127 = vector.extract_strided_slice %123 {offsets = [0, 48], sizes = [8, 8], strides = [1, 1]} : vector<8x144xf32> to vector<8x8xf32>
    %128 = vector.extract_strided_slice %123 {offsets = [0, 96], sizes = [8, 8], strides = [1, 1]} : vector<8x144xf32> to vector<8x8xf32>
    %cst_48 = arith.constant dense<0.000000e+00> : vector<8x8xf32>
    %129 = tpu.matmul %126, %127, %cst_48 {dimension_numbers = #tpu.dot_dimension_numbers<[1], [1], [0], [0], [0, 0, 1, 0], [], []>} : vector<8x8xf32>, vector<8x8xf32>, vector<8x8xf32> -> vector<8x8xf32>
    %130 = vector.broadcast %125 : vector<1x8xf32> to vector<8x8xf32>
    %131 = arith.addf %129, %130 : vector<8x8xf32>
    %cst_49 = arith.constant dense<0xFF800000> : vector<8xf32>
    %132 = vector.multi_reduction <maximumf>, %131, %cst_49 [1] : vector<8x8xf32> to vector<8xf32>
    %133 = vector.shape_cast %132 : vector<8xf32> to vector<8x1xf32>
    %134 = vector.broadcast %133 : vector<8x1xf32> to vector<8x8xf32>
    %135 = arith.subf %131, %134 : vector<8x8xf32>
    %136 = math.exp %135 : vector<8x8xf32>
    %cst_50 = arith.constant dense<0.000000e+00> : vector<8xf32>
    %137 = vector.multi_reduction <add>, %136, %cst_50 [1] : vector<8x8xf32> to vector<8xf32>
    %138 = vector.shape_cast %137 : vector<8xf32> to vector<8x1xf32>
    %139 = vector.broadcast %138 : vector<8x1xf32> to vector<8x8xf32>
    %140 = arith.divf %136, %139 : vector<8x8xf32>
    %cst_51 = arith.constant dense<0.000000e+00> : vector<8x8xf32>
    %141 = tpu.matmul %140, %128, %cst_51 {dimension_numbers = #tpu.dot_dimension_numbers<[1], [0], [0], [1], [0, 0, 1, 1], [], []>} : vector<8x8xf32>, vector<8x8xf32>, vector<8x8xf32> -> vector<8x8xf32>
    %c0_52 = arith.constant 0 : index
    %c0_53 = arith.constant 0 : index
    %142 = vector.load %arg4[%c0_52, %c0_53] : memref<48x48xf32, #tpu.memory_space<vmem>>, vector<8x48xf32>
    %cst_54 = arith.constant dense<0.000000e+00> : vector<8x48xf32>
    %143 = tpu.matmul %141, %142, %cst_54 {dimension_numbers = #tpu.dot_dimension_numbers<[1], [0], [0], [1], [0, 0, 1, 1], [], []>} : vector<8x8xf32>, vector<8x48xf32>, vector<8x48xf32> -> vector<8x48xf32>
    %144 = vector.extract_strided_slice %123 {offsets = [0, 8], sizes = [8, 8], strides = [1, 1]} : vector<8x144xf32> to vector<8x8xf32>
    %145 = vector.extract_strided_slice %123 {offsets = [0, 56], sizes = [8, 8], strides = [1, 1]} : vector<8x144xf32> to vector<8x8xf32>
    %146 = vector.extract_strided_slice %123 {offsets = [0, 104], sizes = [8, 8], strides = [1, 1]} : vector<8x144xf32> to vector<8x8xf32>
    %cst_55 = arith.constant dense<0.000000e+00> : vector<8x8xf32>
    %147 = tpu.matmul %144, %145, %cst_55 {dimension_numbers = #tpu.dot_dimension_numbers<[1], [1], [0], [0], [0, 0, 1, 0], [], []>} : vector<8x8xf32>, vector<8x8xf32>, vector<8x8xf32> -> vector<8x8xf32>
    %148 = vector.broadcast %125 : vector<1x8xf32> to vector<8x8xf32>
    %149 = arith.addf %147, %148 : vector<8x8xf32>
    %cst_56 = arith.constant dense<0xFF800000> : vector<8xf32>
    %150 = vector.multi_reduction <maximumf>, %149, %cst_56 [1] : vector<8x8xf32> to vector<8xf32>
    %151 = vector.shape_cast %150 : vector<8xf32> to vector<8x1xf32>
    %152 = vector.broadcast %151 : vector<8x1xf32> to vector<8x8xf32>
    %153 = arith.subf %149, %152 : vector<8x8xf32>
    %154 = math.exp %153 : vector<8x8xf32>
    %cst_57 = arith.constant dense<0.000000e+00> : vector<8xf32>
    %155 = vector.multi_reduction <add>, %154, %cst_57 [1] : vector<8x8xf32> to vector<8xf32>
    %156 = vector.shape_cast %155 : vector<8xf32> to vector<8x1xf32>
    %157 = vector.broadcast %156 : vector<8x1xf32> to vector<8x8xf32>
    %158 = arith.divf %154, %157 : vector<8x8xf32>
    %cst_58 = arith.constant dense<0.000000e+00> : vector<8x8xf32>
    %159 = tpu.matmul %158, %146, %cst_58 {dimension_numbers = #tpu.dot_dimension_numbers<[1], [0], [0], [1], [0, 0, 1, 1], [], []>} : vector<8x8xf32>, vector<8x8xf32>, vector<8x8xf32> -> vector<8x8xf32>
    %c8_59 = arith.constant 8 : index
    %c0_60 = arith.constant 0 : index
    %160 = vector.load %arg4[%c8_59, %c0_60] : memref<48x48xf32, #tpu.memory_space<vmem>>, vector<8x48xf32>
    %cst_61 = arith.constant dense<0.000000e+00> : vector<8x48xf32>
    %161 = tpu.matmul %159, %160, %cst_61 {dimension_numbers = #tpu.dot_dimension_numbers<[1], [0], [0], [1], [0, 0, 1, 1], [], []>} : vector<8x8xf32>, vector<8x48xf32>, vector<8x48xf32> -> vector<8x48xf32>
    %162 = arith.addf %143, %161 : vector<8x48xf32>
    %163 = vector.extract_strided_slice %123 {offsets = [0, 16], sizes = [8, 8], strides = [1, 1]} : vector<8x144xf32> to vector<8x8xf32>
    %164 = vector.extract_strided_slice %123 {offsets = [0, 64], sizes = [8, 8], strides = [1, 1]} : vector<8x144xf32> to vector<8x8xf32>
    %165 = vector.extract_strided_slice %123 {offsets = [0, 112], sizes = [8, 8], strides = [1, 1]} : vector<8x144xf32> to vector<8x8xf32>
    %cst_62 = arith.constant dense<0.000000e+00> : vector<8x8xf32>
    %166 = tpu.matmul %163, %164, %cst_62 {dimension_numbers = #tpu.dot_dimension_numbers<[1], [1], [0], [0], [0, 0, 1, 0], [], []>} : vector<8x8xf32>, vector<8x8xf32>, vector<8x8xf32> -> vector<8x8xf32>
    %167 = vector.broadcast %125 : vector<1x8xf32> to vector<8x8xf32>
    %168 = arith.addf %166, %167 : vector<8x8xf32>
    %cst_63 = arith.constant dense<0xFF800000> : vector<8xf32>
    %169 = vector.multi_reduction <maximumf>, %168, %cst_63 [1] : vector<8x8xf32> to vector<8xf32>
    %170 = vector.shape_cast %169 : vector<8xf32> to vector<8x1xf32>
    %171 = vector.broadcast %170 : vector<8x1xf32> to vector<8x8xf32>
    %172 = arith.subf %168, %171 : vector<8x8xf32>
    %173 = math.exp %172 : vector<8x8xf32>
    %cst_64 = arith.constant dense<0.000000e+00> : vector<8xf32>
    %174 = vector.multi_reduction <add>, %173, %cst_64 [1] : vector<8x8xf32> to vector<8xf32>
    %175 = vector.shape_cast %174 : vector<8xf32> to vector<8x1xf32>
    %176 = vector.broadcast %175 : vector<8x1xf32> to vector<8x8xf32>
    %177 = arith.divf %173, %176 : vector<8x8xf32>
    %cst_65 = arith.constant dense<0.000000e+00> : vector<8x8xf32>
    %178 = tpu.matmul %177, %165, %cst_65 {dimension_numbers = #tpu.dot_dimension_numbers<[1], [0], [0], [1], [0, 0, 1, 1], [], []>} : vector<8x8xf32>, vector<8x8xf32>, vector<8x8xf32> -> vector<8x8xf32>
    %c16_66 = arith.constant 16 : index
    %c0_67 = arith.constant 0 : index
    %179 = vector.load %arg4[%c16_66, %c0_67] : memref<48x48xf32, #tpu.memory_space<vmem>>, vector<8x48xf32>
    %cst_68 = arith.constant dense<0.000000e+00> : vector<8x48xf32>
    %180 = tpu.matmul %178, %179, %cst_68 {dimension_numbers = #tpu.dot_dimension_numbers<[1], [0], [0], [1], [0, 0, 1, 1], [], []>} : vector<8x8xf32>, vector<8x48xf32>, vector<8x48xf32> -> vector<8x48xf32>
    %181 = arith.addf %162, %180 : vector<8x48xf32>
    %182 = vector.extract_strided_slice %123 {offsets = [0, 24], sizes = [8, 8], strides = [1, 1]} : vector<8x144xf32> to vector<8x8xf32>
    %183 = vector.extract_strided_slice %123 {offsets = [0, 72], sizes = [8, 8], strides = [1, 1]} : vector<8x144xf32> to vector<8x8xf32>
    %184 = vector.extract_strided_slice %123 {offsets = [0, 120], sizes = [8, 8], strides = [1, 1]} : vector<8x144xf32> to vector<8x8xf32>
    %cst_69 = arith.constant dense<0.000000e+00> : vector<8x8xf32>
    %185 = tpu.matmul %182, %183, %cst_69 {dimension_numbers = #tpu.dot_dimension_numbers<[1], [1], [0], [0], [0, 0, 1, 0], [], []>} : vector<8x8xf32>, vector<8x8xf32>, vector<8x8xf32> -> vector<8x8xf32>
    %186 = vector.broadcast %125 : vector<1x8xf32> to vector<8x8xf32>
    %187 = arith.addf %185, %186 : vector<8x8xf32>
    %cst_70 = arith.constant dense<0xFF800000> : vector<8xf32>
    %188 = vector.multi_reduction <maximumf>, %187, %cst_70 [1] : vector<8x8xf32> to vector<8xf32>
    %189 = vector.shape_cast %188 : vector<8xf32> to vector<8x1xf32>
    %190 = vector.broadcast %189 : vector<8x1xf32> to vector<8x8xf32>
    %191 = arith.subf %187, %190 : vector<8x8xf32>
    %192 = math.exp %191 : vector<8x8xf32>
    %cst_71 = arith.constant dense<0.000000e+00> : vector<8xf32>
    %193 = vector.multi_reduction <add>, %192, %cst_71 [1] : vector<8x8xf32> to vector<8xf32>
    %194 = vector.shape_cast %193 : vector<8xf32> to vector<8x1xf32>
    %195 = vector.broadcast %194 : vector<8x1xf32> to vector<8x8xf32>
    %196 = arith.divf %192, %195 : vector<8x8xf32>
    %cst_72 = arith.constant dense<0.000000e+00> : vector<8x8xf32>
    %197 = tpu.matmul %196, %184, %cst_72 {dimension_numbers = #tpu.dot_dimension_numbers<[1], [0], [0], [1], [0, 0, 1, 1], [], []>} : vector<8x8xf32>, vector<8x8xf32>, vector<8x8xf32> -> vector<8x8xf32>
    %c24_73 = arith.constant 24 : index
    %c0_74 = arith.constant 0 : index
    %198 = vector.load %arg4[%c24_73, %c0_74] : memref<48x48xf32, #tpu.memory_space<vmem>>, vector<8x48xf32>
    %cst_75 = arith.constant dense<0.000000e+00> : vector<8x48xf32>
    %199 = tpu.matmul %197, %198, %cst_75 {dimension_numbers = #tpu.dot_dimension_numbers<[1], [0], [0], [1], [0, 0, 1, 1], [], []>} : vector<8x8xf32>, vector<8x48xf32>, vector<8x48xf32> -> vector<8x48xf32>
    %200 = arith.addf %181, %199 : vector<8x48xf32>
    %201 = vector.extract_strided_slice %123 {offsets = [0, 32], sizes = [8, 8], strides = [1, 1]} : vector<8x144xf32> to vector<8x8xf32>
    %202 = vector.extract_strided_slice %123 {offsets = [0, 80], sizes = [8, 8], strides = [1, 1]} : vector<8x144xf32> to vector<8x8xf32>
    %203 = vector.extract_strided_slice %123 {offsets = [0, 128], sizes = [8, 8], strides = [1, 1]} : vector<8x144xf32> to vector<8x8xf32>
    %cst_76 = arith.constant dense<0.000000e+00> : vector<8x8xf32>
    %204 = tpu.matmul %201, %202, %cst_76 {dimension_numbers = #tpu.dot_dimension_numbers<[1], [1], [0], [0], [0, 0, 1, 0], [], []>} : vector<8x8xf32>, vector<8x8xf32>, vector<8x8xf32> -> vector<8x8xf32>
    %205 = vector.broadcast %125 : vector<1x8xf32> to vector<8x8xf32>
    %206 = arith.addf %204, %205 : vector<8x8xf32>
    %cst_77 = arith.constant dense<0xFF800000> : vector<8xf32>
    %207 = vector.multi_reduction <maximumf>, %206, %cst_77 [1] : vector<8x8xf32> to vector<8xf32>
    %208 = vector.shape_cast %207 : vector<8xf32> to vector<8x1xf32>
    %209 = vector.broadcast %208 : vector<8x1xf32> to vector<8x8xf32>
    %210 = arith.subf %206, %209 : vector<8x8xf32>
    %211 = math.exp %210 : vector<8x8xf32>
    %cst_78 = arith.constant dense<0.000000e+00> : vector<8xf32>
    %212 = vector.multi_reduction <add>, %211, %cst_78 [1] : vector<8x8xf32> to vector<8xf32>
    %213 = vector.shape_cast %212 : vector<8xf32> to vector<8x1xf32>
    %214 = vector.broadcast %213 : vector<8x1xf32> to vector<8x8xf32>
    %215 = arith.divf %211, %214 : vector<8x8xf32>
    %cst_79 = arith.constant dense<0.000000e+00> : vector<8x8xf32>
    %216 = tpu.matmul %215, %203, %cst_79 {dimension_numbers = #tpu.dot_dimension_numbers<[1], [0], [0], [1], [0, 0, 1, 1], [], []>} : vector<8x8xf32>, vector<8x8xf32>, vector<8x8xf32> -> vector<8x8xf32>
    %c32_80 = arith.constant 32 : index
    %c0_81 = arith.constant 0 : index
    %217 = vector.load %arg4[%c32_80, %c0_81] : memref<48x48xf32, #tpu.memory_space<vmem>>, vector<8x48xf32>
    %cst_82 = arith.constant dense<0.000000e+00> : vector<8x48xf32>
    %218 = tpu.matmul %216, %217, %cst_82 {dimension_numbers = #tpu.dot_dimension_numbers<[1], [0], [0], [1], [0, 0, 1, 1], [], []>} : vector<8x8xf32>, vector<8x48xf32>, vector<8x48xf32> -> vector<8x48xf32>
    %219 = arith.addf %200, %218 : vector<8x48xf32>
    %220 = vector.extract_strided_slice %123 {offsets = [0, 40], sizes = [8, 8], strides = [1, 1]} : vector<8x144xf32> to vector<8x8xf32>
    %221 = vector.extract_strided_slice %123 {offsets = [0, 88], sizes = [8, 8], strides = [1, 1]} : vector<8x144xf32> to vector<8x8xf32>
    %222 = vector.extract_strided_slice %123 {offsets = [0, 136], sizes = [8, 8], strides = [1, 1]} : vector<8x144xf32> to vector<8x8xf32>
    %cst_83 = arith.constant dense<0.000000e+00> : vector<8x8xf32>
    %223 = tpu.matmul %220, %221, %cst_83 {dimension_numbers = #tpu.dot_dimension_numbers<[1], [1], [0], [0], [0, 0, 1, 0], [], []>} : vector<8x8xf32>, vector<8x8xf32>, vector<8x8xf32> -> vector<8x8xf32>
    %224 = vector.broadcast %125 : vector<1x8xf32> to vector<8x8xf32>
    %225 = arith.addf %223, %224 : vector<8x8xf32>
    %cst_84 = arith.constant dense<0xFF800000> : vector<8xf32>
    %226 = vector.multi_reduction <maximumf>, %225, %cst_84 [1] : vector<8x8xf32> to vector<8xf32>
    %227 = vector.shape_cast %226 : vector<8xf32> to vector<8x1xf32>
    %228 = vector.broadcast %227 : vector<8x1xf32> to vector<8x8xf32>
    %229 = arith.subf %225, %228 : vector<8x8xf32>
    %230 = math.exp %229 : vector<8x8xf32>
    %cst_85 = arith.constant dense<0.000000e+00> : vector<8xf32>
    %231 = vector.multi_reduction <add>, %230, %cst_85 [1] : vector<8x8xf32> to vector<8xf32>
    %232 = vector.shape_cast %231 : vector<8xf32> to vector<8x1xf32>
    %233 = vector.broadcast %232 : vector<8x1xf32> to vector<8x8xf32>
    %234 = arith.divf %230, %233 : vector<8x8xf32>
    %cst_86 = arith.constant dense<0.000000e+00> : vector<8x8xf32>
    %235 = tpu.matmul %234, %222, %cst_86 {dimension_numbers = #tpu.dot_dimension_numbers<[1], [0], [0], [1], [0, 0, 1, 1], [], []>} : vector<8x8xf32>, vector<8x8xf32>, vector<8x8xf32> -> vector<8x8xf32>
    %c40_87 = arith.constant 40 : index
    %c0_88 = arith.constant 0 : index
    %236 = vector.load %arg4[%c40_87, %c0_88] : memref<48x48xf32, #tpu.memory_space<vmem>>, vector<8x48xf32>
    %cst_89 = arith.constant dense<0.000000e+00> : vector<8x48xf32>
    %237 = tpu.matmul %235, %236, %cst_89 {dimension_numbers = #tpu.dot_dimension_numbers<[1], [0], [0], [1], [0, 0, 1, 1], [], []>} : vector<8x8xf32>, vector<8x48xf32>, vector<8x48xf32> -> vector<8x48xf32>
    %238 = arith.addf %219, %237 : vector<8x48xf32>
    %239 = tpu.concatenate %122, %238 in 0 : vector<8x48xf32>, vector<8x48xf32> -> vector<16x48xf32>
    %c0_90 = arith.constant 0 : index
    %c0_91 = arith.constant 0 : index
    %240 = vector.load %arg5[%c0_90, %c0_91] : memref<1x48xf32, #tpu.memory_space<vmem>>, vector<1x48xf32>
    %241 = vector.broadcast %240 : vector<1x48xf32> to vector<16x48xf32>
    %242 = arith.addf %239, %241 : vector<16x48xf32>
    %243 = arith.addf %1, %242 : vector<16x48xf32>
    %c0_92 = arith.constant 0 : index
    %c0_93 = arith.constant 0 : index
    %244 = vector.load %arg6[%c0_92, %c0_93] : memref<1x48xf32, #tpu.memory_space<vmem>>, vector<1x48xf32>
    %c0_94 = arith.constant 0 : index
    %c0_95 = arith.constant 0 : index
    %245 = vector.load %arg7[%c0_94, %c0_95] : memref<1x48xf32, #tpu.memory_space<vmem>>, vector<1x48xf32>
    %cst_96 = arith.constant dense<0.000000e+00> : vector<16xf32>
    %246 = vector.multi_reduction <add>, %243, %cst_96 [1] : vector<16x48xf32> to vector<16xf32>
    %247 = vector.shape_cast %246 : vector<16xf32> to vector<16x1xf32>
    %cst_97 = arith.constant 4.800000e+01 : f32
    %248 = vector.broadcast %cst_97 : f32 to vector<16x1xf32>
    %249 = arith.divf %247, %248 : vector<16x1xf32>
    %250 = vector.broadcast %249 : vector<16x1xf32> to vector<16x48xf32>
    %251 = arith.subf %243, %250 : vector<16x48xf32>
    %252 = vector.broadcast %249 : vector<16x1xf32> to vector<16x48xf32>
    %253 = arith.subf %243, %252 : vector<16x48xf32>
    %254 = arith.mulf %251, %253 : vector<16x48xf32>
    %cst_98 = arith.constant dense<0.000000e+00> : vector<16xf32>
    %255 = vector.multi_reduction <add>, %254, %cst_98 [1] : vector<16x48xf32> to vector<16xf32>
    %256 = vector.shape_cast %255 : vector<16xf32> to vector<16x1xf32>
    %cst_99 = arith.constant 4.800000e+01 : f32
    %257 = vector.broadcast %cst_99 : f32 to vector<16x1xf32>
    %258 = arith.divf %256, %257 : vector<16x1xf32>
    %259 = vector.broadcast %249 : vector<16x1xf32> to vector<16x48xf32>
    %260 = arith.subf %243, %259 : vector<16x48xf32>
    %cst_100 = arith.constant 9.99999974E-6 : f32
    %261 = vector.broadcast %cst_100 : f32 to vector<16x1xf32>
    %262 = arith.addf %258, %261 : vector<16x1xf32>
    %263 = math.rsqrt %262 : vector<16x1xf32>
    %264 = vector.broadcast %263 : vector<16x1xf32> to vector<16x48xf32>
    %265 = arith.mulf %260, %264 : vector<16x48xf32>
    %266 = vector.broadcast %244 : vector<1x48xf32> to vector<16x48xf32>
    %267 = arith.mulf %265, %266 : vector<16x48xf32>
    %268 = vector.broadcast %245 : vector<1x48xf32> to vector<16x48xf32>
    %269 = arith.addf %267, %268 : vector<16x48xf32>
    %c0_101 = arith.constant 0 : index
    %c0_102 = arith.constant 0 : index
    %270 = vector.load %arg8[%c0_101, %c0_102] : memref<48x192xf32, #tpu.memory_space<vmem>>, vector<48x192xf32>
    %cst_103 = arith.constant dense<0.000000e+00> : vector<16x192xf32>
    %271 = tpu.matmul %269, %270, %cst_103 {dimension_numbers = #tpu.dot_dimension_numbers<[1], [0], [0], [1], [0, 0, 1, 1], [], []>} : vector<16x48xf32>, vector<48x192xf32>, vector<16x192xf32> -> vector<16x192xf32>
    %c0_104 = arith.constant 0 : index
    %c0_105 = arith.constant 0 : index
    %272 = vector.load %arg9[%c0_104, %c0_105] : memref<1x192xf32, #tpu.memory_space<vmem>>, vector<1x192xf32>
    %273 = vector.broadcast %272 : vector<1x192xf32> to vector<16x192xf32>
    %274 = arith.addf %271, %273 : vector<16x192xf32>
    %cst_106 = arith.constant 5.000000e-01 : f32
    %275 = vector.broadcast %cst_106 : f32 to vector<16x192xf32>
    %276 = arith.mulf %275, %274 : vector<16x192xf32>
    %cst_107 = arith.constant 0.707106769 : f32
    %277 = vector.broadcast %cst_107 : f32 to vector<16x192xf32>
    %278 = arith.mulf %274, %277 : vector<16x192xf32>
    %279 = math.erf %278 : vector<16x192xf32>
    %cst_108 = arith.constant 1.000000e+00 : f32
    %280 = vector.broadcast %cst_108 : f32 to vector<16x192xf32>
    %281 = arith.addf %280, %279 : vector<16x192xf32>
    %282 = arith.mulf %276, %281 : vector<16x192xf32>
    %c0_109 = arith.constant 0 : index
    %c0_110 = arith.constant 0 : index
    %283 = vector.load %arg10[%c0_109, %c0_110] : memref<192x48xf32, #tpu.memory_space<vmem>>, vector<192x48xf32>
    %cst_111 = arith.constant dense<0.000000e+00> : vector<16x48xf32>
    %284 = tpu.matmul %282, %283, %cst_111 {dimension_numbers = #tpu.dot_dimension_numbers<[1], [0], [0], [1], [0, 0, 1, 1], [], []>} : vector<16x192xf32>, vector<192x48xf32>, vector<16x48xf32> -> vector<16x48xf32>
    %c0_112 = arith.constant 0 : index
    %c0_113 = arith.constant 0 : index
    %285 = vector.load %arg11[%c0_112, %c0_113] : memref<1x48xf32, #tpu.memory_space<vmem>>, vector<1x48xf32>
    %286 = vector.broadcast %285 : vector<1x48xf32> to vector<16x48xf32>
    %287 = arith.addf %284, %286 : vector<16x48xf32>
    %288 = arith.addf %269, %287 : vector<16x48xf32>
    %c0_114 = arith.constant 0 : index
    %c0_115 = arith.constant 0 : index
    %289 = vector.load %arg12[%c0_114, %c0_115] : memref<1x48xf32, #tpu.memory_space<vmem>>, vector<1x48xf32>
    %c0_116 = arith.constant 0 : index
    %c0_117 = arith.constant 0 : index
    %290 = vector.load %arg13[%c0_116, %c0_117] : memref<1x48xf32, #tpu.memory_space<vmem>>, vector<1x48xf32>
    %cst_118 = arith.constant dense<0.000000e+00> : vector<16xf32>
    %291 = vector.multi_reduction <add>, %288, %cst_118 [1] : vector<16x48xf32> to vector<16xf32>
    %292 = vector.shape_cast %291 : vector<16xf32> to vector<16x1xf32>
    %cst_119 = arith.constant 4.800000e+01 : f32
    %293 = vector.broadcast %cst_119 : f32 to vector<16x1xf32>
    %294 = arith.divf %292, %293 : vector<16x1xf32>
    %295 = vector.broadcast %294 : vector<16x1xf32> to vector<16x48xf32>
    %296 = arith.subf %288, %295 : vector<16x48xf32>
    %297 = vector.broadcast %294 : vector<16x1xf32> to vector<16x48xf32>
    %298 = arith.subf %288, %297 : vector<16x48xf32>
    %299 = arith.mulf %296, %298 : vector<16x48xf32>
    %cst_120 = arith.constant dense<0.000000e+00> : vector<16xf32>
    %300 = vector.multi_reduction <add>, %299, %cst_120 [1] : vector<16x48xf32> to vector<16xf32>
    %301 = vector.shape_cast %300 : vector<16xf32> to vector<16x1xf32>
    %cst_121 = arith.constant 4.800000e+01 : f32
    %302 = vector.broadcast %cst_121 : f32 to vector<16x1xf32>
    %303 = arith.divf %301, %302 : vector<16x1xf32>
    %304 = vector.broadcast %294 : vector<16x1xf32> to vector<16x48xf32>
    %305 = arith.subf %288, %304 : vector<16x48xf32>
    %cst_122 = arith.constant 9.99999974E-6 : f32
    %306 = vector.broadcast %cst_122 : f32 to vector<16x1xf32>
    %307 = arith.addf %303, %306 : vector<16x1xf32>
    %308 = math.rsqrt %307 : vector<16x1xf32>
    %309 = vector.broadcast %308 : vector<16x1xf32> to vector<16x48xf32>
    %310 = arith.mulf %305, %309 : vector<16x48xf32>
    %311 = vector.broadcast %289 : vector<1x48xf32> to vector<16x48xf32>
    %312 = arith.mulf %310, %311 : vector<16x48xf32>
    %313 = vector.broadcast %290 : vector<1x48xf32> to vector<16x48xf32>
    %314 = arith.addf %312, %313 : vector<16x48xf32>
    %315 = vector.shape_cast %314 : vector<16x48xf32> to vector<2x8x48xf32>
    %c0_123 = arith.constant 0 : index
    %c0_124 = arith.constant 0 : index
    %c0_125 = arith.constant 0 : index
    %316 = vector.load %arg14[%c0_123, %c0_124, %c0_125] : memref<2x8x48xf32, #tpu.memory_space<vmem>>, vector<2x8x48xf32>
    tpu.vector_store %arg14[%c0_123, %c0_124, %c0_125], %315 {strides = array<i32>} : memref<2x8x48xf32, #tpu.memory_space<vmem>>, vector<2x8x48xf32>,
    return
  }
}

</mosaic_0001>

<llo_original>
// kernel: encoder_layer.1
$region0: #{encoder_layer.1}
  #allocation0 [shape = 'u32[]', space=smem, size = 0x4, offset = 0x4, fixed_abs, tag = 'smem constant byte address 0x4 - core index']
  #allocation1 [shape = 'u32[144,128]{1,0:T(1,128)}', space=vmem, size = 0x12000, scoped, tag = 'internal scratch']
  %s0 = inlined_call_operand.vmem [shape: f32[2,8,48], index: 0, kind: input, shape index: {}]
  %s1 = inlined_call_operand.vmem [shape: f32[2,1,8], index: 1, kind: input, shape index: {}]
  %s2 = inlined_call_operand.vmem [shape: f32[48,144], index: 2, kind: input, shape index: {}]
  %s3 = inlined_call_operand.vmem [shape: f32[1,144], index: 3, kind: input, shape index: {}]
  %s4 = inlined_call_operand.vmem [shape: f32[48,48], index: 4, kind: input, shape index: {}]
  %s5 = inlined_call_operand.vmem [shape: f32[1,48], index: 5, kind: input, shape index: {}]
  %s6 = inlined_call_operand.vmem [shape: f32[1,48], index: 6, kind: input, shape index: {}]
  %s7 = inlined_call_operand.vmem [shape: f32[1,48], index: 7, kind: input, shape index: {}]
  %s8 = inlined_call_operand.vmem [shape: f32[48,192], index: 8, kind: input, shape index: {}]
  %s9 = inlined_call_operand.vmem [shape: f32[1,192], index: 9, kind: input, shape index: {}]
  %s10 = inlined_call_operand.vmem [shape: f32[192,48], index: 10, kind: input, shape index: {}]
  %s11 = inlined_call_operand.vmem [shape: f32[1,48], index: 11, kind: input, shape index: {}]
  %s12 = inlined_call_operand.vmem [shape: f32[1,48], index: 12, kind: input, shape index: {}]
  %s13 = inlined_call_operand.vmem [shape: f32[1,48], index: 13, kind: input, shape index: {}]
  %s14 = inlined_call_operand.hbm [shape: f32[2,8,48], index: 14, kind: output, shape index: {}]
  %s15 = sld [smem:[#allocation0]]
  $region66: #{encoder_layer.1} parent=0
    _
  %s17 = ssub.s32 1, %s15
  %s18 = scalar_select 0, %s17, %s15
  $region1: #{encoder_layer.1} parent=0
    #allocation2 [shape = 'u8[8192]{0}', space=vmem, size = 0x2000, scoped, tag = 'output window, operand 0, single buffered']
    #allocation3 [shape = 's32[1]{0}', space=sflag, size = 0x4, scoped, tag = 'scoped memory for encoder_layer.1']
    %19 = vsyncpa [#allocation3], 0
    // Predicated region
    $region2: #{encoder_layer.1} parent=1 // pred_check
      _
    $region3: #{encoder_layer.1} parent=1 // pred_check_branch
      %21 = sbr.rel (0) target = $region5
    $region4: #{encoder_layer.1} parent=1 // pred_region
      _
    $region5: #{encoder_layer.1} parent=1 // pred_fallthru
      _
    // Predicated region
    $region6: #{encoder_layer.1} parent=1 // pred_check
      _
    $region7: #{encoder_layer.1} parent=1 // pred_check_branch
      %23 = sbr.rel (0) target = $region9
    $region8: #{encoder_layer.1} parent=1 // pred_region
      _
    $region9: #{encoder_layer.1} parent=1 // pred_fallthru
      _
    // Predicated region
    $region10: #{encoder_layer.1} parent=1 // pred_check
      _
    $region11: #{encoder_layer.1} parent=1 // pred_check_branch
      %25 = sbr.rel (0) target = $region13
    $region12: #{encoder_layer.1} parent=1 // pred_region
      _
    $region13: #{encoder_layer.1} parent=1 // pred_fallthru
      _
    // Predicated region
    $region14: #{encoder_layer.1} parent=1 // pred_check
      _
    $region15: #{encoder_layer.1} parent=1 // pred_check_branch
      %27 = sbr.rel (0) target = $region17
    $region16: #{encoder_layer.1} parent=1 // pred_region
      _
    $region17: #{encoder_layer.1} parent=1 // pred_fallthru
      _
    // Predicated region
    $region18: #{encoder_layer.1} parent=1 // pred_check
      _
    $region19: #{encoder_layer.1} parent=1 // pred_check_branch
      %29 = sbr.rel (0) target = $region21
    $region20: #{encoder_layer.1} parent=1 // pred_region
      _
    $region21: #{encoder_layer.1} parent=1 // pred_fallthru
      _
    // Predicated region
    $region22: #{encoder_layer.1} parent=1 // pred_check
      _
    $region23: #{encoder_layer.1} parent=1 // pred_check_branch
      %31 = sbr.rel (0) target = $region25
    $region24: #{encoder_layer.1} parent=1 // pred_region
      _
    $region25: #{encoder_layer.1} parent=1 // pred_fallthru
      _
    // Predicated region
    $region26: #{encoder_layer.1} parent=1 // pred_check
      _
    $region27: #{encoder_layer.1} parent=1 // pred_check_branch
      %33 = sbr.rel (0) target = $region29
    $region28: #{encoder_layer.1} parent=1 // pred_region
      _
    $region29: #{encoder_layer.1} parent=1 // pred_fallthru
      _
    // Predicated region
    $region30: #{encoder_layer.1} parent=1 // pred_check
      _
    $region31: #{encoder_layer.1} parent=1 // pred_check_branch
      %35 = sbr.rel (0) target = $region33
    $region32: #{encoder_layer.1} parent=1 // pred_region
      _
    $region33: #{encoder_layer.1} parent=1 // pred_fallthru
      _
    // Predicated region
    $region34: #{encoder_layer.1} parent=1 // pred_check
      _
    $region35: #{encoder_layer.1} parent=1 // pred_check_branch
      %37 = sbr.rel (0) target = $region37
    $region36: #{encoder_layer.1} parent=1 // pred_region
      _
    $region37: #{encoder_layer.1} parent=1 // pred_fallthru
      _
    // Predicated region
    $region38: #{encoder_layer.1} parent=1 // pred_check
      _
    $region39: #{encoder_layer.1} parent=1 // pred_check_branch
      %39 = sbr.rel (0) target = $region41
    $region40: #{encoder_layer.1} parent=1 // pred_region
      _
    $region41: #{encoder_layer.1} parent=1 // pred_fallthru
      _
    // Predicated region
    $region42: #{encoder_layer.1} parent=1 // pred_check
      _
    $region43: #{encoder_layer.1} parent=1 // pred_check_branch
      %41 = sbr.rel (0) target = $region45
    $region44: #{encoder_layer.1} parent=1 // pred_region
      _
    $region45: #{encoder_layer.1} parent=1 // pred_fallthru
      _
    // Predicated region
    $region46: #{encoder_layer.1} parent=1 // pred_check
      _
    $region47: #{encoder_layer.1} parent=1 // pred_check_branch
      %43 = sbr.rel (0) target = $region49
    $region48: #{encoder_layer.1} parent=1 // pred_region
      _
    $region49: #{encoder_layer.1} parent=1 // pred_fallthru
      _
    // Predicated region
    $region50: #{encoder_layer.1} parent=1 // pred_check
      _
    $region51: #{encoder_layer.1} parent=1 // pred_check_branch
      %45 = sbr.rel (0) target = $region53
    $region52: #{encoder_layer.1} parent=1 // pred_region
      _
    $region53: #{encoder_layer.1} parent=1 // pred_fallthru
      _
    // Predicated region
    $region54: #{encoder_layer.1} parent=1 // pred_check
      _
    $region55: #{encoder_layer.1} parent=1 // pred_check_branch
      %47 = sbr.rel (0) target = $region57
    $region56: #{encoder_layer.1} parent=1 // pred_region
      _
    $region57: #{encoder_layer.1} parent=1 // pred_fallthru
      _
    %v48 = vld [vmem:[%s0] sm:$0xff]
    %v49 = vld [vmem:[%s0 + $0x8] sm:$0xff]
    %v50 = vld [vmem:[%s2] sm:$0xff]
    %v51 = vld [vmem:[%s2 + $0x8] sm:$0xff]
    %v52 = vld [vmem:[%s2 + $0x10] sm:$0xff]
    %v53 = vld [vmem:[%s2 + $0x18] sm:$0xff]
    %v54 = vld [vmem:[%s2 + $0x20] sm:$0xff]
    %v55 = vld [vmem:[%s2 + $0x28] sm:$0xff]
    %v56 = vld [vmem:[%s2 + $0x30] sm:$0xff]
    %v57 = vld [vmem:[%s2 + $0x38] sm:$0xff]
    %v58 = vld [vmem:[%s2 + $0x40] sm:$0xff]
    %v59 = vld [vmem:[%s2 + $0x48] sm:$0xff]
    %v60 = vld [vmem:[%s2 + $0x50] sm:$0xff]
    %v61 = vld [vmem:[%s2 + $0x58] sm:$0xff]
    %v62 = vld [vmem:[%s3] sm:$0x3]
    %v64 = vlaneseq
    %v65 = vshrl.u32 %v64, 7
    %v66 = vsub.s32 0, %v65
    %v67 = vrot.slane %v62, %v66
    %v68 = vlaneseq
    %v69 = vshrl.u32 %v68, 7
    %v70 = vsub.s32 1, %v69
    %v71 = vrot.slane %v62, %v70
    %vm74 = vcmask 392192
    %v76 = vsel %vm74, %v48, 0
    %v79 = vsel %vm74, %v49, 0
    %81 = vmatprep.subr.mxu0 %v51
    %82 = vmatpush1.msra.mxu0 %v50
    %83 = vmatprep.subr.mxu0 %v53
    %84 = vmatpush1.msra.mxu0 %v52
    %85 = vmatprep.subr.mxu0 %v55
    %86 = vmatpush1.msra.mxu0 %v54
    %87 = vmatprep.subr.mxu0 %v57
    %88 = vmatpush1.msra.mxu0 %v56
    %89 = vmatprep.subr.mxu0 %v59
    %90 = vmatpush1.msra.mxu0 %v58
    %91 = vmatprep.subr.mxu0 %v61
    %92 = vmatpush1.msra.mxu0 %v60
    %93 = vmatprep.subr.mxu0 0.0
    %94 = vmatpush1.msra.mxu0 0.0
    %95 = vmatprep.subr.mxu0 0.0
    %96 = vmatpush1.msra.mxu0 0.0
    %97 = vmatprep.subr.mxu0 0.0
    %98 = vmatpush1.msra.mxu0 0.0
    %99 = vmatprep.subr.mxu0 0.0
    %100 = vmatpush1.msra.mxu0 0.0
    %101 = vmatprep.subr.mxu0 0.0
    %102 = vmatpush1.msra.mxu0 0.0
    %103 = vmatprep.subr.mxu0 0.0
    %104 = vmatpush1.msra.mxu0 0.0
    %105 = vmatprep.subr.mxu0 0.0
    %106 = vmatpush1.msra.mxu0 0.0
    %107 = vmatprep.subr.mxu0 0.0
    %108 = vmatpush1.msra.mxu0 0.0
    %109 = vmatprep.subr.mxu0 0.0
    %110 = vmatpush1.msra.mxu0 0.0
    %111 = vmatprep.subr.mxu0 0.0
    %112 = vmatpush1.msra.mxu0 0.0
    %113 = vmatprep.subr.mxu0 0.0
    %114 = vmatpush1.msra.mxu0 0.0
    %115 = vmatprep.subr.mxu0 0.0
    %116 = vmatpush1.msra.mxu0 0.0
    %117 = vmatprep.subr.mxu0 0.0
    %118 = vmatpush1.msra.mxu0 0.0
    %119 = vmatprep.subr.mxu0 0.0
    %120 = vmatpush1.msra.mxu0 0.0
    %121 = vmatprep.subr.mxu0 0.0
    %122 = vmatpush1.msra.mxu0 0.0
    %123 = vmatprep.subr.mxu0 0.0
    %124 = vmatpush1.msra.mxu0 0.0
    %125 = vmatprep.subr.mxu0 0.0
    %126 = vmatpush1.msra.mxu0 0.0
    %127 = vmatprep.subr.mxu0 0.0
    %128 = vmatpush1.msra.mxu0 0.0
    %129 = vmatprep.subr.mxu0 0.0
    %130 = vmatpush1.msra.mxu0 0.0
    %131 = vmatprep.subr.mxu0 0.0
    %132 = vmatpush1.msra.mxu0 0.0
    %133 = vmatprep.subr.mxu0 0.0
    %134 = vmatpush1.msra.mxu0 0.0
    %135 = vmatprep.subr.mxu0 0.0
    %136 = vmatpush1.msra.mxu0 0.0
    %137 = vmatprep.subr.mxu0 0.0
    %138 = vmatpush1.msra.mxu0 0.0
    %139 = vmatprep.subr.mxu0 0.0
    %140 = vmatpush1.msra.mxu0 0.0
    %141 = vmatprep.subr.mxu0 0.0
    %142 = vmatpush1.msra.mxu0 0.0
    %143 = vmatprep.subr.mxu0 0.0
    %144 = vmatpush1.msra.mxu0 0.0
    %145 = vmatprep.mubr.f32.mxu0 0.0
    %146 = vmatmul.mubr.f32.gmra.mrb[0].mxu0 %v76
    %v147 = vpop.f32.mrb[0].mxu0
    %v148 = vadd.f32 %v67, %v147
    %v149 = vpop.f32.mrb[0].mxu0
    %v150 = vadd.f32 %v71, %v149
    %151 = vmatprep.mubr.f32.mxu0 0.0
    %152 = vmatmul.mubr.f32.gmra.mrb[0].mxu0 %v79
    %v153 = vpop.f32.mrb[0].mxu0
    %v154 = vadd.f32 %v67, %v153
    %v155 = vpop.f32.mrb[0].mxu0
    %v156 = vadd.f32 %v71, %v155
    %157 = vdwg.mxu0
    %v158 = vld [vmem:[%s1] sm:$0x1]
    %v160 = vlaneseq
    %v161 = vshrl.u32 %v160, 7
    %v162 = vsub.s32 0, %v161
    %v163 = vrot.slane %v158, %v162
    %166 = vrot.lane.b32.xlu0 %v148, 80
    %v167 = vpop.permute.xlu0 %166
    %vm168 = vcmask 64512
    %v169 = vsel %vm168, %v148, 0
    %v171 = vsel %vm168, %v167, 0
    %173 = vmatprep.subr.mxu0 0.0
    %174 = vmatpush1.xpose.msra.mxu0 %v171
    %175 = vmatprep.subr.mxu0 0.0
    %176 = vmatpush1.xpose.msra.mxu0 0.0
    %177 = vmatprep.subr.mxu0 0.0
    %178 = vmatpush1.xpose.msra.mxu0 0.0
    %179 = vmatprep.subr.mxu0 0.0
    %180 = vmatpush1.xpose.msra.mxu0 0.0
    %181 = vmatprep.subr.mxu0 0.0
    %182 = vmatpush1.xpose.msra.mxu0 0.0
    %183 = vmatprep.subr.mxu0 0.0
    %184 = vmatpush1.xpose.msra.mxu0 0.0
    %185 = vmatprep.subr.mxu0 0.0
    %186 = vmatpush1.xpose.msra.mxu0 0.0
    %187 = vmatprep.subr.mxu0 0.0
    %188 = vmatpush1.xpose.msra.mxu0 0.0
    %189 = vmatprep.subr.mxu0 0.0
    %190 = vmatpush1.xpose.msra.mxu0 0.0
    %191 = vmatprep.subr.mxu0 0.0
    %192 = vmatpush1.xpose.msra.mxu0 0.0
    %193 = vmatprep.subr.mxu0 0.0
    %194 = vmatpush1.xpose.msra.mxu0 0.0
    %195 = vmatprep.subr.mxu0 0.0
    %196 = vmatpush1.xpose.msra.mxu0 0.0
    %197 = vmatprep.subr.mxu0 0.0
    %198 = vmatpush1.xpose.msra.mxu0 0.0
    %199 = vmatprep.subr.mxu0 0.0
    %200 = vmatpush1.xpose.msra.mxu0 0.0
    %201 = vmatprep.subr.mxu0 0.0
    %202 = vmatpush1.xpose.msra.mxu0 0.0
    %203 = vmatprep.subr.mxu0 0.0
    %204 = vmatpush1.xpose.msra.mxu0 0.0
    %205 = vmatprep.subr.mxu0 0.0
    %206 = vmatpush1.xpose.msra.mxu0 0.0
    %207 = vmatprep.subr.mxu0 0.0
    %208 = vmatpush1.xpose.msra.mxu0 0.0
    %209 = vmatprep.subr.mxu0 0.0
    %210 = vmatpush1.xpose.msra.mxu0 0.0
    %211 = vmatprep.subr.mxu0 0.0
    %212 = vmatpush1.xpose.msra.mxu0 0.0
    %213 = vmatprep.subr.mxu0 0.0
    %214 = vmatpush1.xpose.msra.mxu0 0.0
    %215 = vmatprep.subr.mxu0 0.0
    %216 = vmatpush1.xpose.msra.mxu0 0.0
    %217 = vmatprep.subr.mxu0 0.0
    %218 = vmatpush1.xpose.msra.mxu0 0.0
    %219 = vmatprep.subr.mxu0 0.0
    %220 = vmatpush1.xpose.msra.mxu0 0.0
    %221 = vmatprep.subr.mxu0 0.0
    %222 = vmatpush1.xpose.msra.mxu0 0.0
    %223 = vmatprep.subr.mxu0 0.0
    %224 = vmatpush1.xpose.msra.mxu0 0.0
    %225 = vmatprep.subr.mxu0 0.0
    %226 = vmatpush1.xpose.msra.mxu0 0.0
    %227 = vmatprep.subr.mxu0 0.0
    %228 = vmatpush1.xpose.msra.mxu0 0.0
    %229 = vmatprep.subr.mxu0 0.0
    %230 = vmatpush1.xpose.msra.mxu0 0.0
    %231 = vmatprep.subr.mxu0 0.0
    %232 = vmatpush1.xpose.msra.mxu0 0.0
    %233 = vmatprep.subr.mxu0 0.0
    %234 = vmatpush1.xpose.msra.mxu0 0.0
    %235 = vmatprep.subr.mxu0 0.0
    %236 = vmatpush1.xpose.msra.mxu0 0.0
    %237 = vmatprep.mubr.f32.mxu0 0.0
    %238 = vmatmul.mubr.f32.gmra.mrb[0].mxu0 %v169
    %v239 = vpop.f32.mrb[0].mxu0
    %v240 = vadd.f32 %v163, %v239
    %v241 = vpop.f32.mrb[0].mxu0
    %242 = vdwg.mxu0
    %v243 = vsel %vm168, %v240, -inf
    %244 = vmax.xlane.f32.xlu0 %v243
    %v245 = vpop.xlane.xlu0 %244
    %v246 = vsub.f32 %v240, %v245
    %v247 = vmul.f32 %v246, 1.442695
    %v248 = vpow.pop %v247
    %v249 = vsel %vm168, %v248, 0.0
    %250 = vadd.xlane.f32.xlu0 %v249
    %v251 = vpop.xlane.xlu0 %250
    %v252 = vrcp.pop %v251
    %v253 = vmul.f32 %v248, %v252
    %254 = vrot.lane.b32.xlu0 %v148, 32
    %v255 = vpop.permute.xlu0 %254
    %v258 = vsel %vm168, %v253, 0
    %260 = vmatprep.subr.mxu0 0.0
    %261 = vmatpush1.msra.mxu0 %v255
    %262 = vmatprep.subr.mxu0 0.0
    %263 = vmatpush1.msra.mxu0 0.0
    %264 = vmatprep.subr.mxu0 0.0
    %265 = vmatpush1.msra.mxu0 0.0
    %266 = vmatprep.subr.mxu0 0.0
    %267 = vmatpush1.msra.mxu0 0.0
    %268 = vmatprep.subr.mxu0 0.0
    %269 = vmatpush1.msra.mxu0 0.0
    %270 = vmatprep.subr.mxu0 0.0
    %271 = vmatpush1.msra.mxu0 0.0
    %272 = vmatprep.subr.mxu0 0.0
    %273 = vmatpush1.msra.mxu0 0.0
    %274 = vmatprep.subr.mxu0 0.0
    %275 = vmatpush1.msra.mxu0 0.0
    %276 = vmatprep.subr.mxu0 0.0
    %277 = vmatpush1.msra.mxu0 0.0
    %278 = vmatprep.subr.mxu0 0.0
    %279 = vmatpush1.msra.mxu0 0.0
    %280 = vmatprep.subr.mxu0 0.0
    %281 = vmatpush1.msra.mxu0 0.0
    %282 = vmatprep.subr.mxu0 0.0
    %283 = vmatpush1.msra.mxu0 0.0
    %284 = vmatprep.subr.mxu0 0.0
    %285 = vmatpush1.msra.mxu0 0.0
    %286 = vmatprep.subr.mxu0 0.0
    %287 = vmatpush1.msra.mxu0 0.0
    %288 = vmatprep.subr.mxu0 0.0
    %289 = vmatpush1.msra.mxu0 0.0
    %290 = vmatprep.subr.mxu0 0.0
    %291 = vmatpush1.msra.mxu0 0.0
    %292 = vmatprep.subr.mxu0 0.0
    %293 = vmatpush1.msra.mxu0 0.0
    %294 = vmatprep.subr.mxu0 0.0
    %295 = vmatpush1.msra.mxu0 0.0
    %296 = vmatprep.subr.mxu0 0.0
    %297 = vmatpush1.msra.mxu0 0.0
    %298 = vmatprep.subr.mxu0 0.0
    %299 = vmatpush1.msra.mxu0 0.0
    %300 = vmatprep.subr.mxu0 0.0
    %301 = vmatpush1.msra.mxu0 0.0
    %302 = vmatprep.subr.mxu0 0.0
    %303 = vmatpush1.msra.mxu0 0.0
    %304 = vmatprep.subr.mxu0 0.0
    %305 = vmatpush1.msra.mxu0 0.0
    %306 = vmatprep.subr.mxu0 0.0
    %307 = vmatpush1.msra.mxu0 0.0
    %308 = vmatprep.subr.mxu0 0.0
    %309 = vmatpush1.msra.mxu0 0.0
    %310 = vmatprep.subr.mxu0 0.0
    %311 = vmatpush1.msra.mxu0 0.0
    %312 = vmatprep.subr.mxu0 0.0
    %313 = vmatpush1.msra.mxu0 0.0
    %314 = vmatprep.subr.mxu0 0.0
    %315 = vmatpush1.msra.mxu0 0.0
    %316 = vmatprep.subr.mxu0 0.0
    %317 = vmatpush1.msra.mxu0 0.0
    %318 = vmatprep.subr.mxu0 0.0
    %319 = vmatpush1.msra.mxu0 0.0
    %320 = vmatprep.subr.mxu0 0.0
    %321 = vmatpush1.msra.mxu0 0.0
    %322 = vmatprep.subr.mxu0 0.0
    %323 = vmatpush1.msra.mxu0 0.0
    %324 = vmatprep.mubr.f32.mxu0 0.0
    %325 = vmatmul.mubr.f32.gmra.mrb[0].mxu0 %v258
    %v326 = vpop.f32.mrb[0].mxu0
    %v327 = vadd.f32 0.0, %v326
    %v328 = vpop.f32.mrb[0].mxu0
    %329 = vdwg.mxu0
    %v330 = vld [vmem:[%s4] sm:$0xff]
    %331 = vrot.lane.b32.xlu0 %v148, 120
    %v332 = vpop.permute.xlu0 %331
    %333 = vrot.lane.b32.xlu0 %v148, 72
    %v334 = vpop.permute.xlu0 %333
    %v335 = vsel %vm168, %v332, 0
    %v337 = vsel %vm168, %v334, 0
    %339 = vmatprep.subr.mxu0 0.0
    %340 = vmatpush1.xpose.msra.mxu0 %v337
    %341 = vmatprep.subr.mxu0 0.0
    %342 = vmatpush1.xpose.msra.mxu0 0.0
    %343 = vmatprep.subr.mxu0 0.0
    %344 = vmatpush1.xpose.msra.mxu0 0.0
    %345 = vmatprep.subr.mxu0 0.0
    %346 = vmatpush1.xpose.msra.mxu0 0.0
    %347 = vmatprep.subr.mxu0 0.0
    %348 = vmatpush1.xpose.msra.mxu0 0.0
    %349 = vmatprep.subr.mxu0 0.0
    %350 = vmatpush1.xpose.msra.mxu0 0.0
    %351 = vmatprep.subr.mxu0 0.0
    %352 = vmatpush1.xpose.msra.mxu0 0.0
    %353 = vmatprep.subr.mxu0 0.0
    %354 = vmatpush1.xpose.msra.mxu0 0.0
    %355 = vmatprep.subr.mxu0 0.0
    %356 = vmatpush1.xpose.msra.mxu0 0.0
    %357 = vmatprep.subr.mxu0 0.0
    %358 = vmatpush1.xpose.msra.mxu0 0.0
    %359 = vmatprep.subr.mxu0 0.0
    %360 = vmatpush1.xpose.msra.mxu0 0.0
    %361 = vmatprep.subr.mxu0 0.0
    %362 = vmatpush1.xpose.msra.mxu0 0.0
    %363 = vmatprep.subr.mxu0 0.0
    %364 = vmatpush1.xpose.msra.mxu0 0.0
    %365 = vmatprep.subr.mxu0 0.0
    %366 = vmatpush1.xpose.msra.mxu0 0.0
    %367 = vmatprep.subr.mxu0 0.0
    %368 = vmatpush1.xpose.msra.mxu0 0.0
    %369 = vmatprep.subr.mxu0 0.0
    %370 = vmatpush1.xpose.msra.mxu0 0.0
    %371 = vmatprep.subr.mxu0 0.0
    %372 = vmatpush1.xpose.msra.mxu0 0.0
    %373 = vmatprep.subr.mxu0 0.0
    %374 = vmatpush1.xpose.msra.mxu0 0.0
    %375 = vmatprep.subr.mxu0 0.0
    %376 = vmatpush1.xpose.msra.mxu0 0.0
    %377 = vmatprep.subr.mxu0 0.0
    %378 = vmatpush1.xpose.msra.mxu0 0.0
    %379 = vmatprep.subr.mxu0 0.0
    %380 = vmatpush1.xpose.msra.mxu0 0.0
    %381 = vmatprep.subr.mxu0 0.0
    %382 = vmatpush1.xpose.msra.mxu0 0.0
    %383 = vmatprep.subr.mxu0 0.0
    %384 = vmatpush1.xpose.msra.mxu0 0.0
    %385 = vmatprep.subr.mxu0 0.0
    %386 = vmatpush1.xpose.msra.mxu0 0.0
    %387 = vmatprep.subr.mxu0 0.0
    %388 = vmatpush1.xpose.msra.mxu0 0.0
    %389 = vmatprep.subr.mxu0 0.0
    %390 = vmatpush1.xpose.msra.mxu0 0.0
    %391 = vmatprep.subr.mxu0 0.0
    %392 = vmatpush1.xpose.msra.mxu0 0.0
    %393 = vmatprep.subr.mxu0 0.0
    %394 = vmatpush1.xpose.msra.mxu0 0.0
    %395 = vmatprep.subr.mxu0 0.0
    %396 = vmatpush1.xpose.msra.mxu0 0.0
    %397 = vmatprep.subr.mxu0 0.0
    %398 = vmatpush1.xpose.msra.mxu0 0.0
    %399 = vmatprep.subr.mxu0 0.0
    %400 = vmatpush1.xpose.msra.mxu0 0.0
    %401 = vmatprep.subr.mxu0 0.0
    %402 = vmatpush1.xpose.msra.mxu0 0.0
    %403 = vmatprep.mubr.f32.mxu0 0.0
    %404 = vmatmul.mubr.f32.gmra.mrb[0].mxu0 %v335
    %v405 = vpop.f32.mrb[0].mxu0
    %v406 = vadd.f32 %v163, %v405
    %v407 = vpop.f32.mrb[0].mxu0
    %408 = vdwg.mxu0
    %v409 = vsel %vm168, %v406, -inf
    %410 = vmax.xlane.f32.xlu0 %v409
    %v411 = vpop.xlane.xlu0 %410
    %v412 = vsub.f32 %v406, %v411
    %v413 = vmul.f32 %v412, 1.442695
    %v414 = vpow.pop %v413
    %v415 = vsel %vm168, %v414, 0.0
    %416 = vadd.xlane.f32.xlu0 %v415
    %v417 = vpop.xlane.xlu0 %416
    %v418 = vrcp.pop %v417
    %v419 = vmul.f32 %v414, %v418
    %420 = vrot.lane.b32.xlu0 %v148, 24
    %v421 = vpop.permute.xlu0 %420
    %v424 = vsel %vm168, %v419, 0
    %426 = vmatprep.subr.mxu0 0.0
    %427 = vmatpush1.msra.mxu0 %v421
    %428 = vmatprep.subr.mxu0 0.0
    %429 = vmatpush1.msra.mxu0 0.0
    %430 = vmatprep.subr.mxu0 0.0
    %431 = vmatpush1.msra.mxu0 0.0
    %432 = vmatprep.subr.mxu0 0.0
    %433 = vmatpush1.msra.mxu0 0.0
    %434 = vmatprep.subr.mxu0 0.0
    %435 = vmatpush1.msra.mxu0 0.0
    %436 = vmatprep.subr.mxu0 0.0
    %437 = vmatpush1.msra.mxu0 0.0
    %438 = vmatprep.subr.mxu0 0.0
    %439 = vmatpush1.msra.mxu0 0.0
    %440 = vmatprep.subr.mxu0 0.0
    %441 = vmatpush1.msra.mxu0 0.0
    %442 = vmatprep.subr.mxu0 0.0
    %443 = vmatpush1.msra.mxu0 0.0
    %444 = vmatprep.subr.mxu0 0.0
    %445 = vmatpush1.msra.mxu0 0.0
    %446 = vmatprep.subr.mxu0 0.0
    %447 = vmatpush1.msra.mxu0 0.0
    %448 = vmatprep.subr.mxu0 0.0
    %449 = vmatpush1.msra.mxu0 0.0
    %450 = vmatprep.subr.mxu0 0.0
    %451 = vmatpush1.msra.mxu0 0.0
    %452 = vmatprep.subr.mxu0 0.0
    %453 = vmatpush1.msra.mxu0 0.0
    %454 = vmatprep.subr.mxu0 0.0
    %455 = vmatpush1.msra.mxu0 0.0
    %456 = vmatprep.subr.mxu0 0.0
    %457 = vmatpush1.msra.mxu0 0.0
    %458 = vmatprep.subr.mxu0 0.0
    %459 = vmatpush1.msra.mxu0 0.0
    %460 = vmatprep.subr.mxu0 0.0
    %461 = vmatpush1.msra.mxu0 0.0
    %462 = vmatprep.subr.mxu0 0.0
    %463 = vmatpush1.msra.mxu0 0.0
    %464 = vmatprep.subr.mxu0 0.0
    %465 = vmatpush1.msra.mxu0 0.0
    %466 = vmatprep.subr.mxu0 0.0
    %467 = vmatpush1.msra.mxu0 0.0
    %468 = vmatprep.subr.mxu0 0.0
    %469 = vmatpush1.msra.mxu0 0.0
    %470 = vmatprep.subr.mxu0 0.0
    %471 = vmatpush1.msra.mxu0 0.0
    %472 = vmatprep.subr.mxu0 0.0
    %473 = vmatpush1.msra.mxu0 0.0
    %474 = vmatprep.subr.mxu0 0.0
    %475 = vmatpush1.msra.mxu0 0.0
    %476 = vmatprep.subr.mxu0 0.0
    %477 = vmatpush1.msra.mxu0 0.0
    %478 = vmatprep.subr.mxu0 0.0
    %479 = vmatpush1.msra.mxu0 0.0
    %480 = vmatprep.subr.mxu0 0.0
    %481 = vmatpush1.msra.mxu0 0.0
    %482 = vmatprep.subr.mxu0 0.0
    %483 = vmatpush1.msra.mxu0 0.0
    %484 = vmatprep.subr.mxu0 0.0
    %485 = vmatpush1.msra.mxu0 0.0
    %486 = vmatprep.subr.mxu0 0.0
    %487 = vmatpush1.msra.mxu0 0.0
    %488 = vmatprep.subr.mxu0 0.0
    %489 = vmatpush1.msra.mxu0 0.0
    %490 = vmatprep.mubr.f32.mxu0 0.0
    %491 = vmatmul.mubr.f32.gmra.mrb[0].mxu0 %v424
    %v492 = vpop.f32.mrb[0].mxu0
    %v493 = vadd.f32 0.0, %v492
    %v494 = vpop.f32.mrb[0].mxu0
    %495 = vdwg.mxu0
    %v496 = vld [vmem:[%s4 + $0x8] sm:$0xff]
    %v498 = vsel %vm168, %v493, 0
    %500 = vmatprep.subr.mxu0 0.0
    %501 = vmatpush1.msra.mxu0 %v496
    %502 = vmatprep.subr.mxu0 0.0
    %503 = vmatpush1.msra.mxu0 0.0
    %504 = vmatprep.subr.mxu0 0.0
    %505 = vmatpush1.msra.mxu0 0.0
    %506 = vmatprep.subr.mxu0 0.0
    %507 = vmatpush1.msra.mxu0 0.0
    %508 = vmatprep.subr.mxu0 0.0
    %509 = vmatpush1.msra.mxu0 0.0
    %510 = vmatprep.subr.mxu0 0.0
    %511 = vmatpush1.msra.mxu0 0.0
    %512 = vmatprep.subr.mxu0 0.0
    %513 = vmatpush1.msra.mxu0 0.0
    %514 = vmatprep.subr.mxu0 0.0
    %515 = vmatpush1.msra.mxu0 0.0
    %516 = vmatprep.subr.mxu0 0.0
    %517 = vmatpush1.msra.mxu0 0.0
    %518 = vmatprep.subr.mxu0 0.0
    %519 = vmatpush1.msra.mxu0 0.0
    %520 = vmatprep.subr.mxu0 0.0
    %521 = vmatpush1.msra.mxu0 0.0
    %522 = vmatprep.subr.mxu0 0.0
    %523 = vmatpush1.msra.mxu0 0.0
    %524 = vmatprep.subr.mxu0 0.0
    %525 = vmatpush1.msra.mxu0 0.0
    %526 = vmatprep.subr.mxu0 0.0
    %527 = vmatpush1.msra.mxu0 0.0
    %528 = vmatprep.subr.mxu0 0.0
    %529 = vmatpush1.msra.mxu0 0.0
    %530 = vmatprep.subr.mxu0 0.0
    %531 = vmatpush1.msra.mxu0 0.0
    %532 = vmatprep.subr.mxu0 0.0
    %533 = vmatpush1.msra.mxu0 0.0
    %534 = vmatprep.subr.mxu0 0.0
    %535 = vmatpush1.msra.mxu0 0.0
    %536 = vmatprep.subr.mxu0 0.0
    %537 = vmatpush1.msra.mxu0 0.0
    %538 = vmatprep.subr.mxu0 0.0
    %539 = vmatpush1.msra.mxu0 0.0
    %540 = vmatprep.subr.mxu0 0.0
    %541 = vmatpush1.msra.mxu0 0.0
    %542 = vmatprep.subr.mxu0 0.0
    %543 = vmatpush1.msra.mxu0 0.0
    %544 = vmatprep.subr.mxu0 0.0
    %545 = vmatpush1.msra.mxu0 0.0
    %546 = vmatprep.subr.mxu0 0.0
    %547 = vmatpush1.msra.mxu0 0.0
    %548 = vmatprep.subr.mxu0 0.0
    %549 = vmatpush1.msra.mxu0 0.0
    %550 = vmatprep.subr.mxu0 0.0
    %551 = vmatpush1.msra.mxu0 0.0
    %552 = vmatprep.subr.mxu0 0.0
    %553 = vmatpush1.msra.mxu0 0.0
    %554 = vmatprep.subr.mxu0 0.0
    %555 = vmatpush1.msra.mxu0 0.0
    %556 = vmatprep.subr.mxu0 0.0
    %557 = vmatpush1.msra.mxu0 0.0
    %558 = vmatprep.subr.mxu0 0.0
    %559 = vmatpush1.msra.mxu0 0.0
    %560 = vmatprep.subr.mxu0 0.0
    %561 = vmatpush1.msra.mxu0 0.0
    %562 = vmatprep.subr.mxu0 0.0
    %563 = vmatpush1.msra.mxu0 0.0
    %564 = vmatprep.mubr.f32.mxu0 0.0
    %565 = vmatmul.mubr.f32.gmra.mrb[0].mxu0 %v498
    %v566 = vpop.f32.mrb[0].mxu0
    %v567 = vadd.f32 0.0, %v566
    %v568 = vpop.f32.mrb[0].mxu0
    %569 = vdwg.mxu0
    %v571 = vsel %vm168, %v327, 0
    %573 = vmatprep.subr.mxu0 0.0
    %574 = vmatpush1.msra.mxu0 %v330
    %575 = vmatprep.subr.mxu0 0.0
    %576 = vmatpush1.msra.mxu0 0.0
    %577 = vmatprep.subr.mxu0 0.0
    %578 = vmatpush1.msra.mxu0 0.0
    %579 = vmatprep.subr.mxu0 0.0
    %580 = vmatpush1.msra.mxu0 0.0
    %581 = vmatprep.subr.mxu0 0.0
    %582 = vmatpush1.msra.mxu0 0.0
    %583 = vmatprep.subr.mxu0 0.0
    %584 = vmatpush1.msra.mxu0 0.0
    %585 = vmatprep.subr.mxu0 0.0
    %586 = vmatpush1.msra.mxu0 0.0
    %587 = vmatprep.subr.mxu0 0.0
    %588 = vmatpush1.msra.mxu0 0.0
    %589 = vmatprep.subr.mxu0 0.0
    %590 = vmatpush1.msra.mxu0 0.0
    %591 = vmatprep.subr.mxu0 0.0
    %592 = vmatpush1.msra.mxu0 0.0
    %593 = vmatprep.subr.mxu0 0.0
    %594 = vmatpush1.msra.mxu0 0.0
    %595 = vmatprep.subr.mxu0 0.0
    %596 = vmatpush1.msra.mxu0 0.0
    %597 = vmatprep.subr.mxu0 0.0
    %598 = vmatpush1.msra.mxu0 0.0
    %599 = vmatprep.subr.mxu0 0.0
    %600 = vmatpush1.msra.mxu0 0.0
    %601 = vmatprep.subr.mxu0 0.0
    %602 = vmatpush1.msra.mxu0 0.0
    %603 = vmatprep.subr.mxu0 0.0
    %604 = vmatpush1.msra.mxu0 0.0
    %605 = vmatprep.subr.mxu0 0.0
    %606 = vmatpush1.msra.mxu0 0.0
    %607 = vmatprep.subr.mxu0 0.0
    %608 = vmatpush1.msra.mxu0 0.0
    %609 = vmatprep.subr.mxu0 0.0
    %610 = vmatpush1.msra.mxu0 0.0
    %611 = vmatprep.subr.mxu0 0.0
    %612 = vmatpush1.msra.mxu0 0.0
    %613 = vmatprep.subr.mxu0 0.0
    %614 = vmatpush1.msra.mxu0 0.0
    %615 = vmatprep.subr.mxu0 0.0
    %616 = vmatpush1.msra.mxu0 0.0
    %617 = vmatprep.subr.mxu0 0.0
    %618 = vmatpush1.msra.mxu0 0.0
    %619 = vmatprep.subr.mxu0 0.0
    %620 = vmatpush1.msra.mxu0 0.0
    %621 = vmatprep.subr.mxu0 0.0
    %622 = vmatpush1.msra.mxu0 0.0
    %623 = vmatprep.subr.mxu0 0.0
    %624 = vmatpush1.msra.mxu0 0.0
    %625 = vmatprep.subr.mxu0 0.0
    %626 = vmatpush1.msra.mxu0 0.0
    %627 = vmatprep.subr.mxu0 0.0
    %628 = vmatpush1.msra.mxu0 0.0
    %629 = vmatprep.subr.mxu0 0.0
    %630 = vmatpush1.msra.mxu0 0.0
    %631 = vmatprep.subr.mxu0 0.0
    %632 = vmatpush1.msra.mxu0 0.0
    %633 = vmatprep.subr.mxu0 0.0
    %634 = vmatpush1.msra.mxu0 0.0
    %635 = vmatprep.subr.mxu0 0.0
    %636 = vmatpush1.msra.mxu0 0.0
    %637 = vmatprep.mubr.f32.mxu0 0.0
    %638 = vmatmul.mubr.f32.gmra.mrb[0].mxu0 %v571
    %v639 = vpop.f32.mrb[0].mxu0
    %v640 = vadd.f32 %v567, %v639
    %v641 = vpop.f32.mrb[0].mxu0
    %642 = vdwg.mxu0
    %643 = vrot.lane.b32.xlu0 %v148, 112
    %v644 = vpop.permute.xlu0 %643
    %645 = vrot.lane.b32.xlu0 %v148, 64
    %v646 = vpop.permute.xlu0 %645
    %v647 = vsel %vm168, %v644, 0
    %v649 = vsel %vm168, %v646, 0
    %651 = vmatprep.subr.mxu0 0.0
    %652 = vmatpush1.xpose.msra.mxu0 %v649
    %653 = vmatprep.subr.mxu0 0.0
    %654 = vmatpush1.xpose.msra.mxu0 0.0
    %655 = vmatprep.subr.mxu0 0.0
    %656 = vmatpush1.xpose.msra.mxu0 0.0
    %657 = vmatprep.subr.mxu0 0.0
    %658 = vmatpush1.xpose.msra.mxu0 0.0
    %659 = vmatprep.subr.mxu0 0.0
    %660 = vmatpush1.xpose.msra.mxu0 0.0
    %661 = vmatprep.subr.mxu0 0.0
    %662 = vmatpush1.xpose.msra.mxu0 0.0
    %663 = vmatprep.subr.mxu0 0.0
    %664 = vmatpush1.xpose.msra.mxu0 0.0
    %665 = vmatprep.subr.mxu0 0.0
    %666 = vmatpush1.xpose.msra.mxu0 0.0
    %667 = vmatprep.subr.mxu0 0.0
    %668 = vmatpush1.xpose.msra.mxu0 0.0
    %669 = vmatprep.subr.mxu0 0.0
    %670 = vmatpush1.xpose.msra.mxu0 0.0
    %671 = vmatprep.subr.mxu0 0.0
    %672 = vmatpush1.xpose.msra.mxu0 0.0
    %673 = vmatprep.subr.mxu0 0.0
    %674 = vmatpush1.xpose.msra.mxu0 0.0
    %675 = vmatprep.subr.mxu0 0.0
    %676 = vmatpush1.xpose.msra.mxu0 0.0
    %677 = vmatprep.subr.mxu0 0.0
    %678 = vmatpush1.xpose.msra.mxu0 0.0
    %679 = vmatprep.subr.mxu0 0.0
    %680 = vmatpush1.xpose.msra.mxu0 0.0
    %681 = vmatprep.subr.mxu0 0.0
    %682 = vmatpush1.xpose.msra.mxu0 0.0
    %683 = vmatprep.subr.mxu0 0.0
    %684 = vmatpush1.xpose.msra.mxu0 0.0
    %685 = vmatprep.subr.mxu0 0.0
    %686 = vmatpush1.xpose.msra.mxu0 0.0
    %687 = vmatprep.subr.mxu0 0.0
    %688 = vmatpush1.xpose.msra.mxu0 0.0
    %689 = vmatprep.subr.mxu0 0.0
    %690 = vmatpush1.xpose.msra.mxu0 0.0
    %691 = vmatprep.subr.mxu0 0.0
    %692 = vmatpush1.xpose.msra.mxu0 0.0
    %693 = vmatprep.subr.mxu0 0.0
    %694 = vmatpush1.xpose.msra.mxu0 0.0
    %695 = vmatprep.subr.mxu0 0.0
    %696 = vmatpush1.xpose.msra.mxu0 0.0
    %697 = vmatprep.subr.mxu0 0.0
    %698 = vmatpush1.xpose.msra.mxu0 0.0
    %699 = vmatprep.subr.mxu0 0.0
    %700 = vmatpush1.xpose.msra.mxu0 0.0
    %701 = vmatprep.subr.mxu0 0.0
    %702 = vmatpush1.xpose.msra.mxu0 0.0
    %703 = vmatprep.subr.mxu0 0.0
    %704 = vmatpush1.xpose.msra.mxu0 0.0
    %705 = vmatprep.subr.mxu0 0.0
    %706 = vmatpush1.xpose.msra.mxu0 0.0
    %707 = vmatprep.subr.mxu0 0.0
    %708 = vmatpush1.xpose.msra.mxu0 0.0
    %709 = vmatprep.subr.mxu0 0.0
    %710 = vmatpush1.xpose.msra.mxu0 0.0
    %711 = vmatprep.subr.mxu0 0.0
    %712 = vmatpush1.xpose.msra.mxu0 0.0
    %713 = vmatprep.subr.mxu0 0.0
    %714 = vmatpush1.xpose.msra.mxu0 0.0
    %715 = vmatprep.mubr.f32.mxu0 0.0
    %716 = vmatmul.mubr.f32.gmra.mrb[0].mxu0 %v647
    %v717 = vpop.f32.mrb[0].mxu0
    %v718 = vadd.f32 %v163, %v717
    %v719 = vpop.f32.mrb[0].mxu0
    %720 = vdwg.mxu0
    %v721 = vsel %vm168, %v718, -inf
    %722 = vmax.xlane.f32.xlu0 %v721
    %v723 = vpop.xlane.xlu0 %722
    %v724 = vsub.f32 %v718, %v723
    %v725 = vmul.f32 %v724, 1.442695
    %v726 = vpow.pop %v725
    %v727 = vsel %vm168, %v726, 0.0
    %728 = vadd.xlane.f32.xlu0 %v727
    %v729 = vpop.xlane.xlu0 %728
    %v730 = vrcp.pop %v729
    %v731 = vmul.f32 %v726, %v730
    %732 = vrot.lane.b32.xlu0 %v148, 16
    %v733 = vpop.permute.xlu0 %732
    %v736 = vsel %vm168, %v731, 0
    %738 = vmatprep.subr.mxu0 0.0
    %739 = vmatpush1.msra.mxu0 %v733
    %740 = vmatprep.subr.mxu0 0.0
    %741 = vmatpush1.msra.mxu0 0.0
    %742 = vmatprep.subr.mxu0 0.0
    %743 = vmatpush1.msra.mxu0 0.0
    %744 = vmatprep.subr.mxu0 0.0
    %745 = vmatpush1.msra.mxu0 0.0
    %746 = vmatprep.subr.mxu0 0.0
    %747 = vmatpush1.msra.mxu0 0.0
    %748 = vmatprep.subr.mxu0 0.0
    %749 = vmatpush1.msra.mxu0 0.0
    %750 = vmatprep.subr.mxu0 0.0
    %751 = vmatpush1.msra.mxu0 0.0
    %752 = vmatprep.subr.mxu0 0.0
    %753 = vmatpush1.msra.mxu0 0.0
    %754 = vmatprep.subr.mxu0 0.0
    %755 = vmatpush1.msra.mxu0 0.0
    %756 = vmatprep.subr.mxu0 0.0
    %757 = vmatpush1.msra.mxu0 0.0
    %758 = vmatprep.subr.mxu0 0.0
    %759 = vmatpush1.msra.mxu0 0.0
    %760 = vmatprep.subr.mxu0 0.0
    %761 = vmatpush1.msra.mxu0 0.0
    %762 = vmatprep.subr.mxu0 0.0
    %763 = vmatpush1.msra.mxu0 0.0
    %764 = vmatprep.subr.mxu0 0.0
    %765 = vmatpush1.msra.mxu0 0.0
    %766 = vmatprep.subr.mxu0 0.0
    %767 = vmatpush1.msra.mxu0 0.0
    %768 = vmatprep.subr.mxu0 0.0
    %769 = vmatpush1.msra.mxu0 0.0
    %770 = vmatprep.subr.mxu0 0.0
    %771 = vmatpush1.msra.mxu0 0.0
    %772 = vmatprep.subr.mxu0 0.0
    %773 = vmatpush1.msra.mxu0 0.0
    %774 = vmatprep.subr.mxu0 0.0
    %775 = vmatpush1.msra.mxu0 0.0
    %776 = vmatprep.subr.mxu0 0.0
    %777 = vmatpush1.msra.mxu0 0.0
    %778 = vmatprep.subr.mxu0 0.0
    %779 = vmatpush1.msra.mxu0 0.0
    %780 = vmatprep.subr.mxu0 0.0
    %781 = vmatpush1.msra.mxu0 0.0
    %782 = vmatprep.subr.mxu0 0.0
    %783 = vmatpush1.msra.mxu0 0.0
    %784 = vmatprep.subr.mxu0 0.0
    %785 = vmatpush1.msra.mxu0 0.0
    %786 = vmatprep.subr.mxu0 0.0
    %787 = vmatpush1.msra.mxu0 0.0
    %788 = vmatprep.subr.mxu0 0.0
    %789 = vmatpush1.msra.mxu0 0.0
    %790 = vmatprep.subr.mxu0 0.0
    %791 = vmatpush1.msra.mxu0 0.0
    %792 = vmatprep.subr.mxu0 0.0
    %793 = vmatpush1.msra.mxu0 0.0
    %794 = vmatprep.subr.mxu0 0.0
    %795 = vmatpush1.msra.mxu0 0.0
    %796 = vmatprep.subr.mxu0 0.0
    %797 = vmatpush1.msra.mxu0 0.0
    %798 = vmatprep.subr.mxu0 0.0
    %799 = vmatpush1.msra.mxu0 0.0
    %800 = vmatprep.subr.mxu0 0.0
    %801 = vmatpush1.msra.mxu0 0.0
    %802 = vmatprep.mubr.f32.mxu0 0.0
    %803 = vmatmul.mubr.f32.gmra.mrb[0].mxu0 %v736
    %v804 = vpop.f32.mrb[0].mxu0
    %v805 = vadd.f32 0.0, %v804
    %v806 = vpop.f32.mrb[0].mxu0
    %807 = vdwg.mxu0
    %v808 = vld [vmem:[%s4 + $0x10] sm:$0xff]
    %v810 = vsel %vm168, %v805, 0
    %812 = vmatprep.subr.mxu0 0.0
    %813 = vmatpush1.msra.mxu0 %v808
    %814 = vmatprep.subr.mxu0 0.0
    %815 = vmatpush1.msra.mxu0 0.0
    %816 = vmatprep.subr.mxu0 0.0
    %817 = vmatpush1.msra.mxu0 0.0
    %818 = vmatprep.subr.mxu0 0.0
    %819 = vmatpush1.msra.mxu0 0.0
    %820 = vmatprep.subr.mxu0 0.0
    %821 = vmatpush1.msra.mxu0 0.0
    %822 = vmatprep.subr.mxu0 0.0
    %823 = vmatpush1.msra.mxu0 0.0
    %824 = vmatprep.subr.mxu0 0.0
    %825 = vmatpush1.msra.mxu0 0.0
    %826 = vmatprep.subr.mxu0 0.0
    %827 = vmatpush1.msra.mxu0 0.0
    %828 = vmatprep.subr.mxu0 0.0
    %829 = vmatpush1.msra.mxu0 0.0
    %830 = vmatprep.subr.mxu0 0.0
    %831 = vmatpush1.msra.mxu0 0.0
    %832 = vmatprep.subr.mxu0 0.0
    %833 = vmatpush1.msra.mxu0 0.0
    %834 = vmatprep.subr.mxu0 0.0
    %835 = vmatpush1.msra.mxu0 0.0
    %836 = vmatprep.subr.mxu0 0.0
    %837 = vmatpush1.msra.mxu0 0.0
    %838 = vmatprep.subr.mxu0 0.0
    %839 = vmatpush1.msra.mxu0 0.0
    %840 = vmatprep.subr.mxu0 0.0
    %841 = vmatpush1.msra.mxu0 0.0
    %842 = vmatprep.subr.mxu0 0.0
    %843 = vmatpush1.msra.mxu0 0.0
    %844 = vmatprep.subr.mxu0 0.0
    %845 = vmatpush1.msra.mxu0 0.0
    %846 = vmatprep.subr.mxu0 0.0
    %847 = vmatpush1.msra.mxu0 0.0
    %848 = vmatprep.subr.mxu0 0.0
    %849 = vmatpush1.msra.mxu0 0.0
    %850 = vmatprep.subr.mxu0 0.0
    %851 = vmatpush1.msra.mxu0 0.0
    %852 = vmatprep.subr.mxu0 0.0
    %853 = vmatpush1.msra.mxu0 0.0
    %854 = vmatprep.subr.mxu0 0.0
    %855 = vmatpush1.msra.mxu0 0.0
    %856 = vmatprep.subr.mxu0 0.0
    %857 = vmatpush1.msra.mxu0 0.0
    %858 = vmatprep.subr.mxu0 0.0
    %859 = vmatpush1.msra.mxu0 0.0
    %860 = vmatprep.subr.mxu0 0.0
    %861 = vmatpush1.msra.mxu0 0.0
    %862 = vmatprep.subr.mxu0 0.0
    %863 = vmatpush1.msra.mxu0 0.0
    %864 = vmatprep.subr.mxu0 0.0
    %865 = vmatpush1.msra.mxu0 0.0
    %866 = vmatprep.subr.mxu0 0.0
    %867 = vmatpush1.msra.mxu0 0.0
    %868 = vmatprep.subr.mxu0 0.0
    %869 = vmatpush1.msra.mxu0 0.0
    %870 = vmatprep.subr.mxu0 0.0
    %871 = vmatpush1.msra.mxu0 0.0
    %872 = vmatprep.subr.mxu0 0.0
    %873 = vmatpush1.msra.mxu0 0.0
    %874 = vmatprep.subr.mxu0 0.0
    %875 = vmatpush1.msra.mxu0 0.0
    %876 = vmatprep.mubr.f32.mxu0 0.0
    %877 = vmatmul.mubr.f32.gmra.mrb[0].mxu0 %v810
    %v878 = vpop.f32.mrb[0].mxu0
    %v879 = vadd.f32 0.0, %v878
    %v880 = vpop.f32.mrb[0].mxu0
    %881 = vdwg.mxu0
    %v882 = vadd.f32 %v640, %v879
    %883 = vrot.lane.b32.xlu0 %v148, 104
    %v884 = vpop.permute.xlu0 %883
    %885 = vrot.lane.b32.xlu0 %v148, 56
    %v886 = vpop.permute.xlu0 %885
    %v887 = vsel %vm168, %v884, 0
    %v889 = vsel %vm168, %v886, 0
    %891 = vmatprep.subr.mxu0 0.0
    %892 = vmatpush1.xpose.msra.mxu0 %v889
    %893 = vmatprep.subr.mxu0 0.0
    %894 = vmatpush1.xpose.msra.mxu0 0.0
    %895 = vmatprep.subr.mxu0 0.0
    %896 = vmatpush1.xpose.msra.mxu0 0.0
    %897 = vmatprep.subr.mxu0 0.0
    %898 = vmatpush1.xpose.msra.mxu0 0.0
    %899 = vmatprep.subr.mxu0 0.0
    %900 = vmatpush1.xpose.msra.mxu0 0.0
    %901 = vmatprep.subr.mxu0 0.0
    %902 = vmatpush1.xpose.msra.mxu0 0.0
    %903 = vmatprep.subr.mxu0 0.0
    %904 = vmatpush1.xpose.msra.mxu0 0.0
    %905 = vmatprep.subr.mxu0 0.0
    %906 = vmatpush1.xpose.msra.mxu0 0.0
    %907 = vmatprep.subr.mxu0 0.0
    %908 = vmatpush1.xpose.msra.mxu0 0.0
    %909 = vmatprep.subr.mxu0 0.0
    %910 = vmatpush1.xpose.msra.mxu0 0.0
    %911 = vmatprep.subr.mxu0 0.0
    %912 = vmatpush1.xpose.msra.mxu0 0.0
    %913 = vmatprep.subr.mxu0 0.0
    %914 = vmatpush1.xpose.msra.mxu0 0.0
    %915 = vmatprep.subr.mxu0 0.0
    %916 = vmatpush1.xpose.msra.mxu0 0.0
    %917 = vmatprep.subr.mxu0 0.0
    %918 = vmatpush1.xpose.msra.mxu0 0.0
    %919 = vmatprep.subr.mxu0 0.0
    %920 = vmatpush1.xpose.msra.mxu0 0.0
    %921 = vmatprep.subr.mxu0 0.0
    %922 = vmatpush1.xpose.msra.mxu0 0.0
    %923 = vmatprep.subr.mxu0 0.0
    %924 = vmatpush1.xpose.msra.mxu0 0.0
    %925 = vmatprep.subr.mxu0 0.0
    %926 = vmatpush1.xpose.msra.mxu0 0.0
    %927 = vmatprep.subr.mxu0 0.0
    %928 = vmatpush1.xpose.msra.mxu0 0.0
    %929 = vmatprep.subr.mxu0 0.0
    %930 = vmatpush1.xpose.msra.mxu0 0.0
    %931 = vmatprep.subr.mxu0 0.0
    %932 = vmatpush1.xpose.msra.mxu0 0.0
    %933 = vmatprep.subr.mxu0 0.0
    %934 = vmatpush1.xpose.msra.mxu0 0.0
    %935 = vmatprep.subr.mxu0 0.0
    %936 = vmatpush1.xpose.msra.mxu0 0.0
    %937 = vmatprep.subr.mxu0 0.0
    %938 = vmatpush1.xpose.msra.mxu0 0.0
    %939 = vmatprep.subr.mxu0 0.0
    %940 = vmatpush1.xpose.msra.mxu0 0.0
    %941 = vmatprep.subr.mxu0 0.0
    %942 = vmatpush1.xpose.msra.mxu0 0.0
    %943 = vmatprep.subr.mxu0 0.0
    %944 = vmatpush1.xpose.msra.mxu0 0.0
    %945 = vmatprep.subr.mxu0 0.0
    %946 = vmatpush1.xpose.msra.mxu0 0.0
    %947 = vmatprep.subr.mxu0 0.0
    %948 = vmatpush1.xpose.msra.mxu0 0.0
    %949 = vmatprep.subr.mxu0 0.0
    %950 = vmatpush1.xpose.msra.mxu0 0.0
    %951 = vmatprep.subr.mxu0 0.0
    %952 = vmatpush1.xpose.msra.mxu0 0.0
    %953 = vmatprep.subr.mxu0 0.0
    %954 = vmatpush1.xpose.msra.mxu0 0.0
    %955 = vmatprep.mubr.f32.mxu0 0.0
    %956 = vmatmul.mubr.f32.gmra.mrb[0].mxu0 %v887
    %v957 = vpop.f32.mrb[0].mxu0
    %v958 = vadd.f32 %v163, %v957
    %v959 = vpop.f32.mrb[0].mxu0
    %960 = vdwg.mxu0
    %v961 = vsel %vm168, %v958, -inf
    %962 = vmax.xlane.f32.xlu0 %v961
    %v963 = vpop.xlane.xlu0 %962
    %v964 = vsub.f32 %v958, %v963
    %v965 = vmul.f32 %v964, 1.442695
    %v966 = vpow.pop %v965
    %v967 = vsel %vm168, %v966, 0.0
    %968 = vadd.xlane.f32.xlu0 %v967
    %v969 = vpop.xlane.xlu0 %968
    %v970 = vrcp.pop %v969
    %v971 = vmul.f32 %v966, %v970
    %972 = vrot.lane.b32.xlu0 %v148, 8
    %v973 = vpop.permute.xlu0 %972
    %v976 = vsel %vm168, %v971, 0
    %978 = vmatprep.subr.mxu0 0.0
    %979 = vmatpush1.msra.mxu0 %v973
    %980 = vmatprep.subr.mxu0 0.0
    %981 = vmatpush1.msra.mxu0 0.0
    %982 = vmatprep.subr.mxu0 0.0
    %983 = vmatpush1.msra.mxu0 0.0
    %984 = vmatprep.subr.mxu0 0.0
    %985 = vmatpush1.msra.mxu0 0.0
    %986 = vmatprep.subr.mxu0 0.0
    %987 = vmatpush1.msra.mxu0 0.0
    %988 = vmatprep.subr.mxu0 0.0
    %989 = vmatpush1.msra.mxu0 0.0
    %990 = vmatprep.subr.mxu0 0.0
    %991 = vmatpush1.msra.mxu0 0.0
    %992 = vmatprep.subr.mxu0 0.0
    %993 = vmatpush1.msra.mxu0 0.0
    %994 = vmatprep.subr.mxu0 0.0
    %995 = vmatpush1.msra.mxu0 0.0
    %996 = vmatprep.subr.mxu0 0.0
    %997 = vmatpush1.msra.mxu0 0.0
    %998 = vmatprep.subr.mxu0 0.0
    %999 = vmatpush1.msra.mxu0 0.0
    %1000 = vmatprep.subr.mxu0 0.0
    %1001 = vmatpush1.msra.mxu0 0.0
    %1002 = vmatprep.subr.mxu0 0.0
    %1003 = vmatpush1.msra.mxu0 0.0
    %1004 = vmatprep.subr.mxu0 0.0
    %1005 = vmatpush1.msra.mxu0 0.0
    %1006 = vmatprep.subr.mxu0 0.0
    %1007 = vmatpush1.msra.mxu0 0.0
    %1008 = vmatprep.subr.mxu0 0.0
    %1009 = vmatpush1.msra.mxu0 0.0
    %1010 = vmatprep.subr.mxu0 0.0
    %1011 = vmatpush1.msra.mxu0 0.0
    %1012 = vmatprep.subr.mxu0 0.0
    %1013 = vmatpush1.msra.mxu0 0.0
    %1014 = vmatprep.subr.mxu0 0.0
    %1015 = vmatpush1.msra.mxu0 0.0
    %1016 = vmatprep.subr.mxu0 0.0
    %1017 = vmatpush1.msra.mxu0 0.0
    %1018 = vmatprep.subr.mxu0 0.0
    %1019 = vmatpush1.msra.mxu0 0.0
    %1020 = vmatprep.subr.mxu0 0.0
    %1021 = vmatpush1.msra.mxu0 0.0
    %1022 = vmatprep.subr.mxu0 0.0
    %1023 = vmatpush1.msra.mxu0 0.0
    %1024 = vmatprep.subr.mxu0 0.0
    %1025 = vmatpush1.msra.mxu0 0.0
    %1026 = vmatprep.subr.mxu0 0.0
    %1027 = vmatpush1.msra.mxu0 0.0
    %1028 = vmatprep.subr.mxu0 0.0
    %1029 = vmatpush1.msra.mxu0 0.0
    %1030 = vmatprep.subr.mxu0 0.0
    %1031 = vmatpush1.msra.mxu0 0.0
    %1032 = vmatprep.subr.mxu0 0.0
    %1033 = vmatpush1.msra.mxu0 0.0
    %1034 = vmatprep.subr.mxu0 0.0
    %1035 = vmatpush1.msra.mxu0 0.0
    %1036 = vmatprep.subr.mxu0 0.0
    %1037 = vmatpush1.msra.mxu0 0.0
    %1038 = vmatprep.subr.mxu0 0.0
    %1039 = vmatpush1.msra.mxu0 0.0
    %1040 = vmatprep.subr.mxu0 0.0
    %1041 = vmatpush1.msra.mxu0 0.0
    %1042 = vmatprep.mubr.f32.mxu0 0.0
    %1043 = vmatmul.mubr.f32.gmra.mrb[0].mxu0 %v976
    %v1044 = vpop.f32.mrb[0].mxu0
    %v1045 = vadd.f32 0.0, %v1044
    %v1046 = vpop.f32.mrb[0].mxu0
    %1047 = vdwg.mxu0
    %v1048 = vld [vmem:[%s4 + $0x18] sm:$0xff]
    %v1050 = vsel %vm168, %v1045, 0
    %1052 = vmatprep.subr.mxu0 0.0
    %1053 = vmatpush1.msra.mxu0 %v1048
    %1054 = vmatprep.subr.mxu0 0.0
    %1055 = vmatpush1.msra.mxu0 0.0
    %1056 = vmatprep.subr.mxu0 0.0
    %1057 = vmatpush1.msra.mxu0 0.0
    %1058 = vmatprep.subr.mxu0 0.0
    %1059 = vmatpush1.msra.mxu0 0.0
    %1060 = vmatprep.subr.mxu0 0.0
    %1061 = vmatpush1.msra.mxu0 0.0
    %1062 = vmatprep.subr.mxu0 0.0
    %1063 = vmatpush1.msra.mxu0 0.0
    %1064 = vmatprep.subr.mxu0 0.0
    %1065 = vmatpush1.msra.mxu0 0.0
    %1066 = vmatprep.subr.mxu0 0.0
    %1067 = vmatpush1.msra.mxu0 0.0
    %1068 = vmatprep.subr.mxu0 0.0
    %1069 = vmatpush1.msra.mxu0 0.0
    %1070 = vmatprep.subr.mxu0 0.0
    %1071 = vmatpush1.msra.mxu0 0.0
    %1072 = vmatprep.subr.mxu0 0.0
    %1073 = vmatpush1.msra.mxu0 0.0
    %1074 = vmatprep.subr.mxu0 0.0
    %1075 = vmatpush1.msra.mxu0 0.0
    %1076 = vmatprep.subr.mxu0 0.0
    %1077 = vmatpush1.msra.mxu0 0.0
    %1078 = vmatprep.subr.mxu0 0.0
    %1079 = vmatpush1.msra.mxu0 0.0
    %1080 = vmatprep.subr.mxu0 0.0
    %1081 = vmatpush1.msra.mxu0 0.0
    %1082 = vmatprep.subr.mxu0 0.0
    %1083 = vmatpush1.msra.mxu0 0.0
    %1084 = vmatprep.subr.mxu0 0.0
    %1085 = vmatpush1.msra.mxu0 0.0
    %1086 = vmatprep.subr.mxu0 0.0
    %1087 = vmatpush1.msra.mxu0 0.0
    %1088 = vmatprep.subr.mxu0 0.0
    %1089 = vmatpush1.msra.mxu0 0.0
    %1090 = vmatprep.subr.mxu0 0.0
    %1091 = vmatpush1.msra.mxu0 0.0
    %1092 = vmatprep.subr.mxu0 0.0
    %1093 = vmatpush1.msra.mxu0 0.0
    %1094 = vmatprep.subr.mxu0 0.0
    %1095 = vmatpush1.msra.mxu0 0.0
    %1096 = vmatprep.subr.mxu0 0.0
    %1097 = vmatpush1.msra.mxu0 0.0
    %1098 = vmatprep.subr.mxu0 0.0
    %1099 = vmatpush1.msra.mxu0 0.0
    %1100 = vmatprep.subr.mxu0 0.0
    %1101 = vmatpush1.msra.mxu0 0.0
    %1102 = vmatprep.subr.mxu0 0.0
    %1103 = vmatpush1.msra.mxu0 0.0
    %1104 = vmatprep.subr.mxu0 0.0
    %1105 = vmatpush1.msra.mxu0 0.0
    %1106 = vmatprep.subr.mxu0 0.0
    %1107 = vmatpush1.msra.mxu0 0.0
    %1108 = vmatprep.subr.mxu0 0.0
    %1109 = vmatpush1.msra.mxu0 0.0
    %1110 = vmatprep.subr.mxu0 0.0
    %1111 = vmatpush1.msra.mxu0 0.0
    %1112 = vmatprep.subr.mxu0 0.0
    %1113 = vmatpush1.msra.mxu0 0.0
    %1114 = vmatprep.subr.mxu0 0.0
    %1115 = vmatpush1.msra.mxu0 0.0
    %1116 = vmatprep.mubr.f32.mxu0 0.0
    %1117 = vmatmul.mubr.f32.gmra.mrb[0].mxu0 %v1050
    %v1118 = vpop.f32.mrb[0].mxu0
    %v1119 = vadd.f32 0.0, %v1118
    %v1120 = vpop.f32.mrb[0].mxu0
    %1121 = vdwg.mxu0
    %v1122 = vadd.f32 %v882, %v1119
    %1123 = vrot.lane.b32.xlu0 %v148, 96
    %v1124 = vpop.permute.xlu0 %1123
    %1125 = vrot.lane.b32.xlu0 %v148, 48
    %v1126 = vpop.permute.xlu0 %1125
    %v1127 = vsel %vm168, %v1124, 0
    %v1129 = vsel %vm168, %v1126, 0
    %1131 = vmatprep.subr.mxu0 0.0
    %1132 = vmatpush1.xpose.msra.mxu0 %v1129
    %1133 = vmatprep.subr.mxu0 0.0
    %1134 = vmatpush1.xpose.msra.mxu0 0.0
    %1135 = vmatprep.subr.mxu0 0.0
    %1136 = vmatpush1.xpose.msra.mxu0 0.0
    %1137 = vmatprep.subr.mxu0 0.0
    %1138 = vmatpush1.xpose.msra.mxu0 0.0
    %1139 = vmatprep.subr.mxu0 0.0
    %1140 = vmatpush1.xpose.msra.mxu0 0.0
    %1141 = vmatprep.subr.mxu0 0.0
    %1142 = vmatpush1.xpose.msra.mxu0 0.0
    %1143 = vmatprep.subr.mxu0 0.0
    %1144 = vmatpush1.xpose.msra.mxu0 0.0
    %1145 = vmatprep.subr.mxu0 0.0
    %1146 = vmatpush1.xpose.msra.mxu0 0.0
    %1147 = vmatprep.subr.mxu0 0.0
    %1148 = vmatpush1.xpose.msra.mxu0 0.0
    %1149 = vmatprep.subr.mxu0 0.0
    %1150 = vmatpush1.xpose.msra.mxu0 0.0
    %1151 = vmatprep.subr.mxu0 0.0
    %1152 = vmatpush1.xpose.msra.mxu0 0.0
    %1153 = vmatprep.subr.mxu0 0.0
    %1154 = vmatpush1.xpose.msra.mxu0 0.0
    %1155 = vmatprep.subr.mxu0 0.0
    %1156 = vmatpush1.xpose.msra.mxu0 0.0
    %1157 = vmatprep.subr.mxu0 0.0
    %1158 = vmatpush1.xpose.msra.mxu0 0.0
    %1159 = vmatprep.subr.mxu0 0.0
    %1160 = vmatpush1.xpose.msra.mxu0 0.0
    %1161 = vmatprep.subr.mxu0 0.0
    %1162 = vmatpush1.xpose.msra.mxu0 0.0
    %1163 = vmatprep.subr.mxu0 0.0
    %1164 = vmatpush1.xpose.msra.mxu0 0.0
    %1165 = vmatprep.subr.mxu0 0.0
    %1166 = vmatpush1.xpose.msra.mxu0 0.0
    %1167 = vmatprep.subr.mxu0 0.0
    %1168 = vmatpush1.xpose.msra.mxu0 0.0
    %1169 = vmatprep.subr.mxu0 0.0
    %1170 = vmatpush1.xpose.msra.mxu0 0.0
    %1171 = vmatprep.subr.mxu0 0.0
    %1172 = vmatpush1.xpose.msra.mxu0 0.0
    %1173 = vmatprep.subr.mxu0 0.0
    %1174 = vmatpush1.xpose.msra.mxu0 0.0
    %1175 = vmatprep.subr.mxu0 0.0
    %1176 = vmatpush1.xpose.msra.mxu0 0.0
    %1177 = vmatprep.subr.mxu0 0.0
    %1178 = vmatpush1.xpose.msra.mxu0 0.0
    %1179 = vmatprep.subr.mxu0 0.0
    %1180 = vmatpush1.xpose.msra.mxu0 0.0
    %1181 = vmatprep.subr.mxu0 0.0
    %1182 = vmatpush1.xpose.msra.mxu0 0.0
    %1183 = vmatprep.subr.mxu0 0.0
    %1184 = vmatpush1.xpose.msra.mxu0 0.0
    %1185 = vmatprep.subr.mxu0 0.0
    %1186 = vmatpush1.xpose.msra.mxu0 0.0
    %1187 = vmatprep.subr.mxu0 0.0
    %1188 = vmatpush1.xpose.msra.mxu0 0.0
    %1189 = vmatprep.subr.mxu0 0.0
    %1190 = vmatpush1.xpose.msra.mxu0 0.0
    %1191 = vmatprep.subr.mxu0 0.0
    %1192 = vmatpush1.xpose.msra.mxu0 0.0
    %1193 = vmatprep.subr.mxu0 0.0
    %1194 = vmatpush1.xpose.msra.mxu0 0.0
    %1195 = vmatprep.mubr.f32.mxu0 0.0
    %1196 = vmatmul.mubr.f32.gmra.mrb[0].mxu0 %v1127
    %v1197 = vpop.f32.mrb[0].mxu0
    %v1198 = vadd.f32 %v163, %v1197
    %v1199 = vpop.f32.mrb[0].mxu0
    %1200 = vdwg.mxu0
    %v1201 = vsel %vm168, %v1198, -inf
    %1202 = vmax.xlane.f32.xlu0 %v1201
    %v1203 = vpop.xlane.xlu0 %1202
    %v1204 = vsub.f32 %v1198, %v1203
    %v1205 = vmul.f32 %v1204, 1.442695
    %v1206 = vpow.pop %v1205
    %v1207 = vsel %vm168, %v1206, 0.0
    %1208 = vadd.xlane.f32.xlu0 %v1207
    %v1209 = vpop.xlane.xlu0 %1208
    %v1210 = vrcp.pop %v1209
    %v1211 = vmul.f32 %v1206, %v1210
    %v1213 = vsel %vm168, %v1211, 0
    %1215 = vmatprep.subr.mxu0 0.0
    %1216 = vmatpush1.msra.mxu0 %v150
    %1217 = vmatprep.subr.mxu0 0.0
    %1218 = vmatpush1.msra.mxu0 0.0
    %1219 = vmatprep.subr.mxu0 0.0
    %1220 = vmatpush1.msra.mxu0 0.0
    %1221 = vmatprep.subr.mxu0 0.0
    %1222 = vmatpush1.msra.mxu0 0.0
    %1223 = vmatprep.subr.mxu0 0.0
    %1224 = vmatpush1.msra.mxu0 0.0
    %1225 = vmatprep.subr.mxu0 0.0
    %1226 = vmatpush1.msra.mxu0 0.0
    %1227 = vmatprep.subr.mxu0 0.0
    %1228 = vmatpush1.msra.mxu0 0.0
    %1229 = vmatprep.subr.mxu0 0.0
    %1230 = vmatpush1.msra.mxu0 0.0
    %1231 = vmatprep.subr.mxu0 0.0
    %1232 = vmatpush1.msra.mxu0 0.0
    %1233 = vmatprep.subr.mxu0 0.0
    %1234 = vmatpush1.msra.mxu0 0.0
    %1235 = vmatprep.subr.mxu0 0.0
    %1236 = vmatpush1.msra.mxu0 0.0
    %1237 = vmatprep.subr.mxu0 0.0
    %1238 = vmatpush1.msra.mxu0 0.0
    %1239 = vmatprep.subr.mxu0 0.0
    %1240 = vmatpush1.msra.mxu0 0.0
    %1241 = vmatprep.subr.mxu0 0.0
    %1242 = vmatpush1.msra.mxu0 0.0
    %1243 = vmatprep.subr.mxu0 0.0
    %1244 = vmatpush1.msra.mxu0 0.0
    %1245 = vmatprep.subr.mxu0 0.0
    %1246 = vmatpush1.msra.mxu0 0.0
    %1247 = vmatprep.subr.mxu0 0.0
    %1248 = vmatpush1.msra.mxu0 0.0
    %1249 = vmatprep.subr.mxu0 0.0
    %1250 = vmatpush1.msra.mxu0 0.0
    %1251 = vmatprep.subr.mxu0 0.0
    %1252 = vmatpush1.msra.mxu0 0.0
    %1253 = vmatprep.subr.mxu0 0.0
    %1254 = vmatpush1.msra.mxu0 0.0
    %1255 = vmatprep.subr.mxu0 0.0
    %1256 = vmatpush1.msra.mxu0 0.0
    %1257 = vmatprep.subr.mxu0 0.0
    %1258 = vmatpush1.msra.mxu0 0.0
    %1259 = vmatprep.subr.mxu0 0.0
    %1260 = vmatpush1.msra.mxu0 0.0
    %1261 = vmatprep.subr.mxu0 0.0
    %1262 = vmatpush1.msra.mxu0 0.0
    %1263 = vmatprep.subr.mxu0 0.0
    %1264 = vmatpush1.msra.mxu0 0.0
    %1265 = vmatprep.subr.mxu0 0.0
    %1266 = vmatpush1.msra.mxu0 0.0
    %1267 = vmatprep.subr.mxu0 0.0
    %1268 = vmatpush1.msra.mxu0 0.0
    %1269 = vmatprep.subr.mxu0 0.0
    %1270 = vmatpush1.msra.mxu0 0.0
    %1271 = vmatprep.subr.mxu0 0.0
    %1272 = vmatpush1.msra.mxu0 0.0
    %1273 = vmatprep.subr.mxu0 0.0
    %1274 = vmatpush1.msra.mxu0 0.0
    %1275 = vmatprep.subr.mxu0 0.0
    %1276 = vmatpush1.msra.mxu0 0.0
    %1277 = vmatprep.subr.mxu0 0.0
    %1278 = vmatpush1.msra.mxu0 0.0
    %1279 = vmatprep.mubr.f32.mxu0 0.0
    %1280 = vmatmul.mubr.f32.gmra.mrb[0].mxu0 %v1213
    %v1281 = vpop.f32.mrb[0].mxu0
    %v1282 = vadd.f32 0.0, %v1281
    %v1283 = vpop.f32.mrb[0].mxu0
    %1284 = vdwg.mxu0
    %v1285 = vld [vmem:[%s4 + $0x20] sm:$0xff]
    %v1287 = vsel %vm168, %v1282, 0
    %1289 = vmatprep.subr.mxu0 0.0
    %1290 = vmatpush1.msra.mxu0 %v1285
    %1291 = vmatprep.subr.mxu0 0.0
    %1292 = vmatpush1.msra.mxu0 0.0
    %1293 = vmatprep.subr.mxu0 0.0
    %1294 = vmatpush1.msra.mxu0 0.0
    %1295 = vmatprep.subr.mxu0 0.0
    %1296 = vmatpush1.msra.mxu0 0.0
    %1297 = vmatprep.subr.mxu0 0.0
    %1298 = vmatpush1.msra.mxu0 0.0
    %1299 = vmatprep.subr.mxu0 0.0
    %1300 = vmatpush1.msra.mxu0 0.0
    %1301 = vmatprep.subr.mxu0 0.0
    %1302 = vmatpush1.msra.mxu0 0.0
    %1303 = vmatprep.subr.mxu0 0.0
    %1304 = vmatpush1.msra.mxu0 0.0
    %1305 = vmatprep.subr.mxu0 0.0
    %1306 = vmatpush1.msra.mxu0 0.0
    %1307 = vmatprep.subr.mxu0 0.0
    %1308 = vmatpush1.msra.mxu0 0.0
    %1309 = vmatprep.subr.mxu0 0.0
    %1310 = vmatpush1.msra.mxu0 0.0
    %1311 = vmatprep.subr.mxu0 0.0
    %1312 = vmatpush1.msra.mxu0 0.0
    %1313 = vmatprep.subr.mxu0 0.0
    %1314 = vmatpush1.msra.mxu0 0.0
    %1315 = vmatprep.subr.mxu0 0.0
    %1316 = vmatpush1.msra.mxu0 0.0
    %1317 = vmatprep.subr.mxu0 0.0
    %1318 = vmatpush1.msra.mxu0 0.0
    %1319 = vmatprep.subr.mxu0 0.0
    %1320 = vmatpush1.msra.mxu0 0.0
    %1321 = vmatprep.subr.mxu0 0.0
    %1322 = vmatpush1.msra.mxu0 0.0
    %1323 = vmatprep.subr.mxu0 0.0
    %1324 = vmatpush1.msra.mxu0 0.0
    %1325 = vmatprep.subr.mxu0 0.0
    %1326 = vmatpush1.msra.mxu0 0.0
    %1327 = vmatprep.subr.mxu0 0.0
    %1328 = vmatpush1.msra.mxu0 0.0
    %1329 = vmatprep.subr.mxu0 0.0
    %1330 = vmatpush1.msra.mxu0 0.0
    %1331 = vmatprep.subr.mxu0 0.0
    %1332 = vmatpush1.msra.mxu0 0.0
    %1333 = vmatprep.subr.mxu0 0.0
    %1334 = vmatpush1.msra.mxu0 0.0
    %1335 = vmatprep.subr.mxu0 0.0
    %1336 = vmatpush1.msra.mxu0 0.0
    %1337 = vmatprep.subr.mxu0 0.0
    %1338 = vmatpush1.msra.mxu0 0.0
    %1339 = vmatprep.subr.mxu0 0.0
    %1340 = vmatpush1.msra.mxu0 0.0
    %1341 = vmatprep.subr.mxu0 0.0
    %1342 = vmatpush1.msra.mxu0 0.0
    %1343 = vmatprep.subr.mxu0 0.0
    %1344 = vmatpush1.msra.mxu0 0.0
    %1345 = vmatprep.subr.mxu0 0.0
    %1346 = vmatpush1.msra.mxu0 0.0
    %1347 = vmatprep.subr.mxu0 0.0
    %1348 = vmatpush1.msra.mxu0 0.0
    %1349 = vmatprep.subr.mxu0 0.0
    %1350 = vmatpush1.msra.mxu0 0.0
    %1351 = vmatprep.subr.mxu0 0.0
    %1352 = vmatpush1.msra.mxu0 0.0
    %1353 = vmatprep.mubr.f32.mxu0 0.0
    %1354 = vmatmul.mubr.f32.gmra.mrb[0].mxu0 %v1287
    %v1355 = vpop.f32.mrb[0].mxu0
    %v1356 = vadd.f32 0.0, %v1355
    %v1357 = vpop.f32.mrb[0].mxu0
    %1358 = vdwg.mxu0
    %v1359 = vadd.f32 %v1122, %v1356
    %1360 = vrot.lane.b32.xlu0 %v148, 88
    %v1361 = vpop.permute.xlu0 %1360
    %1362 = vrot.lane.b32.xlu0 %v148, 40
    %v1363 = vpop.permute.xlu0 %1362
    %v1364 = vsel %vm168, %v1361, 0
    %v1366 = vsel %vm168, %v1363, 0
    %1368 = vmatprep.subr.mxu0 0.0
    %1369 = vmatpush1.xpose.msra.mxu0 %v1366
    %1370 = vmatprep.subr.mxu0 0.0
    %1371 = vmatpush1.xpose.msra.mxu0 0.0
    %1372 = vmatprep.subr.mxu0 0.0
    %1373 = vmatpush1.xpose.msra.mxu0 0.0
    %1374 = vmatprep.subr.mxu0 0.0
    %1375 = vmatpush1.xpose.msra.mxu0 0.0
    %1376 = vmatprep.subr.mxu0 0.0
    %1377 = vmatpush1.xpose.msra.mxu0 0.0
    %1378 = vmatprep.subr.mxu0 0.0
    %1379 = vmatpush1.xpose.msra.mxu0 0.0
    %1380 = vmatprep.subr.mxu0 0.0
    %1381 = vmatpush1.xpose.msra.mxu0 0.0
    %1382 = vmatprep.subr.mxu0 0.0
    %1383 = vmatpush1.xpose.msra.mxu0 0.0
    %1384 = vmatprep.subr.mxu0 0.0
    %1385 = vmatpush1.xpose.msra.mxu0 0.0
    %1386 = vmatprep.subr.mxu0 0.0
    %1387 = vmatpush1.xpose.msra.mxu0 0.0
    %1388 = vmatprep.subr.mxu0 0.0
    %1389 = vmatpush1.xpose.msra.mxu0 0.0
    %1390 = vmatprep.subr.mxu0 0.0
    %1391 = vmatpush1.xpose.msra.mxu0 0.0
    %1392 = vmatprep.subr.mxu0 0.0
    %1393 = vmatpush1.xpose.msra.mxu0 0.0
    %1394 = vmatprep.subr.mxu0 0.0
    %1395 = vmatpush1.xpose.msra.mxu0 0.0
    %1396 = vmatprep.subr.mxu0 0.0
    %1397 = vmatpush1.xpose.msra.mxu0 0.0
    %1398 = vmatprep.subr.mxu0 0.0
    %1399 = vmatpush1.xpose.msra.mxu0 0.0
    %1400 = vmatprep.subr.mxu0 0.0
    %1401 = vmatpush1.xpose.msra.mxu0 0.0
    %1402 = vmatprep.subr.mxu0 0.0
    %1403 = vmatpush1.xpose.msra.mxu0 0.0
    %1404 = vmatprep.subr.mxu0 0.0
    %1405 = vmatpush1.xpose.msra.mxu0 0.0
    %1406 = vmatprep.subr.mxu0 0.0
    %1407 = vmatpush1.xpose.msra.mxu0 0.0
    %1408 = vmatprep.subr.mxu0 0.0
    %1409 = vmatpush1.xpose.msra.mxu0 0.0
    %1410 = vmatprep.subr.mxu0 0.0
    %1411 = vmatpush1.xpose.msra.mxu0 0.0
    %1412 = vmatprep.subr.mxu0 0.0
    %1413 = vmatpush1.xpose.msra.mxu0 0.0
    %1414 = vmatprep.subr.mxu0 0.0
    %1415 = vmatpush1.xpose.msra.mxu0 0.0
    %1416 = vmatprep.subr.mxu0 0.0
    %1417 = vmatpush1.xpose.msra.mxu0 0.0
    %1418 = vmatprep.subr.mxu0 0.0
    %1419 = vmatpush1.xpose.msra.mxu0 0.0
    %1420 = vmatprep.subr.mxu0 0.0
    %1421 = vmatpush1.xpose.msra.mxu0 0.0
    %1422 = vmatprep.subr.mxu0 0.0
    %1423 = vmatpush1.xpose.msra.mxu0 0.0
    %1424 = vmatprep.subr.mxu0 0.0
    %1425 = vmatpush1.xpose.msra.mxu0 0.0
    %1426 = vmatprep.subr.mxu0 0.0
    %1427 = vmatpush1.xpose.msra.mxu0 0.0
    %1428 = vmatprep.subr.mxu0 0.0
    %1429 = vmatpush1.xpose.msra.mxu0 0.0
    %1430 = vmatprep.subr.mxu0 0.0
    %1431 = vmatpush1.xpose.msra.mxu0 0.0
    %1432 = vmatprep.mubr.f32.mxu0 0.0
    %1433 = vmatmul.mubr.f32.gmra.mrb[0].mxu0 %v1364
    %v1434 = vpop.f32.mrb[0].mxu0
    %v1435 = vadd.f32 %v163, %v1434
    %v1436 = vpop.f32.mrb[0].mxu0
    %1437 = vdwg.mxu0
    %v1438 = vsel %vm168, %v1435, -inf
    %1439 = vmax.xlane.f32.xlu0 %v1438
    %v1440 = vpop.xlane.xlu0 %1439
    %v1441 = vsub.f32 %v1435, %v1440
    %v1442 = vmul.f32 %v1441, 1.442695
    %v1443 = vpow.pop %v1442
    %v1444 = vsel %vm168, %v1443, 0.0
    %1445 = vadd.xlane.f32.xlu0 %v1444
    %v1446 = vpop.xlane.xlu0 %1445
    %v1447 = vrcp.pop %v1446
    %v1448 = vmul.f32 %v1443, %v1447
    %1450 = vrot.lane.b32.xlu0 %v150, 120
    %v1451 = vpop.permute.xlu0 %1450
    %v1454 = vsel %vm168, %v1448, 0
    %1456 = vmatprep.subr.mxu0 0.0
    %1457 = vmatpush1.msra.mxu0 %v1451
    %1458 = vmatprep.subr.mxu0 0.0
    %1459 = vmatpush1.msra.mxu0 0.0
    %1460 = vmatprep.subr.mxu0 0.0
    %1461 = vmatpush1.msra.mxu0 0.0
    %1462 = vmatprep.subr.mxu0 0.0
    %1463 = vmatpush1.msra.mxu0 0.0
    %1464 = vmatprep.subr.mxu0 0.0
    %1465 = vmatpush1.msra.mxu0 0.0
    %1466 = vmatprep.subr.mxu0 0.0
    %1467 = vmatpush1.msra.mxu0 0.0
    %1468 = vmatprep.subr.mxu0 0.0
    %1469 = vmatpush1.msra.mxu0 0.0
    %1470 = vmatprep.subr.mxu0 0.0
    %1471 = vmatpush1.msra.mxu0 0.0
    %1472 = vmatprep.subr.mxu0 0.0
    %1473 = vmatpush1.msra.mxu0 0.0
    %1474 = vmatprep.subr.mxu0 0.0
    %1475 = vmatpush1.msra.mxu0 0.0
    %1476 = vmatprep.subr.mxu0 0.0
    %1477 = vmatpush1.msra.mxu0 0.0
    %1478 = vmatprep.subr.mxu0 0.0
    %1479 = vmatpush1.msra.mxu0 0.0
    %1480 = vmatprep.subr.mxu0 0.0
    %1481 = vmatpush1.msra.mxu0 0.0
    %1482 = vmatprep.subr.mxu0 0.0
    %1483 = vmatpush1.msra.mxu0 0.0
    %1484 = vmatprep.subr.mxu0 0.0
    %1485 = vmatpush1.msra.mxu0 0.0
    %1486 = vmatprep.subr.mxu0 0.0
    %1487 = vmatpush1.msra.mxu0 0.0
    %1488 = vmatprep.subr.mxu0 0.0
    %1489 = vmatpush1.msra.mxu0 0.0
    %1490 = vmatprep.subr.mxu0 0.0
    %1491 = vmatpush1.msra.mxu0 0.0
    %1492 = vmatprep.subr.mxu0 0.0
    %1493 = vmatpush1.msra.mxu0 0.0
    %1494 = vmatprep.subr.mxu0 0.0
    %1495 = vmatpush1.msra.mxu0 0.0
    %1496 = vmatprep.subr.mxu0 0.0
    %1497 = vmatpush1.msra.mxu0 0.0
    %1498 = vmatprep.subr.mxu0 0.0
    %1499 = vmatpush1.msra.mxu0 0.0
    %1500 = vmatprep.subr.mxu0 0.0
    %1501 = vmatpush1.msra.mxu0 0.0
    %1502 = vmatprep.subr.mxu0 0.0
    %1503 = vmatpush1.msra.mxu0 0.0
    %1504 = vmatprep.subr.mxu0 0.0
    %1505 = vmatpush1.msra.mxu0 0.0
    %1506 = vmatprep.subr.mxu0 0.0
    %1507 = vmatpush1.msra.mxu0 0.0
    %1508 = vmatprep.subr.mxu0 0.0
    %1509 = vmatpush1.msra.mxu0 0.0
    %1510 = vmatprep.subr.mxu0 0.0
    %1511 = vmatpush1.msra.mxu0 0.0
    %1512 = vmatprep.subr.mxu0 0.0
    %1513 = vmatpush1.msra.mxu0 0.0
    %1514 = vmatprep.subr.mxu0 0.0
    %1515 = vmatpush1.msra.mxu0 0.0
    %1516 = vmatprep.subr.mxu0 0.0
    %1517 = vmatpush1.msra.mxu0 0.0
    %1518 = vmatprep.subr.mxu0 0.0
    %1519 = vmatpush1.msra.mxu0 0.0
    %1520 = vmatprep.mubr.f32.mxu0 0.0
    %1521 = vmatmul.mubr.f32.gmra.mrb[0].mxu0 %v1454
    %v1522 = vpop.f32.mrb[0].mxu0
    %v1523 = vadd.f32 0.0, %v1522
    %v1524 = vpop.f32.mrb[0].mxu0
    %1525 = vdwg.mxu0
    %v1526 = vld [vmem:[%s4 + $0x28] sm:$0xff]
    %v1528 = vsel %vm168, %v1523, 0
    %1530 = vmatprep.subr.mxu0 0.0
    %1531 = vmatpush1.msra.mxu0 %v1526
    %1532 = vmatprep.subr.mxu0 0.0
    %1533 = vmatpush1.msra.mxu0 0.0
    %1534 = vmatprep.subr.mxu0 0.0
    %1535 = vmatpush1.msra.mxu0 0.0
    %1536 = vmatprep.subr.mxu0 0.0
    %1537 = vmatpush1.msra.mxu0 0.0
    %1538 = vmatprep.subr.mxu0 0.0
    %1539 = vmatpush1.msra.mxu0 0.0
    %1540 = vmatprep.subr.mxu0 0.0
    %1541 = vmatpush1.msra.mxu0 0.0
    %1542 = vmatprep.subr.mxu0 0.0
    %1543 = vmatpush1.msra.mxu0 0.0
    %1544 = vmatprep.subr.mxu0 0.0
    %1545 = vmatpush1.msra.mxu0 0.0
    %1546 = vmatprep.subr.mxu0 0.0
    %1547 = vmatpush1.msra.mxu0 0.0
    %1548 = vmatprep.subr.mxu0 0.0
    %1549 = vmatpush1.msra.mxu0 0.0
    %1550 = vmatprep.subr.mxu0 0.0
    %1551 = vmatpush1.msra.mxu0 0.0
    %1552 = vmatprep.subr.mxu0 0.0
    %1553 = vmatpush1.msra.mxu0 0.0
    %1554 = vmatprep.subr.mxu0 0.0
    %1555 = vmatpush1.msra.mxu0 0.0
    %1556 = vmatprep.subr.mxu0 0.0
    %1557 = vmatpush1.msra.mxu0 0.0
    %1558 = vmatprep.subr.mxu0 0.0
    %1559 = vmatpush1.msra.mxu0 0.0
    %1560 = vmatprep.subr.mxu0 0.0
    %1561 = vmatpush1.msra.mxu0 0.0
    %1562 = vmatprep.subr.mxu0 0.0
    %1563 = vmatpush1.msra.mxu0 0.0
    %1564 = vmatprep.subr.mxu0 0.0
    %1565 = vmatpush1.msra.mxu0 0.0
    %1566 = vmatprep.subr.mxu0 0.0
    %1567 = vmatpush1.msra.mxu0 0.0
    %1568 = vmatprep.subr.mxu0 0.0
    %1569 = vmatpush1.msra.mxu0 0.0
    %1570 = vmatprep.subr.mxu0 0.0
    %1571 = vmatpush1.msra.mxu0 0.0
    %1572 = vmatprep.subr.mxu0 0.0
    %1573 = vmatpush1.msra.mxu0 0.0
    %1574 = vmatprep.subr.mxu0 0.0
    %1575 = vmatpush1.msra.mxu0 0.0
    %1576 = vmatprep.subr.mxu0 0.0
    %1577 = vmatpush1.msra.mxu0 0.0
    %1578 = vmatprep.subr.mxu0 0.0
    %1579 = vmatpush1.msra.mxu0 0.0
    %1580 = vmatprep.subr.mxu0 0.0
    %1581 = vmatpush1.msra.mxu0 0.0
    %1582 = vmatprep.subr.mxu0 0.0
    %1583 = vmatpush1.msra.mxu0 0.0
    %1584 = vmatprep.subr.mxu0 0.0
    %1585 = vmatpush1.msra.mxu0 0.0
    %1586 = vmatprep.subr.mxu0 0.0
    %1587 = vmatpush1.msra.mxu0 0.0
    %1588 = vmatprep.subr.mxu0 0.0
    %1589 = vmatpush1.msra.mxu0 0.0
    %1590 = vmatprep.subr.mxu0 0.0
    %1591 = vmatpush1.msra.mxu0 0.0
    %1592 = vmatprep.subr.mxu0 0.0
    %1593 = vmatpush1.msra.mxu0 0.0
    %1594 = vmatprep.mubr.f32.mxu0 0.0
    %1595 = vmatmul.mubr.f32.gmra.mrb[0].mxu0 %v1528
    %v1596 = vpop.f32.mrb[0].mxu0
    %v1597 = vadd.f32 0.0, %v1596
    %v1598 = vpop.f32.mrb[0].mxu0
    %1599 = vdwg.mxu0
    %v1600 = vadd.f32 %v1359, %v1597
    %s1601 = scalar_lea.vmem %s1, 1
    %v1602 = vld [vmem:[%s1601] sm:$0x1]
    %v1604 = vlaneseq
    %v1605 = vshrl.u32 %v1604, 7
    %v1606 = vsub.s32 0, %v1605
    %v1607 = vrot.slane %v1602, %v1606
    %1610 = vrot.lane.b32.xlu0 %v154, 80
    %v1611 = vpop.permute.xlu0 %1610
    %v1612 = vsel %vm168, %v154, 0
    %v1614 = vsel %vm168, %v1611, 0
    %1616 = vmatprep.subr.mxu0 0.0
    %1617 = vmatpush1.xpose.msra.mxu0 %v1614
    %1618 = vmatprep.subr.mxu0 0.0
    %1619 = vmatpush1.xpose.msra.mxu0 0.0
    %1620 = vmatprep.subr.mxu0 0.0
    %1621 = vmatpush1.xpose.msra.mxu0 0.0
    %1622 = vmatprep.subr.mxu0 0.0
    %1623 = vmatpush1.xpose.msra.mxu0 0.0
    %1624 = vmatprep.subr.mxu0 0.0
    %1625 = vmatpush1.xpose.msra.mxu0 0.0
    %1626 = vmatprep.subr.mxu0 0.0
    %1627 = vmatpush1.xpose.msra.mxu0 0.0
    %1628 = vmatprep.subr.mxu0 0.0
    %1629 = vmatpush1.xpose.msra.mxu0 0.0
    %1630 = vmatprep.subr.mxu0 0.0
    %1631 = vmatpush1.xpose.msra.mxu0 0.0
    %1632 = vmatprep.subr.mxu0 0.0
    %1633 = vmatpush1.xpose.msra.mxu0 0.0
    %1634 = vmatprep.subr.mxu0 0.0
    %1635 = vmatpush1.xpose.msra.mxu0 0.0
    %1636 = vmatprep.subr.mxu0 0.0
    %1637 = vmatpush1.xpose.msra.mxu0 0.0
    %1638 = vmatprep.subr.mxu0 0.0
    %1639 = vmatpush1.xpose.msra.mxu0 0.0
    %1640 = vmatprep.subr.mxu0 0.0
    %1641 = vmatpush1.xpose.msra.mxu0 0.0
    %1642 = vmatprep.subr.mxu0 0.0
    %1643 = vmatpush1.xpose.msra.mxu0 0.0
    %1644 = vmatprep.subr.mxu0 0.0
    %1645 = vmatpush1.xpose.msra.mxu0 0.0
    %1646 = vmatprep.subr.mxu0 0.0
    %1647 = vmatpush1.xpose.msra.mxu0 0.0
    %1648 = vmatprep.subr.mxu0 0.0
    %1649 = vmatpush1.xpose.msra.mxu0 0.0
    %1650 = vmatprep.subr.mxu0 0.0
    %1651 = vmatpush1.xpose.msra.mxu0 0.0
    %1652 = vmatprep.subr.mxu0 0.0
    %1653 = vmatpush1.xpose.msra.mxu0 0.0
    %1654 = vmatprep.subr.mxu0 0.0
    %1655 = vmatpush1.xpose.msra.mxu0 0.0
    %1656 = vmatprep.subr.mxu0 0.0
    %1657 = vmatpush1.xpose.msra.mxu0 0.0
    %1658 = vmatprep.subr.mxu0 0.0
    %1659 = vmatpush1.xpose.msra.mxu0 0.0
    %1660 = vmatprep.subr.mxu0 0.0
    %1661 = vmatpush1.xpose.msra.mxu0 0.0
    %1662 = vmatprep.subr.mxu0 0.0
    %1663 = vmatpush1.xpose.msra.mxu0 0.0
    %1664 = vmatprep.subr.mxu0 0.0
    %1665 = vmatpush1.xpose.msra.mxu0 0.0
    %1666 = vmatprep.subr.mxu0 0.0
    %1667 = vmatpush1.xpose.msra.mxu0 0.0
    %1668 = vmatprep.subr.mxu0 0.0
    %1669 = vmatpush1.xpose.msra.mxu0 0.0
    %1670 = vmatprep.subr.mxu0 0.0
    %1671 = vmatpush1.xpose.msra.mxu0 0.0
    %1672 = vmatprep.subr.mxu0 0.0
    %1673 = vmatpush1.xpose.msra.mxu0 0.0
    %1674 = vmatprep.subr.mxu0 0.0
    %1675 = vmatpush1.xpose.msra.mxu0 0.0
    %1676 = vmatprep.subr.mxu0 0.0
    %1677 = vmatpush1.xpose.msra.mxu0 0.0
    %1678 = vmatprep.subr.mxu0 0.0
    %1679 = vmatpush1.xpose.msra.mxu0 0.0
    %1680 = vmatprep.mubr.f32.mxu0 0.0
    %1681 = vmatmul.mubr.f32.gmra.mrb[0].mxu0 %v1612
    %v1682 = vpop.f32.mrb[0].mxu0
    %v1683 = vadd.f32 %v1607, %v1682
    %v1684 = vpop.f32.mrb[0].mxu0
    %1685 = vdwg.mxu0
    %v1686 = vsel %vm168, %v1683, -inf
    %1687 = vmax.xlane.f32.xlu0 %v1686
    %v1688 = vpop.xlane.xlu0 %1687
    %v1689 = vsub.f32 %v1683, %v1688
    %v1690 = vmul.f32 %v1689, 1.442695
    %v1691 = vpow.pop %v1690
    %v1692 = vsel %vm168, %v1691, 0.0
    %1693 = vadd.xlane.f32.xlu0 %v1692
    %v1694 = vpop.xlane.xlu0 %1693
    %v1695 = vrcp.pop %v1694
    %v1696 = vmul.f32 %v1691, %v1695
    %1697 = vrot.lane.b32.xlu0 %v154, 32
    %v1698 = vpop.permute.xlu0 %1697
    %v1701 = vsel %vm168, %v1696, 0
    %1703 = vmatprep.subr.mxu0 0.0
    %1704 = vmatpush1.msra.mxu0 %v1698
    %1705 = vmatprep.subr.mxu0 0.0
    %1706 = vmatpush1.msra.mxu0 0.0
    %1707 = vmatprep.subr.mxu0 0.0
    %1708 = vmatpush1.msra.mxu0 0.0
    %1709 = vmatprep.subr.mxu0 0.0
    %1710 = vmatpush1.msra.mxu0 0.0
    %1711 = vmatprep.subr.mxu0 0.0
    %1712 = vmatpush1.msra.mxu0 0.0
    %1713 = vmatprep.subr.mxu0 0.0
    %1714 = vmatpush1.msra.mxu0 0.0
    %1715 = vmatprep.subr.mxu0 0.0
    %1716 = vmatpush1.msra.mxu0 0.0
    %1717 = vmatprep.subr.mxu0 0.0
    %1718 = vmatpush1.msra.mxu0 0.0
    %1719 = vmatprep.subr.mxu0 0.0
    %1720 = vmatpush1.msra.mxu0 0.0
    %1721 = vmatprep.subr.mxu0 0.0
    %1722 = vmatpush1.msra.mxu0 0.0
    %1723 = vmatprep.subr.mxu0 0.0
    %1724 = vmatpush1.msra.mxu0 0.0
    %1725 = vmatprep.subr.mxu0 0.0
    %1726 = vmatpush1.msra.mxu0 0.0
    %1727 = vmatprep.subr.mxu0 0.0
    %1728 = vmatpush1.msra.mxu0 0.0
    %1729 = vmatprep.subr.mxu0 0.0
    %1730 = vmatpush1.msra.mxu0 0.0
    %1731 = vmatprep.subr.mxu0 0.0
    %1732 = vmatpush1.msra.mxu0 0.0
    %1733 = vmatprep.subr.mxu0 0.0
    %1734 = vmatpush1.msra.mxu0 0.0
    %1735 = vmatprep.subr.mxu0 0.0
    %1736 = vmatpush1.msra.mxu0 0.0
    %1737 = vmatprep.subr.mxu0 0.0
    %1738 = vmatpush1.msra.mxu0 0.0
    %1739 = vmatprep.subr.mxu0 0.0
    %1740 = vmatpush1.msra.mxu0 0.0
    %1741 = vmatprep.subr.mxu0 0.0
    %1742 = vmatpush1.msra.mxu0 0.0
    %1743 = vmatprep.subr.mxu0 0.0
    %1744 = vmatpush1.msra.mxu0 0.0
    %1745 = vmatprep.subr.mxu0 0.0
    %1746 = vmatpush1.msra.mxu0 0.0
    %1747 = vmatprep.subr.mxu0 0.0
    %1748 = vmatpush1.msra.mxu0 0.0
    %1749 = vmatprep.subr.mxu0 0.0
    %1750 = vmatpush1.msra.mxu0 0.0
    %1751 = vmatprep.subr.mxu0 0.0
    %1752 = vmatpush1.msra.mxu0 0.0
    %1753 = vmatprep.subr.mxu0 0.0
    %1754 = vmatpush1.msra.mxu0 0.0
    %1755 = vmatprep.subr.mxu0 0.0
    %1756 = vmatpush1.msra.mxu0 0.0
    %1757 = vmatprep.subr.mxu0 0.0
    %1758 = vmatpush1.msra.mxu0 0.0
    %1759 = vmatprep.subr.mxu0 0.0
    %1760 = vmatpush1.msra.mxu0 0.0
    %1761 = vmatprep.subr.mxu0 0.0
    %1762 = vmatpush1.msra.mxu0 0.0
    %1763 = vmatprep.subr.mxu0 0.0
    %1764 = vmatpush1.msra.mxu0 0.0
    %1765 = vmatprep.subr.mxu0 0.0
    %1766 = vmatpush1.msra.mxu0 0.0
    %1767 = vmatprep.mubr.f32.mxu0 0.0
    %1768 = vmatmul.mubr.f32.gmra.mrb[0].mxu0 %v1701
    %v1769 = vpop.f32.mrb[0].mxu0
    %v1770 = vadd.f32 0.0, %v1769
    %v1771 = vpop.f32.mrb[0].mxu0
    %1772 = vdwg.mxu0
    %1773 = vrot.lane.b32.xlu0 %v154, 120
    %v1774 = vpop.permute.xlu0 %1773
    %1775 = vrot.lane.b32.xlu0 %v154, 72
    %v1776 = vpop.permute.xlu0 %1775
    %v1777 = vsel %vm168, %v1774, 0
    %v1779 = vsel %vm168, %v1776, 0
    %1781 = vmatprep.subr.mxu0 0.0
    %1782 = vmatpush1.xpose.msra.mxu0 %v1779
    %1783 = vmatprep.subr.mxu0 0.0
    %1784 = vmatpush1.xpose.msra.mxu0 0.0
    %1785 = vmatprep.subr.mxu0 0.0
    %1786 = vmatpush1.xpose.msra.mxu0 0.0
    %1787 = vmatprep.subr.mxu0 0.0
    %1788 = vmatpush1.xpose.msra.mxu0 0.0
    %1789 = vmatprep.subr.mxu0 0.0
    %1790 = vmatpush1.xpose.msra.mxu0 0.0
    %1791 = vmatprep.subr.mxu0 0.0
    %1792 = vmatpush1.xpose.msra.mxu0 0.0
    %1793 = vmatprep.subr.mxu0 0.0
    %1794 = vmatpush1.xpose.msra.mxu0 0.0
    %1795 = vmatprep.subr.mxu0 0.0
    %1796 = vmatpush1.xpose.msra.mxu0 0.0
    %1797 = vmatprep.subr.mxu0 0.0
    %1798 = vmatpush1.xpose.msra.mxu0 0.0
    %1799 = vmatprep.subr.mxu0 0.0
    %1800 = vmatpush1.xpose.msra.mxu0 0.0
    %1801 = vmatprep.subr.mxu0 0.0
    %1802 = vmatpush1.xpose.msra.mxu0 0.0
    %1803 = vmatprep.subr.mxu0 0.0
    %1804 = vmatpush1.xpose.msra.mxu0 0.0
    %1805 = vmatprep.subr.mxu0 0.0
    %1806 = vmatpush1.xpose.msra.mxu0 0.0
    %1807 = vmatprep.subr.mxu0 0.0
    %1808 = vmatpush1.xpose.msra.mxu0 0.0
    %1809 = vmatprep.subr.mxu0 0.0
    %1810 = vmatpush1.xpose.msra.mxu0 0.0
    %1811 = vmatprep.subr.mxu0 0.0
    %1812 = vmatpush1.xpose.msra.mxu0 0.0
    %1813 = vmatprep.subr.mxu0 0.0
    %1814 = vmatpush1.xpose.msra.mxu0 0.0
    %1815 = vmatprep.subr.mxu0 0.0
    %1816 = vmatpush1.xpose.msra.mxu0 0.0
    %1817 = vmatprep.subr.mxu0 0.0
    %1818 = vmatpush1.xpose.msra.mxu0 0.0
    %1819 = vmatprep.subr.mxu0 0.0
    %1820 = vmatpush1.xpose.msra.mxu0 0.0
    %1821 = vmatprep.subr.mxu0 0.0
    %1822 = vmatpush1.xpose.msra.mxu0 0.0
    %1823 = vmatprep.subr.mxu0 0.0
    %1824 = vmatpush1.xpose.msra.mxu0 0.0
    %1825 = vmatprep.subr.mxu0 0.0
    %1826 = vmatpush1.xpose.msra.mxu0 0.0
    %1827 = vmatprep.subr.mxu0 0.0
    %1828 = vmatpush1.xpose.msra.mxu0 0.0
    %1829 = vmatprep.subr.mxu0 0.0
    %1830 = vmatpush1.xpose.msra.mxu0 0.0
    %1831 = vmatprep.subr.mxu0 0.0
    %1832 = vmatpush1.xpose.msra.mxu0 0.0
    %1833 = vmatprep.subr.mxu0 0.0
    %1834 = vmatpush1.xpose.msra.mxu0 0.0
    %1835 = vmatprep.subr.mxu0 0.0
    %1836 = vmatpush1.xpose.msra.mxu0 0.0
    %1837 = vmatprep.subr.mxu0 0.0
    %1838 = vmatpush1.xpose.msra.mxu0 0.0
    %1839 = vmatprep.subr.mxu0 0.0
    %1840 = vmatpush1.xpose.msra.mxu0 0.0
    %1841 = vmatprep.subr.mxu0 0.0
    %1842 = vmatpush1.xpose.msra.mxu0 0.0
    %1843 = vmatprep.subr.mxu0 0.0
    %1844 = vmatpush1.xpose.msra.mxu0 0.0
    %1845 = vmatprep.mubr.f32.mxu0 0.0
    %1846 = vmatmul.mubr.f32.gmra.mrb[0].mxu0 %v1777
    %v1847 = vpop.f32.mrb[0].mxu0
    %v1848 = vadd.f32 %v1607, %v1847
    %v1849 = vpop.f32.mrb[0].mxu0
    %1850 = vdwg.mxu0
    %v1851 = vsel %vm168, %v1848, -inf
    %1852 = vmax.xlane.f32.xlu0 %v1851
    %v1853 = vpop.xlane.xlu0 %1852
    %v1854 = vsub.f32 %v1848, %v1853
    %v1855 = vmul.f32 %v1854, 1.442695
    %v1856 = vpow.pop %v1855
    %v1857 = vsel %vm168, %v1856, 0.0
    %1858 = vadd.xlane.f32.xlu0 %v1857
    %v1859 = vpop.xlane.xlu0 %1858
    %v1860 = vrcp.pop %v1859
    %v1861 = vmul.f32 %v1856, %v1860
    %1862 = vrot.lane.b32.xlu0 %v154, 24
    %v1863 = vpop.permute.xlu0 %1862
    %v1866 = vsel %vm168, %v1861, 0
    %1868 = vmatprep.subr.mxu0 0.0
    %1869 = vmatpush1.msra.mxu0 %v1863
    %1870 = vmatprep.subr.mxu0 0.0
    %1871 = vmatpush1.msra.mxu0 0.0
    %1872 = vmatprep.subr.mxu0 0.0
    %1873 = vmatpush1.msra.mxu0 0.0
    %1874 = vmatprep.subr.mxu0 0.0
    %1875 = vmatpush1.msra.mxu0 0.0
    %1876 = vmatprep.subr.mxu0 0.0
    %1877 = vmatpush1.msra.mxu0 0.0
    %1878 = vmatprep.subr.mxu0 0.0
    %1879 = vmatpush1.msra.mxu0 0.0
    %1880 = vmatprep.subr.mxu0 0.0
    %1881 = vmatpush1.msra.mxu0 0.0
    %1882 = vmatprep.subr.mxu0 0.0
    %1883 = vmatpush1.msra.mxu0 0.0
    %1884 = vmatprep.subr.mxu0 0.0
    %1885 = vmatpush1.msra.mxu0 0.0
    %1886 = vmatprep.subr.mxu0 0.0
    %1887 = vmatpush1.msra.mxu0 0.0
    %1888 = vmatprep.subr.mxu0 0.0
    %1889 = vmatpush1.msra.mxu0 0.0
    %1890 = vmatprep.subr.mxu0 0.0
    %1891 = vmatpush1.msra.mxu0 0.0
    %1892 = vmatprep.subr.mxu0 0.0
    %1893 = vmatpush1.msra.mxu0 0.0
    %1894 = vmatprep.subr.mxu0 0.0
    %1895 = vmatpush1.msra.mxu0 0.0
    %1896 = vmatprep.subr.mxu0 0.0
    %1897 = vmatpush1.msra.mxu0 0.0
    %1898 = vmatprep.subr.mxu0 0.0
    %1899 = vmatpush1.msra.mxu0 0.0
    %1900 = vmatprep.subr.mxu0 0.0
    %1901 = vmatpush1.msra.mxu0 0.0
    %1902 = vmatprep.subr.mxu0 0.0
    %1903 = vmatpush1.msra.mxu0 0.0
    %1904 = vmatprep.subr.mxu0 0.0
    %1905 = vmatpush1.msra.mxu0 0.0
    %1906 = vmatprep.subr.mxu0 0.0
    %1907 = vmatpush1.msra.mxu0 0.0
    %1908 = vmatprep.subr.mxu0 0.0
    %1909 = vmatpush1.msra.mxu0 0.0
    %1910 = vmatprep.subr.mxu0 0.0
    %1911 = vmatpush1.msra.mxu0 0.0
    %1912 = vmatprep.subr.mxu0 0.0
    %1913 = vmatpush1.msra.mxu0 0.0
    %1914 = vmatprep.subr.mxu0 0.0
    %1915 = vmatpush1.msra.mxu0 0.0
    %1916 = vmatprep.subr.mxu0 0.0
    %1917 = vmatpush1.msra.mxu0 0.0
    %1918 = vmatprep.subr.mxu0 0.0
    %1919 = vmatpush1.msra.mxu0 0.0
    %1920 = vmatprep.subr.mxu0 0.0
    %1921 = vmatpush1.msra.mxu0 0.0
    %1922 = vmatprep.subr.mxu0 0.0
    %1923 = vmatpush1.msra.mxu0 0.0
    %1924 = vmatprep.subr.mxu0 0.0
    %1925 = vmatpush1.msra.mxu0 0.0
    %1926 = vmatprep.subr.mxu0 0.0
    %1927 = vmatpush1.msra.mxu0 0.0
    %1928 = vmatprep.subr.mxu0 0.0
    %1929 = vmatpush1.msra.mxu0 0.0
    %1930 = vmatprep.subr.mxu0 0.0
    %1931 = vmatpush1.msra.mxu0 0.0
    %1932 = vmatprep.mubr.f32.mxu0 0.0
    %1933 = vmatmul.mubr.f32.gmra.mrb[0].mxu0 %v1866
    %v1934 = vpop.f32.mrb[0].mxu0
    %v1935 = vadd.f32 0.0, %v1934
    %v1936 = vpop.f32.mrb[0].mxu0
    %1937 = vdwg.mxu0
    %v1939 = vsel %vm168, %v1935, 0
    %1941 = vmatprep.subr.mxu0 0.0
    %1942 = vmatpush1.msra.mxu0 %v496
    %1943 = vmatprep.subr.mxu0 0.0
    %1944 = vmatpush1.msra.mxu0 0.0
    %1945 = vmatprep.subr.mxu0 0.0
    %1946 = vmatpush1.msra.mxu0 0.0
    %1947 = vmatprep.subr.mxu0 0.0
    %1948 = vmatpush1.msra.mxu0 0.0
    %1949 = vmatprep.subr.mxu0 0.0
    %1950 = vmatpush1.msra.mxu0 0.0
    %1951 = vmatprep.subr.mxu0 0.0
    %1952 = vmatpush1.msra.mxu0 0.0
    %1953 = vmatprep.subr.mxu0 0.0
    %1954 = vmatpush1.msra.mxu0 0.0
    %1955 = vmatprep.subr.mxu0 0.0
    %1956 = vmatpush1.msra.mxu0 0.0
    %1957 = vmatprep.subr.mxu0 0.0
    %1958 = vmatpush1.msra.mxu0 0.0
    %1959 = vmatprep.subr.mxu0 0.0
    %1960 = vmatpush1.msra.mxu0 0.0
    %1961 = vmatprep.subr.mxu0 0.0
    %1962 = vmatpush1.msra.mxu0 0.0
    %1963 = vmatprep.subr.mxu0 0.0
    %1964 = vmatpush1.msra.mxu0 0.0
    %1965 = vmatprep.subr.mxu0 0.0
    %1966 = vmatpush1.msra.mxu0 0.0
    %1967 = vmatprep.subr.mxu0 0.0
    %1968 = vmatpush1.msra.mxu0 0.0
    %1969 = vmatprep.subr.mxu0 0.0
    %1970 = vmatpush1.msra.mxu0 0.0
    %1971 = vmatprep.subr.mxu0 0.0
    %1972 = vmatpush1.msra.mxu0 0.0
    %1973 = vmatprep.subr.mxu0 0.0
    %1974 = vmatpush1.msra.mxu0 0.0
    %1975 = vmatprep.subr.mxu0 0.0
    %1976 = vmatpush1.msra.mxu0 0.0
    %1977 = vmatprep.subr.mxu0 0.0
    %1978 = vmatpush1.msra.mxu0 0.0
    %1979 = vmatprep.subr.mxu0 0.0
    %1980 = vmatpush1.msra.mxu0 0.0
    %1981 = vmatprep.subr.mxu0 0.0
    %1982 = vmatpush1.msra.mxu0 0.0
    %1983 = vmatprep.subr.mxu0 0.0
    %1984 = vmatpush1.msra.mxu0 0.0
    %1985 = vmatprep.subr.mxu0 0.0
    %1986 = vmatpush1.msra.mxu0 0.0
    %1987 = vmatprep.subr.mxu0 0.0
    %1988 = vmatpush1.msra.mxu0 0.0
    %1989 = vmatprep.subr.mxu0 0.0
    %1990 = vmatpush1.msra.mxu0 0.0
    %1991 = vmatprep.subr.mxu0 0.0
    %1992 = vmatpush1.msra.mxu0 0.0
    %1993 = vmatprep.subr.mxu0 0.0
    %1994 = vmatpush1.msra.mxu0 0.0
    %1995 = vmatprep.subr.mxu0 0.0
    %1996 = vmatpush1.msra.mxu0 0.0
    %1997 = vmatprep.subr.mxu0 0.0
    %1998 = vmatpush1.msra.mxu0 0.0
    %1999 = vmatprep.subr.mxu0 0.0
    %2000 = vmatpush1.msra.mxu0 0.0
    %2001 = vmatprep.subr.mxu0 0.0
    %2002 = vmatpush1.msra.mxu0 0.0
    %2003 = vmatprep.subr.mxu0 0.0
    %2004 = vmatpush1.msra.mxu0 0.0
    %2005 = vmatprep.mubr.f32.mxu0 0.0
    %2006 = vmatmul.mubr.f32.gmra.mrb[0].mxu0 %v1939
    %v2007 = vpop.f32.mrb[0].mxu0
    %v2008 = vadd.f32 0.0, %v2007
    %v2009 = vpop.f32.mrb[0].mxu0
    %2010 = vdwg.mxu0
    %v2012 = vsel %vm168, %v1770, 0
    %2014 = vmatprep.subr.mxu0 0.0
    %2015 = vmatpush1.msra.mxu0 %v330
    %2016 = vmatprep.subr.mxu0 0.0
    %2017 = vmatpush1.msra.mxu0 0.0
    %2018 = vmatprep.subr.mxu0 0.0
    %2019 = vmatpush1.msra.mxu0 0.0
    %2020 = vmatprep.subr.mxu0 0.0
    %2021 = vmatpush1.msra.mxu0 0.0
    %2022 = vmatprep.subr.mxu0 0.0
    %2023 = vmatpush1.msra.mxu0 0.0
    %2024 = vmatprep.subr.mxu0 0.0
    %2025 = vmatpush1.msra.mxu0 0.0
    %2026 = vmatprep.subr.mxu0 0.0
    %2027 = vmatpush1.msra.mxu0 0.0
    %2028 = vmatprep.subr.mxu0 0.0
    %2029 = vmatpush1.msra.mxu0 0.0
    %2030 = vmatprep.subr.mxu0 0.0
    %2031 = vmatpush1.msra.mxu0 0.0
    %2032 = vmatprep.subr.mxu0 0.0
    %2033 = vmatpush1.msra.mxu0 0.0
    %2034 = vmatprep.subr.mxu0 0.0
    %2035 = vmatpush1.msra.mxu0 0.0
    %2036 = vmatprep.subr.mxu0 0.0
    %2037 = vmatpush1.msra.mxu0 0.0
    %2038 = vmatprep.subr.mxu0 0.0
    %2039 = vmatpush1.msra.mxu0 0.0
    %2040 = vmatprep.subr.mxu0 0.0
    %2041 = vmatpush1.msra.mxu0 0.0
    %2042 = vmatprep.subr.mxu0 0.0
    %2043 = vmatpush1.msra.mxu0 0.0
    %2044 = vmatprep.subr.mxu0 0.0
    %2045 = vmatpush1.msra.mxu0 0.0
    %2046 = vmatprep.subr.mxu0 0.0
    %2047 = vmatpush1.msra.mxu0 0.0
    %2048 = vmatprep.subr.mxu0 0.0
    %2049 = vmatpush1.msra.mxu0 0.0
    %2050 = vmatprep.subr.mxu0 0.0
    %2051 = vmatpush1.msra.mxu0 0.0
    %2052 = vmatprep.subr.mxu0 0.0
    %2053 = vmatpush1.msra.mxu0 0.0
    %2054 = vmatprep.subr.mxu0 0.0
    %2055 = vmatpush1.msra.mxu0 0.0
    %2056 = vmatprep.subr.mxu0 0.0
    %2057 = vmatpush1.msra.mxu0 0.0
    %2058 = vmatprep.subr.mxu0 0.0
    %2059 = vmatpush1.msra.mxu0 0.0
    %2060 = vmatprep.subr.mxu0 0.0
    %2061 = vmatpush1.msra.mxu0 0.0
    %2062 = vmatprep.subr.mxu0 0.0
    %2063 = vmatpush1.msra.mxu0 0.0
    %2064 = vmatprep.subr.mxu0 0.0
    %2065 = vmatpush1.msra.mxu0 0.0
    %2066 = vmatprep.subr.mxu0 0.0
    %2067 = vmatpush1.msra.mxu0 0.0
    %2068 = vmatprep.subr.mxu0 0.0
    %2069 = vmatpush1.msra.mxu0 0.0
    %2070 = vmatprep.subr.mxu0 0.0
    %2071 = vmatpush1.msra.mxu0 0.0
    %2072 = vmatprep.subr.mxu0 0.0
    %2073 = vmatpush1.msra.mxu0 0.0
    %2074 = vmatprep.subr.mxu0 0.0
    %2075 = vmatpush1.msra.mxu0 0.0
    %2076 = vmatprep.subr.mxu0 0.0
    %2077 = vmatpush1.msra.mxu0 0.0
    %2078 = vmatprep.mubr.f32.mxu0 0.0
    %2079 = vmatmul.mubr.f32.gmra.mrb[0].mxu0 %v2012
    %v2080 = vpop.f32.mrb[0].mxu0
    %v2081 = vadd.f32 %v2008, %v2080
    %v2082 = vpop.f32.mrb[0].mxu0
    %2083 = vdwg.mxu0
    %2084 = vrot.lane.b32.xlu0 %v154, 112
    %v2085 = vpop.permute.xlu0 %2084
    %2086 = vrot.lane.b32.xlu0 %v154, 64
    %v2087 = vpop.permute.xlu0 %2086
    %v2088 = vsel %vm168, %v2085, 0
    %v2090 = vsel %vm168, %v2087, 0
    %2092 = vmatprep.subr.mxu0 0.0
    %2093 = vmatpush1.xpose.msra.mxu0 %v2090
    %2094 = vmatprep.subr.mxu0 0.0
    %2095 = vmatpush1.xpose.msra.mxu0 0.0
    %2096 = vmatprep.subr.mxu0 0.0
    %2097 = vmatpush1.xpose.msra.mxu0 0.0
    %2098 = vmatprep.subr.mxu0 0.0
    %2099 = vmatpush1.xpose.msra.mxu0 0.0
    %2100 = vmatprep.subr.mxu0 0.0
    %2101 = vmatpush1.xpose.msra.mxu0 0.0
    %2102 = vmatprep.subr.mxu0 0.0
    %2103 = vmatpush1.xpose.msra.mxu0 0.0
    %2104 = vmatprep.subr.mxu0 0.0
    %2105 = vmatpush1.xpose.msra.mxu0 0.0
    %2106 = vmatprep.subr.mxu0 0.0
    %2107 = vmatpush1.xpose.msra.mxu0 0.0
    %2108 = vmatprep.subr.mxu0 0.0
    %2109 = vmatpush1.xpose.msra.mxu0 0.0
    %2110 = vmatprep.subr.mxu0 0.0
    %2111 = vmatpush1.xpose.msra.mxu0 0.0
    %2112 = vmatprep.subr.mxu0 0.0
    %2113 = vmatpush1.xpose.msra.mxu0 0.0
    %2114 = vmatprep.subr.mxu0 0.0
    %2115 = vmatpush1.xpose.msra.mxu0 0.0
    %2116 = vmatprep.subr.mxu0 0.0
    %2117 = vmatpush1.xpose.msra.mxu0 0.0
    %2118 = vmatprep.subr.mxu0 0.0
    %2119 = vmatpush1.xpose.msra.mxu0 0.0
    %2120 = vmatprep.subr.mxu0 0.0
    %2121 = vmatpush1.xpose.msra.mxu0 0.0
    %2122 = vmatprep.subr.mxu0 0.0
    %2123 = vmatpush1.xpose.msra.mxu0 0.0
    %2124 = vmatprep.subr.mxu0 0.0
    %2125 = vmatpush1.xpose.msra.mxu0 0.0
    %2126 = vmatprep.subr.mxu0 0.0
    %2127 = vmatpush1.xpose.msra.mxu0 0.0
    %2128 = vmatprep.subr.mxu0 0.0
    %2129 = vmatpush1.xpose.msra.mxu0 0.0
    %2130 = vmatprep.subr.mxu0 0.0
    %2131 = vmatpush1.xpose.msra.mxu0 0.0
    %2132 = vmatprep.subr.mxu0 0.0
    %2133 = vmatpush1.xpose.msra.mxu0 0.0
    %2134 = vmatprep.subr.mxu0 0.0
    %2135 = vmatpush1.xpose.msra.mxu0 0.0
    %2136 = vmatprep.subr.mxu0 0.0
    %2137 = vmatpush1.xpose.msra.mxu0 0.0
    %2138 = vmatprep.subr.mxu0 0.0
    %2139 = vmatpush1.xpose.msra.mxu0 0.0
    %2140 = vmatprep.subr.mxu0 0.0
    %2141 = vmatpush1.xpose.msra.mxu0 0.0
    %2142 = vmatprep.subr.mxu0 0.0
    %2143 = vmatpush1.xpose.msra.mxu0 0.0
    %2144 = vmatprep.subr.mxu0 0.0
    %2145 = vmatpush1.xpose.msra.mxu0 0.0
    %2146 = vmatprep.subr.mxu0 0.0
    %2147 = vmatpush1.xpose.msra.mxu0 0.0
    %2148 = vmatprep.subr.mxu0 0.0
    %2149 = vmatpush1.xpose.msra.mxu0 0.0
    %2150 = vmatprep.subr.mxu0 0.0
    %2151 = vmatpush1.xpose.msra.mxu0 0.0
    %2152 = vmatprep.subr.mxu0 0.0
    %2153 = vmatpush1.xpose.msra.mxu0 0.0
    %2154 = vmatprep.subr.mxu0 0.0
    %2155 = vmatpush1.xpose.msra.mxu0 0.0
    %2156 = vmatprep.mubr.f32.mxu0 0.0
    %2157 = vmatmul.mubr.f32.gmra.mrb[0].mxu0 %v2088
    %v2158 = vpop.f32.mrb[0].mxu0
    %v2159 = vadd.f32 %v1607, %v2158
    %v2160 = vpop.f32.mrb[0].mxu0
    %2161 = vdwg.mxu0
    %v2162 = vsel %vm168, %v2159, -inf
    %2163 = vmax.xlane.f32.xlu0 %v2162
    %v2164 = vpop.xlane.xlu0 %2163
    %v2165 = vsub.f32 %v2159, %v2164
    %v2166 = vmul.f32 %v2165, 1.442695
    %v2167 = vpow.pop %v2166
    %v2168 = vsel %vm168, %v2167, 0.0
    %2169 = vadd.xlane.f32.xlu0 %v2168
    %v2170 = vpop.xlane.xlu0 %2169
    %v2171 = vrcp.pop %v2170
    %v2172 = vmul.f32 %v2167, %v2171
    %2173 = vrot.lane.b32.xlu0 %v154, 16
    %v2174 = vpop.permute.xlu0 %2173
    %v2177 = vsel %vm168, %v2172, 0
    %2179 = vmatprep.subr.mxu0 0.0
    %2180 = vmatpush1.msra.mxu0 %v2174
    %2181 = vmatprep.subr.mxu0 0.0
    %2182 = vmatpush1.msra.mxu0 0.0
    %2183 = vmatprep.subr.mxu0 0.0
    %2184 = vmatpush1.msra.mxu0 0.0
    %2185 = vmatprep.subr.mxu0 0.0
    %2186 = vmatpush1.msra.mxu0 0.0
    %2187 = vmatprep.subr.mxu0 0.0
    %2188 = vmatpush1.msra.mxu0 0.0
    %2189 = vmatprep.subr.mxu0 0.0
    %2190 = vmatpush1.msra.mxu0 0.0
    %2191 = vmatprep.subr.mxu0 0.0
    %2192 = vmatpush1.msra.mxu0 0.0
    %2193 = vmatprep.subr.mxu0 0.0
    %2194 = vmatpush1.msra.mxu0 0.0
    %2195 = vmatprep.subr.mxu0 0.0
    %2196 = vmatpush1.msra.mxu0 0.0
    %2197 = vmatprep.subr.mxu0 0.0
    %2198 = vmatpush1.msra.mxu0 0.0
    %2199 = vmatprep.subr.mxu0 0.0
    %2200 = vmatpush1.msra.mxu0 0.0
    %2201 = vmatprep.subr.mxu0 0.0
    %2202 = vmatpush1.msra.mxu0 0.0
    %2203 = vmatprep.subr.mxu0 0.0
    %2204 = vmatpush1.msra.mxu0 0.0
    %2205 = vmatprep.subr.mxu0 0.0
    %2206 = vmatpush1.msra.mxu0 0.0
    %2207 = vmatprep.subr.mxu0 0.0
    %2208 = vmatpush1.msra.mxu0 0.0
    %2209 = vmatprep.subr.mxu0 0.0
    %2210 = vmatpush1.msra.mxu0 0.0
    %2211 = vmatprep.subr.mxu0 0.0
    %2212 = vmatpush1.msra.mxu0 0.0
    %2213 = vmatprep.subr.mxu0 0.0
    %2214 = vmatpush1.msra.mxu0 0.0
    %2215 = vmatprep.subr.mxu0 0.0
    %2216 = vmatpush1.msra.mxu0 0.0
    %2217 = vmatprep.subr.mxu0 0.0
    %2218 = vmatpush1.msra.mxu0 0.0
    %2219 = vmatprep.subr.mxu0 0.0
    %2220 = vmatpush1.msra.mxu0 0.0
    %2221 = vmatprep.subr.mxu0 0.0
    %2222 = vmatpush1.msra.mxu0 0.0
    %2223 = vmatprep.subr.mxu0 0.0
    %2224 = vmatpush1.msra.mxu0 0.0
    %2225 = vmatprep.subr.mxu0 0.0
    %2226 = vmatpush1.msra.mxu0 0.0
    %2227 = vmatprep.subr.mxu0 0.0
    %2228 = vmatpush1.msra.mxu0 0.0
    %2229 = vmatprep.subr.mxu0 0.0
    %2230 = vmatpush1.msra.mxu0 0.0
    %2231 = vmatprep.subr.mxu0 0.0
    %2232 = vmatpush1.msra.mxu0 0.0
    %2233 = vmatprep.subr.mxu0 0.0
    %2234 = vmatpush1.msra.mxu0 0.0
    %2235 = vmatprep.subr.mxu0 0.0
    %2236 = vmatpush1.msra.mxu0 0.0
    %2237 = vmatprep.subr.mxu0 0.0
    %2238 = vmatpush1.msra.mxu0 0.0
    %2239 = vmatprep.subr.mxu0 0.0
    %2240 = vmatpush1.msra.mxu0 0.0
    %2241 = vmatprep.subr.mxu0 0.0
    %2242 = vmatpush1.msra.mxu0 0.0
    %2243 = vmatprep.mubr.f32.mxu0 0.0
    %2244 = vmatmul.mubr.f32.gmra.mrb[0].mxu0 %v2177
    %v2245 = vpop.f32.mrb[0].mxu0
    %v2246 = vadd.f32 0.0, %v2245
    %v2247 = vpop.f32.mrb[0].mxu0
    %2248 = vdwg.mxu0
    %v2250 = vsel %vm168, %v2246, 0
    %2252 = vmatprep.subr.mxu0 0.0
    %2253 = vmatpush1.msra.mxu0 %v808
    %2254 = vmatprep.subr.mxu0 0.0
    %2255 = vmatpush1.msra.mxu0 0.0
    %2256 = vmatprep.subr.mxu0 0.0
    %2257 = vmatpush1.msra.mxu0 0.0
    %2258 = vmatprep.subr.mxu0 0.0
    %2259 = vmatpush1.msra.mxu0 0.0
    %2260 = vmatprep.subr.mxu0 0.0
    %2261 = vmatpush1.msra.mxu0 0.0
    %2262 = vmatprep.subr.mxu0 0.0
    %2263 = vmatpush1.msra.mxu0 0.0
    %2264 = vmatprep.subr.mxu0 0.0
    %2265 = vmatpush1.msra.mxu0 0.0
    %2266 = vmatprep.subr.mxu0 0.0
    %2267 = vmatpush1.msra.mxu0 0.0
    %2268 = vmatprep.subr.mxu0 0.0
    %2269 = vmatpush1.msra.mxu0 0.0
    %2270 = vmatprep.subr.mxu0 0.0
    %2271 = vmatpush1.msra.mxu0 0.0
    %2272 = vmatprep.subr.mxu0 0.0
    %2273 = vmatpush1.msra.mxu0 0.0
    %2274 = vmatprep.subr.mxu0 0.0
    %2275 = vmatpush1.msra.mxu0 0.0
    %2276 = vmatprep.subr.mxu0 0.0
    %2277 = vmatpush1.msra.mxu0 0.0
    %2278 = vmatprep.subr.mxu0 0.0
    %2279 = vmatpush1.msra.mxu0 0.0
    %2280 = vmatprep.subr.mxu0 0.0
    %2281 = vmatpush1.msra.mxu0 0.0
    %2282 = vmatprep.subr.mxu0 0.0
    %2283 = vmatpush1.msra.mxu0 0.0
    %2284 = vmatprep.subr.mxu0 0.0
    %2285 = vmatpush1.msra.mxu0 0.0
    %2286 = vmatprep.subr.mxu0 0.0
    %2287 = vmatpush1.msra.mxu0 0.0
    %2288 = vmatprep.subr.mxu0 0.0
    %2289 = vmatpush1.msra.mxu0 0.0
    %2290 = vmatprep.subr.mxu0 0.0
    %2291 = vmatpush1.msra.mxu0 0.0
    %2292 = vmatprep.subr.mxu0 0.0
    %2293 = vmatpush1.msra.mxu0 0.0
    %2294 = vmatprep.subr.mxu0 0.0
    %2295 = vmatpush1.msra.mxu0 0.0
    %2296 = vmatprep.subr.mxu0 0.0
    %2297 = vmatpush1.msra.mxu0 0.0
    %2298 = vmatprep.subr.mxu0 0.0
    %2299 = vmatpush1.msra.mxu0 0.0
    %2300 = vmatprep.subr.mxu0 0.0
    %2301 = vmatpush1.msra.mxu0 0.0
    %2302 = vmatprep.subr.mxu0 0.0
    %2303 = vmatpush1.msra.mxu0 0.0
    %2304 = vmatprep.subr.mxu0 0.0
    %2305 = vmatpush1.msra.mxu0 0.0
    %2306 = vmatprep.subr.mxu0 0.0
    %2307 = vmatpush1.msra.mxu0 0.0
    %2308 = vmatprep.subr.mxu0 0.0
    %2309 = vmatpush1.msra.mxu0 0.0
    %2310 = vmatprep.subr.mxu0 0.0
    %2311 = vmatpush1.msra.mxu0 0.0
    %2312 = vmatprep.subr.mxu0 0.0
    %2313 = vmatpush1.msra.mxu0 0.0
    %2314 = vmatprep.subr.mxu0 0.0
    %2315 = vmatpush1.msra.mxu0 0.0
    %2316 = vmatprep.mubr.f32.mxu0 0.0
    %2317 = vmatmul.mubr.f32.gmra.mrb[0].mxu0 %v2250
    %v2318 = vpop.f32.mrb[0].mxu0
    %v2319 = vadd.f32 0.0, %v2318
    %v2320 = vpop.f32.mrb[0].mxu0
    %2321 = vdwg.mxu0
    %v2322 = vadd.f32 %v2081, %v2319
    %2323 = vrot.lane.b32.xlu0 %v154, 104
    %v2324 = vpop.permute.xlu0 %2323
    %2325 = vrot.lane.b32.xlu0 %v154, 56
    %v2326 = vpop.permute.xlu0 %2325
    %v2327 = vsel %vm168, %v2324, 0
    %v2329 = vsel %vm168, %v2326, 0
    %2331 = vmatprep.subr.mxu0 0.0
    %2332 = vmatpush1.xpose.msra.mxu0 %v2329
    %2333 = vmatprep.subr.mxu0 0.0
    %2334 = vmatpush1.xpose.msra.mxu0 0.0
    %2335 = vmatprep.subr.mxu0 0.0
    %2336 = vmatpush1.xpose.msra.mxu0 0.0
    %2337 = vmatprep.subr.mxu0 0.0
    %2338 = vmatpush1.xpose.msra.mxu0 0.0
    %2339 = vmatprep.subr.mxu0 0.0
    %2340 = vmatpush1.xpose.msra.mxu0 0.0
    %2341 = vmatprep.subr.mxu0 0.0
    %2342 = vmatpush1.xpose.msra.mxu0 0.0
    %2343 = vmatprep.subr.mxu0 0.0
    %2344 = vmatpush1.xpose.msra.mxu0 0.0
    %2345 = vmatprep.subr.mxu0 0.0
    %2346 = vmatpush1.xpose.msra.mxu0 0.0
    %2347 = vmatprep.subr.mxu0 0.0
    %2348 = vmatpush1.xpose.msra.mxu0 0.0
    %2349 = vmatprep.subr.mxu0 0.0
    %2350 = vmatpush1.xpose.msra.mxu0 0.0
    %2351 = vmatprep.subr.mxu0 0.0
    %2352 = vmatpush1.xpose.msra.mxu0 0.0
    %2353 = vmatprep.subr.mxu0 0.0
    %2354 = vmatpush1.xpose.msra.mxu0 0.0
    %2355 = vmatprep.subr.mxu0 0.0
    %2356 = vmatpush1.xpose.msra.mxu0 0.0
    %2357 = vmatprep.subr.mxu0 0.0
    %2358 = vmatpush1.xpose.msra.mxu0 0.0
    %2359 = vmatprep.subr.mxu0 0.0
    %2360 = vmatpush1.xpose.msra.mxu0 0.0
    %2361 = vmatprep.subr.mxu0 0.0
    %2362 = vmatpush1.xpose.msra.mxu0 0.0
    %2363 = vmatprep.subr.mxu0 0.0
    %2364 = vmatpush1.xpose.msra.mxu0 0.0
    %2365 = vmatprep.subr.mxu0 0.0
    %2366 = vmatpush1.xpose.msra.mxu0 0.0
    %2367 = vmatprep.subr.mxu0 0.0
    %2368 = vmatpush1.xpose.msra.mxu0 0.0
    %2369 = vmatprep.subr.mxu0 0.0
    %2370 = vmatpush1.xpose.msra.mxu0 0.0
    %2371 = vmatprep.subr.mxu0 0.0
    %2372 = vmatpush1.xpose.msra.mxu0 0.0
    %2373 = vmatprep.subr.mxu0 0.0
    %2374 = vmatpush1.xpose.msra.mxu0 0.0
    %2375 = vmatprep.subr.mxu0 0.0
    %2376 = vmatpush1.xpose.msra.mxu0 0.0
    %2377 = vmatprep.subr.mxu0 0.0
    %2378 = vmatpush1.xpose.msra.mxu0 0.0
    %2379 = vmatprep.subr.mxu0 0.0
    %2380 = vmatpush1.xpose.msra.mxu0 0.0
    %2381 = vmatprep.subr.mxu0 0.0
    %2382 = vmatpush1.xpose.msra.mxu0 0.0
    %2383 = vmatprep.subr.mxu0 0.0
    %2384 = vmatpush1.xpose.msra.mxu0 0.0
    %2385 = vmatprep.subr.mxu0 0.0
    %2386 = vmatpush1.xpose.msra.mxu0 0.0
    %2387 = vmatprep.subr.mxu0 0.0
    %2388 = vmatpush1.xpose.msra.mxu0 0.0
    %2389 = vmatprep.subr.mxu0 0.0
    %2390 = vmatpush1.xpose.msra.mxu0 0.0
    %2391 = vmatprep.subr.mxu0 0.0
    %2392 = vmatpush1.xpose.msra.mxu0 0.0
    %2393 = vmatprep.subr.mxu0 0.0
    %2394 = vmatpush1.xpose.msra.mxu0 0.0
    %2395 = vmatprep.mubr.f32.mxu0 0.0
    %2396 = vmatmul.mubr.f32.gmra.mrb[0].mxu0 %v2327
    %v2397 = vpop.f32.mrb[0].mxu0
    %v2398 = vadd.f32 %v1607, %v2397
    %v2399 = vpop.f32.mrb[0].mxu0
    %2400 = vdwg.mxu0
    %v2401 = vsel %vm168, %v2398, -inf
    %2402 = vmax.xlane.f32.xlu0 %v2401
    %v2403 = vpop.xlane.xlu0 %2402
    %v2404 = vsub.f32 %v2398, %v2403
    %v2405 = vmul.f32 %v2404, 1.442695
    %v2406 = vpow.pop %v2405
    %v2407 = vsel %vm168, %v2406, 0.0
    %2408 = vadd.xlane.f32.xlu0 %v2407
    %v2409 = vpop.xlane.xlu0 %2408
    %v2410 = vrcp.pop %v2409
    %v2411 = vmul.f32 %v2406, %v2410
    %2412 = vrot.lane.b32.xlu0 %v154, 8
    %v2413 = vpop.permute.xlu0 %2412
    %v2416 = vsel %vm168, %v2411, 0
    %2418 = vmatprep.subr.mxu0 0.0
    %2419 = vmatpush1.msra.mxu0 %v2413
    %2420 = vmatprep.subr.mxu0 0.0
    %2421 = vmatpush1.msra.mxu0 0.0
    %2422 = vmatprep.subr.mxu0 0.0
    %2423 = vmatpush1.msra.mxu0 0.0
    %2424 = vmatprep.subr.mxu0 0.0
    %2425 = vmatpush1.msra.mxu0 0.0
    %2426 = vmatprep.subr.mxu0 0.0
    %2427 = vmatpush1.msra.mxu0 0.0
    %2428 = vmatprep.subr.mxu0 0.0
    %2429 = vmatpush1.msra.mxu0 0.0
    %2430 = vmatprep.subr.mxu0 0.0
    %2431 = vmatpush1.msra.mxu0 0.0
    %2432 = vmatprep.subr.mxu0 0.0
    %2433 = vmatpush1.msra.mxu0 0.0
    %2434 = vmatprep.subr.mxu0 0.0
    %2435 = vmatpush1.msra.mxu0 0.0
    %2436 = vmatprep.subr.mxu0 0.0
    %2437 = vmatpush1.msra.mxu0 0.0
    %2438 = vmatprep.subr.mxu0 0.0
    %2439 = vmatpush1.msra.mxu0 0.0
    %2440 = vmatprep.subr.mxu0 0.0
    %2441 = vmatpush1.msra.mxu0 0.0
    %2442 = vmatprep.subr.mxu0 0.0
    %2443 = vmatpush1.msra.mxu0 0.0
    %2444 = vmatprep.subr.mxu0 0.0
    %2445 = vmatpush1.msra.mxu0 0.0
    %2446 = vmatprep.subr.mxu0 0.0
    %2447 = vmatpush1.msra.mxu0 0.0
    %2448 = vmatprep.subr.mxu0 0.0
    %2449 = vmatpush1.msra.mxu0 0.0
    %2450 = vmatprep.subr.mxu0 0.0
    %2451 = vmatpush1.msra.mxu0 0.0
    %2452 = vmatprep.subr.mxu0 0.0
    %2453 = vmatpush1.msra.mxu0 0.0
    %2454 = vmatprep.subr.mxu0 0.0
    %2455 = vmatpush1.msra.mxu0 0.0
    %2456 = vmatprep.subr.mxu0 0.0
    %2457 = vmatpush1.msra.mxu0 0.0
    %2458 = vmatprep.subr.mxu0 0.0
    %2459 = vmatpush1.msra.mxu0 0.0
    %2460 = vmatprep.subr.mxu0 0.0
    %2461 = vmatpush1.msra.mxu0 0.0
    %2462 = vmatprep.subr.mxu0 0.0
    %2463 = vmatpush1.msra.mxu0 0.0
    %2464 = vmatprep.subr.mxu0 0.0
    %2465 = vmatpush1.msra.mxu0 0.0
    %2466 = vmatprep.subr.mxu0 0.0
    %2467 = vmatpush1.msra.mxu0 0.0
    %2468 = vmatprep.subr.mxu0 0.0
    %2469 = vmatpush1.msra.mxu0 0.0
    %2470 = vmatprep.subr.mxu0 0.0
    %2471 = vmatpush1.msra.mxu0 0.0
    %2472 = vmatprep.subr.mxu0 0.0
    %2473 = vmatpush1.msra.mxu0 0.0
    %2474 = vmatprep.subr.mxu0 0.0
    %2475 = vmatpush1.msra.mxu0 0.0
    %2476 = vmatprep.subr.mxu0 0.0
    %2477 = vmatpush1.msra.mxu0 0.0
    %2478 = vmatprep.subr.mxu0 0.0
    %2479 = vmatpush1.msra.mxu0 0.0
    %2480 = vmatprep.subr.mxu0 0.0
    %2481 = vmatpush1.msra.mxu0 0.0
    %2482 = vmatprep.mubr.f32.mxu0 0.0
    %2483 = vmatmul.mubr.f32.gmra.mrb[0].mxu0 %v2416
    %v2484 = vpop.f32.mrb[0].mxu0
    %v2485 = vadd.f32 0.0, %v2484
    %v2486 = vpop.f32.mrb[0].mxu0
    %2487 = vdwg.mxu0
    %v2489 = vsel %vm168, %v2485, 0
    %2491 = vmatprep.subr.mxu0 0.0
    %2492 = vmatpush1.msra.mxu0 %v1048
    %2493 = vmatprep.subr.mxu0 0.0
    %2494 = vmatpush1.msra.mxu0 0.0
    %2495 = vmatprep.subr.mxu0 0.0
    %2496 = vmatpush1.msra.mxu0 0.0
    %2497 = vmatprep.subr.mxu0 0.0
    %2498 = vmatpush1.msra.mxu0 0.0
    %2499 = vmatprep.subr.mxu0 0.0
    %2500 = vmatpush1.msra.mxu0 0.0
    %2501 = vmatprep.subr.mxu0 0.0
    %2502 = vmatpush1.msra.mxu0 0.0
    %2503 = vmatprep.subr.mxu0 0.0
    %2504 = vmatpush1.msra.mxu0 0.0
    %2505 = vmatprep.subr.mxu0 0.0
    %2506 = vmatpush1.msra.mxu0 0.0
    %2507 = vmatprep.subr.mxu0 0.0
    %2508 = vmatpush1.msra.mxu0 0.0
    %2509 = vmatprep.subr.mxu0 0.0
    %2510 = vmatpush1.msra.mxu0 0.0
    %2511 = vmatprep.subr.mxu0 0.0
    %2512 = vmatpush1.msra.mxu0 0.0
    %2513 = vmatprep.subr.mxu0 0.0
    %2514 = vmatpush1.msra.mxu0 0.0
    %2515 = vmatprep.subr.mxu0 0.0
    %2516 = vmatpush1.msra.mxu0 0.0
    %2517 = vmatprep.subr.mxu0 0.0
    %2518 = vmatpush1.msra.mxu0 0.0
    %2519 = vmatprep.subr.mxu0 0.0
    %2520 = vmatpush1.msra.mxu0 0.0
    %2521 = vmatprep.subr.mxu0 0.0
    %2522 = vmatpush1.msra.mxu0 0.0
    %2523 = vmatprep.subr.mxu0 0.0
    %2524 = vmatpush1.msra.mxu0 0.0
    %2525 = vmatprep.subr.mxu0 0.0
    %2526 = vmatpush1.msra.mxu0 0.0
    %2527 = vmatprep.subr.mxu0 0.0
    %2528 = vmatpush1.msra.mxu0 0.0
    %2529 = vmatprep.subr.mxu0 0.0
    %2530 = vmatpush1.msra.mxu0 0.0
    %2531 = vmatprep.subr.mxu0 0.0
    %2532 = vmatpush1.msra.mxu0 0.0
    %2533 = vmatprep.subr.mxu0 0.0
    %2534 = vmatpush1.msra.mxu0 0.0
    %2535 = vmatprep.subr.mxu0 0.0
    %2536 = vmatpush1.msra.mxu0 0.0
    %2537 = vmatprep.subr.mxu0 0.0
    %2538 = vmatpush1.msra.mxu0 0.0
    %2539 = vmatprep.subr.mxu0 0.0
    %2540 = vmatpush1.msra.mxu0 0.0
    %2541 = vmatprep.subr.mxu0 0.0
    %2542 = vmatpush1.msra.mxu0 0.0
    %2543 = vmatprep.subr.mxu0 0.0
    %2544 = vmatpush1.msra.mxu0 0.0
    %2545 = vmatprep.subr.mxu0 0.0
    %2546 = vmatpush1.msra.mxu0 0.0
    %2547 = vmatprep.subr.mxu0 0.0
    %2548 = vmatpush1.msra.mxu0 0.0
    %2549 = vmatprep.subr.mxu0 0.0
    %2550 = vmatpush1.msra.mxu0 0.0
    %2551 = vmatprep.subr.mxu0 0.0
    %2552 = vmatpush1.msra.mxu0 0.0
    %2553 = vmatprep.subr.mxu0 0.0
    %2554 = vmatpush1.msra.mxu0 0.0
    %2555 = vmatprep.mubr.f32.mxu0 0.0
    %2556 = vmatmul.mubr.f32.gmra.mrb[0].mxu0 %v2489
    %v2557 = vpop.f32.mrb[0].mxu0
    %v2558 = vadd.f32 0.0, %v2557
    %v2559 = vpop.f32.mrb[0].mxu0
    %2560 = vdwg.mxu0
    %v2561 = vadd.f32 %v2322, %v2558
    %2562 = vrot.lane.b32.xlu0 %v154, 96
    %v2563 = vpop.permute.xlu0 %2562
    %2564 = vrot.lane.b32.xlu0 %v154, 48
    %v2565 = vpop.permute.xlu0 %2564
    %v2566 = vsel %vm168, %v2563, 0
    %v2568 = vsel %vm168, %v2565, 0
    %2570 = vmatprep.subr.mxu0 0.0
    %2571 = vmatpush1.xpose.msra.mxu0 %v2568
    %2572 = vmatprep.subr.mxu0 0.0
    %2573 = vmatpush1.xpose.msra.mxu0 0.0
    %2574 = vmatprep.subr.mxu0 0.0
    %2575 = vmatpush1.xpose.msra.mxu0 0.0
    %2576 = vmatprep.subr.mxu0 0.0
    %2577 = vmatpush1.xpose.msra.mxu0 0.0
    %2578 = vmatprep.subr.mxu0 0.0
    %2579 = vmatpush1.xpose.msra.mxu0 0.0
    %2580 = vmatprep.subr.mxu0 0.0
    %2581 = vmatpush1.xpose.msra.mxu0 0.0
    %2582 = vmatprep.subr.mxu0 0.0
    %2583 = vmatpush1.xpose.msra.mxu0 0.0
    %2584 = vmatprep.subr.mxu0 0.0
    %2585 = vmatpush1.xpose.msra.mxu0 0.0
    %2586 = vmatprep.subr.mxu0 0.0
    %2587 = vmatpush1.xpose.msra.mxu0 0.0
    %2588 = vmatprep.subr.mxu0 0.0
    %2589 = vmatpush1.xpose.msra.mxu0 0.0
    %2590 = vmatprep.subr.mxu0 0.0
    %2591 = vmatpush1.xpose.msra.mxu0 0.0
    %2592 = vmatprep.subr.mxu0 0.0
    %2593 = vmatpush1.xpose.msra.mxu0 0.0
    %2594 = vmatprep.subr.mxu0 0.0
    %2595 = vmatpush1.xpose.msra.mxu0 0.0
    %2596 = vmatprep.subr.mxu0 0.0
    %2597 = vmatpush1.xpose.msra.mxu0 0.0
    %2598 = vmatprep.subr.mxu0 0.0
    %2599 = vmatpush1.xpose.msra.mxu0 0.0
    %2600 = vmatprep.subr.mxu0 0.0
    %2601 = vmatpush1.xpose.msra.mxu0 0.0
    %2602 = vmatprep.subr.mxu0 0.0
    %2603 = vmatpush1.xpose.msra.mxu0 0.0
    %2604 = vmatprep.subr.mxu0 0.0
    %2605 = vmatpush1.xpose.msra.mxu0 0.0
    %2606 = vmatprep.subr.mxu0 0.0
    %2607 = vmatpush1.xpose.msra.mxu0 0.0
    %2608 = vmatprep.subr.mxu0 0.0
    %2609 = vmatpush1.xpose.msra.mxu0 0.0
    %2610 = vmatprep.subr.mxu0 0.0
    %2611 = vmatpush1.xpose.msra.mxu0 0.0
    %2612 = vmatprep.subr.mxu0 0.0
    %2613 = vmatpush1.xpose.msra.mxu0 0.0
    %2614 = vmatprep.subr.mxu0 0.0
    %2615 = vmatpush1.xpose.msra.mxu0 0.0
    %2616 = vmatprep.subr.mxu0 0.0
    %2617 = vmatpush1.xpose.msra.mxu0 0.0
    %2618 = vmatprep.subr.mxu0 0.0
    %2619 = vmatpush1.xpose.msra.mxu0 0.0
    %2620 = vmatprep.subr.mxu0 0.0
    %2621 = vmatpush1.xpose.msra.mxu0 0.0
    %2622 = vmatprep.subr.mxu0 0.0
    %2623 = vmatpush1.xpose.msra.mxu0 0.0
    %2624 = vmatprep.subr.mxu0 0.0
    %2625 = vmatpush1.xpose.msra.mxu0 0.0
    %2626 = vmatprep.subr.mxu0 0.0
    %2627 = vmatpush1.xpose.msra.mxu0 0.0
    %2628 = vmatprep.subr.mxu0 0.0
    %2629 = vmatpush1.xpose.msra.mxu0 0.0
    %2630 = vmatprep.subr.mxu0 0.0
    %2631 = vmatpush1.xpose.msra.mxu0 0.0
    %2632 = vmatprep.subr.mxu0 0.0
    %2633 = vmatpush1.xpose.msra.mxu0 0.0
    %2634 = vmatprep.mubr.f32.mxu0 0.0
    %2635 = vmatmul.mubr.f32.gmra.mrb[0].mxu0 %v2566
    %v2636 = vpop.f32.mrb[0].mxu0
    %v2637 = vadd.f32 %v1607, %v2636
    %v2638 = vpop.f32.mrb[0].mxu0
    %2639 = vdwg.mxu0
    %v2640 = vsel %vm168, %v2637, -inf
    %2641 = vmax.xlane.f32.xlu0 %v2640
    %v2642 = vpop.xlane.xlu0 %2641
    %v2643 = vsub.f32 %v2637, %v2642
    %v2644 = vmul.f32 %v2643, 1.442695
    %v2645 = vpow.pop %v2644
    %v2646 = vsel %vm168, %v2645, 0.0
    %2647 = vadd.xlane.f32.xlu0 %v2646
    %v2648 = vpop.xlane.xlu0 %2647
    %v2649 = vrcp.pop %v2648
    %v2650 = vmul.f32 %v2645, %v2649
    %v2652 = vsel %vm168, %v2650, 0
    %2654 = vmatprep.subr.mxu0 0.0
    %2655 = vmatpush1.msra.mxu0 %v156
    %2656 = vmatprep.subr.mxu0 0.0
    %2657 = vmatpush1.msra.mxu0 0.0
    %2658 = vmatprep.subr.mxu0 0.0
    %2659 = vmatpush1.msra.mxu0 0.0
    %2660 = vmatprep.subr.mxu0 0.0
    %2661 = vmatpush1.msra.mxu0 0.0
    %2662 = vmatprep.subr.mxu0 0.0
    %2663 = vmatpush1.msra.mxu0 0.0
    %2664 = vmatprep.subr.mxu0 0.0
    %2665 = vmatpush1.msra.mxu0 0.0
    %2666 = vmatprep.subr.mxu0 0.0
    %2667 = vmatpush1.msra.mxu0 0.0
    %2668 = vmatprep.subr.mxu0 0.0
    %2669 = vmatpush1.msra.mxu0 0.0
    %2670 = vmatprep.subr.mxu0 0.0
    %2671 = vmatpush1.msra.mxu0 0.0
    %2672 = vmatprep.subr.mxu0 0.0
    %2673 = vmatpush1.msra.mxu0 0.0
    %2674 = vmatprep.subr.mxu0 0.0
    %2675 = vmatpush1.msra.mxu0 0.0
    %2676 = vmatprep.subr.mxu0 0.0
    %2677 = vmatpush1.msra.mxu0 0.0
    %2678 = vmatprep.subr.mxu0 0.0
    %2679 = vmatpush1.msra.mxu0 0.0
    %2680 = vmatprep.subr.mxu0 0.0
    %2681 = vmatpush1.msra.mxu0 0.0
    %2682 = vmatprep.subr.mxu0 0.0
    %2683 = vmatpush1.msra.mxu0 0.0
    %2684 = vmatprep.subr.mxu0 0.0
    %2685 = vmatpush1.msra.mxu0 0.0
    %2686 = vmatprep.subr.mxu0 0.0
    %2687 = vmatpush1.msra.mxu0 0.0
    %2688 = vmatprep.subr.mxu0 0.0
    %2689 = vmatpush1.msra.mxu0 0.0
    %2690 = vmatprep.subr.mxu0 0.0
    %2691 = vmatpush1.msra.mxu0 0.0
    %2692 = vmatprep.subr.mxu0 0.0
    %2693 = vmatpush1.msra.mxu0 0.0
    %2694 = vmatprep.subr.mxu0 0.0
    %2695 = vmatpush1.msra.mxu0 0.0
    %2696 = vmatprep.subr.mxu0 0.0
    %2697 = vmatpush1.msra.mxu0 0.0
    %2698 = vmatprep.subr.mxu0 0.0
    %2699 = vmatpush1.msra.mxu0 0.0
    %2700 = vmatprep.subr.mxu0 0.0
    %2701 = vmatpush1.msra.mxu0 0.0
    %2702 = vmatprep.subr.mxu0 0.0
    %2703 = vmatpush1.msra.mxu0 0.0
    %2704 = vmatprep.subr.mxu0 0.0
    %2705 = vmatpush1.msra.mxu0 0.0
    %2706 = vmatprep.subr.mxu0 0.0
    %2707 = vmatpush1.msra.mxu0 0.0
    %2708 = vmatprep.subr.mxu0 0.0
    %2709 = vmatpush1.msra.mxu0 0.0
    %2710 = vmatprep.subr.mxu0 0.0
    %2711 = vmatpush1.msra.mxu0 0.0
    %2712 = vmatprep.subr.mxu0 0.0
    %2713 = vmatpush1.msra.mxu0 0.0
    %2714 = vmatprep.subr.mxu0 0.0
    %2715 = vmatpush1.msra.mxu0 0.0
    %2716 = vmatprep.subr.mxu0 0.0
    %2717 = vmatpush1.msra.mxu0 0.0
    %2718 = vmatprep.mubr.f32.mxu0 0.0
    %2719 = vmatmul.mubr.f32.gmra.mrb[0].mxu0 %v2652
    %v2720 = vpop.f32.mrb[0].mxu0
    %v2721 = vadd.f32 0.0, %v2720
    %v2722 = vpop.f32.mrb[0].mxu0
    %2723 = vdwg.mxu0
    %v2725 = vsel %vm168, %v2721, 0
    %2727 = vmatprep.subr.mxu0 0.0
    %2728 = vmatpush1.msra.mxu0 %v1285
    %2729 = vmatprep.subr.mxu0 0.0
    %2730 = vmatpush1.msra.mxu0 0.0
    %2731 = vmatprep.subr.mxu0 0.0
    %2732 = vmatpush1.msra.mxu0 0.0
    %2733 = vmatprep.subr.mxu0 0.0
    %2734 = vmatpush1.msra.mxu0 0.0
    %2735 = vmatprep.subr.mxu0 0.0
    %2736 = vmatpush1.msra.mxu0 0.0
    %2737 = vmatprep.subr.mxu0 0.0
    %2738 = vmatpush1.msra.mxu0 0.0
    %2739 = vmatprep.subr.mxu0 0.0
    %2740 = vmatpush1.msra.mxu0 0.0
    %2741 = vmatprep.subr.mxu0 0.0
    %2742 = vmatpush1.msra.mxu0 0.0
    %2743 = vmatprep.subr.mxu0 0.0
    %2744 = vmatpush1.msra.mxu0 0.0
    %2745 = vmatprep.subr.mxu0 0.0
    %2746 = vmatpush1.msra.mxu0 0.0
    %2747 = vmatprep.subr.mxu0 0.0
    %2748 = vmatpush1.msra.mxu0 0.0
    %2749 = vmatprep.subr.mxu0 0.0
    %2750 = vmatpush1.msra.mxu0 0.0
    %2751 = vmatprep.subr.mxu0 0.0
    %2752 = vmatpush1.msra.mxu0 0.0
    %2753 = vmatprep.subr.mxu0 0.0
    %2754 = vmatpush1.msra.mxu0 0.0
    %2755 = vmatprep.subr.mxu0 0.0
    %2756 = vmatpush1.msra.mxu0 0.0
    %2757 = vmatprep.subr.mxu0 0.0
    %2758 = vmatpush1.msra.mxu0 0.0
    %2759 = vmatprep.subr.mxu0 0.0
    %2760 = vmatpush1.msra.mxu0 0.0
    %2761 = vmatprep.subr.mxu0 0.0
    %2762 = vmatpush1.msra.mxu0 0.0
    %2763 = vmatprep.subr.mxu0 0.0
    %2764 = vmatpush1.msra.mxu0 0.0
    %2765 = vmatprep.subr.mxu0 0.0
    %2766 = vmatpush1.msra.mxu0 0.0
    %2767 = vmatprep.subr.mxu0 0.0
    %2768 = vmatpush1.msra.mxu0 0.0
    %2769 = vmatprep.subr.mxu0 0.0
    %2770 = vmatpush1.msra.mxu0 0.0
    %2771 = vmatprep.subr.mxu0 0.0
    %2772 = vmatpush1.msra.mxu0 0.0
    %2773 = vmatprep.subr.mxu0 0.0
    %2774 = vmatpush1.msra.mxu0 0.0
    %2775 = vmatprep.subr.mxu0 0.0
    %2776 = vmatpush1.msra.mxu0 0.0
    %2777 = vmatprep.subr.mxu0 0.0
    %2778 = vmatpush1.msra.mxu0 0.0
    %2779 = vmatprep.subr.mxu0 0.0
    %2780 = vmatpush1.msra.mxu0 0.0
    %2781 = vmatprep.subr.mxu0 0.0
    %2782 = vmatpush1.msra.mxu0 0.0
    %2783 = vmatprep.subr.mxu0 0.0
    %2784 = vmatpush1.msra.mxu0 0.0
    %2785 = vmatprep.subr.mxu0 0.0
    %2786 = vmatpush1.msra.mxu0 0.0
    %2787 = vmatprep.subr.mxu0 0.0
    %2788 = vmatpush1.msra.mxu0 0.0
    %2789 = vmatprep.subr.mxu0 0.0
    %2790 = vmatpush1.msra.mxu0 0.0
    %2791 = vmatprep.mubr.f32.mxu0 0.0
    %2792 = vmatmul.mubr.f32.gmra.mrb[0].mxu0 %v2725
    %v2793 = vpop.f32.mrb[0].mxu0
    %v2794 = vadd.f32 0.0, %v2793
    %v2795 = vpop.f32.mrb[0].mxu0
    %2796 = vdwg.mxu0
    %v2797 = vadd.f32 %v2561, %v2794
    %2798 = vrot.lane.b32.xlu0 %v154, 88
    %v2799 = vpop.permute.xlu0 %2798
    %2800 = vrot.lane.b32.xlu0 %v154, 40
    %v2801 = vpop.permute.xlu0 %2800
    %v2802 = vsel %vm168, %v2799, 0
    %v2804 = vsel %vm168, %v2801, 0
    %2806 = vmatprep.subr.mxu0 0.0
    %2807 = vmatpush1.xpose.msra.mxu0 %v2804
    %2808 = vmatprep.subr.mxu0 0.0
    %2809 = vmatpush1.xpose.msra.mxu0 0.0
    %2810 = vmatprep.subr.mxu0 0.0
    %2811 = vmatpush1.xpose.msra.mxu0 0.0
    %2812 = vmatprep.subr.mxu0 0.0
    %2813 = vmatpush1.xpose.msra.mxu0 0.0
    %2814 = vmatprep.subr.mxu0 0.0
    %2815 = vmatpush1.xpose.msra.mxu0 0.0
    %2816 = vmatprep.subr.mxu0 0.0
    %2817 = vmatpush1.xpose.msra.mxu0 0.0
    %2818 = vmatprep.subr.mxu0 0.0
    %2819 = vmatpush1.xpose.msra.mxu0 0.0
    %2820 = vmatprep.subr.mxu0 0.0
    %2821 = vmatpush1.xpose.msra.mxu0 0.0
    %2822 = vmatprep.subr.mxu0 0.0
    %2823 = vmatpush1.xpose.msra.mxu0 0.0
    %2824 = vmatprep.subr.mxu0 0.0
    %2825 = vmatpush1.xpose.msra.mxu0 0.0
    %2826 = vmatprep.subr.mxu0 0.0
    %2827 = vmatpush1.xpose.msra.mxu0 0.0
    %2828 = vmatprep.subr.mxu0 0.0
    %2829 = vmatpush1.xpose.msra.mxu0 0.0
    %2830 = vmatprep.subr.mxu0 0.0
    %2831 = vmatpush1.xpose.msra.mxu0 0.0
    %2832 = vmatprep.subr.mxu0 0.0
    %2833 = vmatpush1.xpose.msra.mxu0 0.0
    %2834 = vmatprep.subr.mxu0 0.0
    %2835 = vmatpush1.xpose.msra.mxu0 0.0
    %2836 = vmatprep.subr.mxu0 0.0
    %2837 = vmatpush1.xpose.msra.mxu0 0.0
    %2838 = vmatprep.subr.mxu0 0.0
    %2839 = vmatpush1.xpose.msra.mxu0 0.0
    %2840 = vmatprep.subr.mxu0 0.0
    %2841 = vmatpush1.xpose.msra.mxu0 0.0
    %2842 = vmatprep.subr.mxu0 0.0
    %2843 = vmatpush1.xpose.msra.mxu0 0.0
    %2844 = vmatprep.subr.mxu0 0.0
    %2845 = vmatpush1.xpose.msra.mxu0 0.0
    %2846 = vmatprep.subr.mxu0 0.0
    %2847 = vmatpush1.xpose.msra.mxu0 0.0
    %2848 = vmatprep.subr.mxu0 0.0
    %2849 = vmatpush1.xpose.msra.mxu0 0.0
    %2850 = vmatprep.subr.mxu0 0.0
    %2851 = vmatpush1.xpose.msra.mxu0 0.0
    %2852 = vmatprep.subr.mxu0 0.0
    %2853 = vmatpush1.xpose.msra.mxu0 0.0
    %2854 = vmatprep.subr.mxu0 0.0
    %2855 = vmatpush1.xpose.msra.mxu0 0.0
    %2856 = vmatprep.subr.mxu0 0.0
    %2857 = vmatpush1.xpose.msra.mxu0 0.0
    %2858 = vmatprep.subr.mxu0 0.0
    %2859 = vmatpush1.xpose.msra.mxu0 0.0
    %2860 = vmatprep.subr.mxu0 0.0
    %2861 = vmatpush1.xpose.msra.mxu0 0.0
    %2862 = vmatprep.subr.mxu0 0.0
    %2863 = vmatpush1.xpose.msra.mxu0 0.0
    %2864 = vmatprep.subr.mxu0 0.0
    %2865 = vmatpush1.xpose.msra.mxu0 0.0
    %2866 = vmatprep.subr.mxu0 0.0
    %2867 = vmatpush1.xpose.msra.mxu0 0.0
    %2868 = vmatprep.subr.mxu0 0.0
    %2869 = vmatpush1.xpose.msra.mxu0 0.0
    %2870 = vmatprep.mubr.f32.mxu0 0.0
    %2871 = vmatmul.mubr.f32.gmra.mrb[0].mxu0 %v2802
    %v2872 = vpop.f32.mrb[0].mxu0
    %v2873 = vadd.f32 %v1607, %v2872
    %v2874 = vpop.f32.mrb[0].mxu0
    %2875 = vdwg.mxu0
    %v2876 = vsel %vm168, %v2873, -inf
    %2877 = vmax.xlane.f32.xlu0 %v2876
    %v2878 = vpop.xlane.xlu0 %2877
    %v2879 = vsub.f32 %v2873, %v2878
    %v2880 = vmul.f32 %v2879, 1.442695
    %v2881 = vpow.pop %v2880
    %v2882 = vsel %vm168, %v2881, 0.0
    %2883 = vadd.xlane.f32.xlu0 %v2882
    %v2884 = vpop.xlane.xlu0 %2883
    %v2885 = vrcp.pop %v2884
    %v2886 = vmul.f32 %v2881, %v2885
    %2888 = vrot.lane.b32.xlu0 %v156, 120
    %v2889 = vpop.permute.xlu0 %2888
    %v2892 = vsel %vm168, %v2886, 0
    %2894 = vmatprep.subr.mxu0 0.0
    %2895 = vmatpush1.msra.mxu0 %v2889
    %2896 = vmatprep.subr.mxu0 0.0
    %2897 = vmatpush1.msra.mxu0 0.0
    %2898 = vmatprep.subr.mxu0 0.0
    %2899 = vmatpush1.msra.mxu0 0.0
    %2900 = vmatprep.subr.mxu0 0.0
    %2901 = vmatpush1.msra.mxu0 0.0
    %2902 = vmatprep.subr.mxu0 0.0
    %2903 = vmatpush1.msra.mxu0 0.0
    %2904 = vmatprep.subr.mxu0 0.0
    %2905 = vmatpush1.msra.mxu0 0.0
    %2906 = vmatprep.subr.mxu0 0.0
    %2907 = vmatpush1.msra.mxu0 0.0
    %2908 = vmatprep.subr.mxu0 0.0
    %2909 = vmatpush1.msra.mxu0 0.0
    %2910 = vmatprep.subr.mxu0 0.0
    %2911 = vmatpush1.msra.mxu0 0.0
    %2912 = vmatprep.subr.mxu0 0.0
    %2913 = vmatpush1.msra.mxu0 0.0
    %2914 = vmatprep.subr.mxu0 0.0
    %2915 = vmatpush1.msra.mxu0 0.0
    %2916 = vmatprep.subr.mxu0 0.0
    %2917 = vmatpush1.msra.mxu0 0.0
    %2918 = vmatprep.subr.mxu0 0.0
    %2919 = vmatpush1.msra.mxu0 0.0
    %2920 = vmatprep.subr.mxu0 0.0
    %2921 = vmatpush1.msra.mxu0 0.0
    %2922 = vmatprep.subr.mxu0 0.0
    %2923 = vmatpush1.msra.mxu0 0.0
    %2924 = vmatprep.subr.mxu0 0.0
    %2925 = vmatpush1.msra.mxu0 0.0
    %2926 = vmatprep.subr.mxu0 0.0
    %2927 = vmatpush1.msra.mxu0 0.0
    %2928 = vmatprep.subr.mxu0 0.0
    %2929 = vmatpush1.msra.mxu0 0.0
    %2930 = vmatprep.subr.mxu0 0.0
    %2931 = vmatpush1.msra.mxu0 0.0
    %2932 = vmatprep.subr.mxu0 0.0
    %2933 = vmatpush1.msra.mxu0 0.0
    %2934 = vmatprep.subr.mxu0 0.0
    %2935 = vmatpush1.msra.mxu0 0.0
    %2936 = vmatprep.subr.mxu0 0.0
    %2937 = vmatpush1.msra.mxu0 0.0
    %2938 = vmatprep.subr.mxu0 0.0
    %2939 = vmatpush1.msra.mxu0 0.0
    %2940 = vmatprep.subr.mxu0 0.0
    %2941 = vmatpush1.msra.mxu0 0.0
    %2942 = vmatprep.subr.mxu0 0.0
    %2943 = vmatpush1.msra.mxu0 0.0
    %2944 = vmatprep.subr.mxu0 0.0
    %2945 = vmatpush1.msra.mxu0 0.0
    %2946 = vmatprep.subr.mxu0 0.0
    %2947 = vmatpush1.msra.mxu0 0.0
    %2948 = vmatprep.subr.mxu0 0.0
    %2949 = vmatpush1.msra.mxu0 0.0
    %2950 = vmatprep.subr.mxu0 0.0
    %2951 = vmatpush1.msra.mxu0 0.0
    %2952 = vmatprep.subr.mxu0 0.0
    %2953 = vmatpush1.msra.mxu0 0.0
    %2954 = vmatprep.subr.mxu0 0.0
    %2955 = vmatpush1.msra.mxu0 0.0
    %2956 = vmatprep.subr.mxu0 0.0
    %2957 = vmatpush1.msra.mxu0 0.0
    %2958 = vmatprep.mubr.f32.mxu0 0.0
    %2959 = vmatmul.mubr.f32.gmra.mrb[0].mxu0 %v2892
    %v2960 = vpop.f32.mrb[0].mxu0
    %v2961 = vadd.f32 0.0, %v2960
    %v2962 = vpop.f32.mrb[0].mxu0
    %2963 = vdwg.mxu0
    %v2965 = vsel %vm168, %v2961, 0
    %2967 = vmatprep.subr.mxu0 0.0
    %2968 = vmatpush1.msra.mxu0 %v1526
    %2969 = vmatprep.subr.mxu0 0.0
    %2970 = vmatpush1.msra.mxu0 0.0
    %2971 = vmatprep.subr.mxu0 0.0
    %2972 = vmatpush1.msra.mxu0 0.0
    %2973 = vmatprep.subr.mxu0 0.0
    %2974 = vmatpush1.msra.mxu0 0.0
    %2975 = vmatprep.subr.mxu0 0.0
    %2976 = vmatpush1.msra.mxu0 0.0
    %2977 = vmatprep.subr.mxu0 0.0
    %2978 = vmatpush1.msra.mxu0 0.0
    %2979 = vmatprep.subr.mxu0 0.0
    %2980 = vmatpush1.msra.mxu0 0.0
    %2981 = vmatprep.subr.mxu0 0.0
    %2982 = vmatpush1.msra.mxu0 0.0
    %2983 = vmatprep.subr.mxu0 0.0
    %2984 = vmatpush1.msra.mxu0 0.0
    %2985 = vmatprep.subr.mxu0 0.0
    %2986 = vmatpush1.msra.mxu0 0.0
    %2987 = vmatprep.subr.mxu0 0.0
    %2988 = vmatpush1.msra.mxu0 0.0
    %2989 = vmatprep.subr.mxu0 0.0
    %2990 = vmatpush1.msra.mxu0 0.0
    %2991 = vmatprep.subr.mxu0 0.0
    %2992 = vmatpush1.msra.mxu0 0.0
    %2993 = vmatprep.subr.mxu0 0.0
    %2994 = vmatpush1.msra.mxu0 0.0
    %2995 = vmatprep.subr.mxu0 0.0
    %2996 = vmatpush1.msra.mxu0 0.0
    %2997 = vmatprep.subr.mxu0 0.0
    %2998 = vmatpush1.msra.mxu0 0.0
    %2999 = vmatprep.subr.mxu0 0.0
    %3000 = vmatpush1.msra.mxu0 0.0
    %3001 = vmatprep.subr.mxu0 0.0
    %3002 = vmatpush1.msra.mxu0 0.0
    %3003 = vmatprep.subr.mxu0 0.0
    %3004 = vmatpush1.msra.mxu0 0.0
    %3005 = vmatprep.subr.mxu0 0.0
    %3006 = vmatpush1.msra.mxu0 0.0
    %3007 = vmatprep.subr.mxu0 0.0
    %3008 = vmatpush1.msra.mxu0 0.0
    %3009 = vmatprep.subr.mxu0 0.0
    %3010 = vmatpush1.msra.mxu0 0.0
    %3011 = vmatprep.subr.mxu0 0.0
    %3012 = vmatpush1.msra.mxu0 0.0
    %3013 = vmatprep.subr.mxu0 0.0
    %3014 = vmatpush1.msra.mxu0 0.0
    %3015 = vmatprep.subr.mxu0 0.0
    %3016 = vmatpush1.msra.mxu0 0.0
    %3017 = vmatprep.subr.mxu0 0.0
    %3018 = vmatpush1.msra.mxu0 0.0
    %3019 = vmatprep.subr.mxu0 0.0
    %3020 = vmatpush1.msra.mxu0 0.0
    %3021 = vmatprep.subr.mxu0 0.0
    %3022 = vmatpush1.msra.mxu0 0.0
    %3023 = vmatprep.subr.mxu0 0.0
    %3024 = vmatpush1.msra.mxu0 0.0
    %3025 = vmatprep.subr.mxu0 0.0
    %3026 = vmatpush1.msra.mxu0 0.0
    %3027 = vmatprep.subr.mxu0 0.0
    %3028 = vmatpush1.msra.mxu0 0.0
    %3029 = vmatprep.subr.mxu0 0.0
    %3030 = vmatpush1.msra.mxu0 0.0
    %3031 = vmatprep.mubr.f32.mxu0 0.0
    %3032 = vmatmul.mubr.f32.gmra.mrb[0].mxu0 %v2965
    %v3033 = vpop.f32.mrb[0].mxu0
    %v3034 = vadd.f32 0.0, %v3033
    %v3035 = vpop.f32.mrb[0].mxu0
    %3036 = vdwg.mxu0
    %v3037 = vadd.f32 %v2797, %v3034
    %v3038 = vld [vmem:[%s5] sm:$0x1]
    %v3040 = vlaneseq
    %v3041 = vshrl.u32 %v3040, 7
    %v3042 = vsub.s32 0, %v3041
    %v3043 = vrot.slane %v3038, %v3042
    %v3045 = vadd.f32 %v1600, %v3043
    %v3046 = vadd.f32 %v3037, %v3043
    %v3047 = vadd.f32 %v48, %v3045
    %v3048 = vadd.f32 %v49, %v3046
    %v3049 = vld [vmem:[%s6] sm:$0x1]
    %v3050 = vld [vmem:[%s7] sm:$0x1]
    %v3051 = vsel %vm74, %v3047, 0.0
    %3052 = vadd.xlane.f32.xlu0 %v3051
    %v3053 = vpop.xlane.xlu0 %3052
    %v3054 = vsel %vm74, %v3048, 0.0
    %3055 = vadd.xlane.f32.xlu0 %v3054
    %v3056 = vpop.xlane.xlu0 %3055
    %v3057 = vrcp.pop 48.0
    %v3058 = vmul.f32 %v3053, %v3057
    %v3059 = vmul.f32 %v3056, %v3057
    %v3060 = vsub.f32 %v3047, %v3058
    %v3061 = vsub.f32 %v3048, %v3059
    %v3062 = vmul.f32 %v3060, %v3060
    %v3063 = vmul.f32 %v3061, %v3061
    %v3064 = vsel %vm74, %v3062, 0.0
    %3065 = vadd.xlane.f32.xlu0 %v3064
    %v3066 = vpop.xlane.xlu0 %3065
    %v3067 = vsel %vm74, %v3063, 0.0
    %3068 = vadd.xlane.f32.xlu0 %v3067
    %v3069 = vpop.xlane.xlu0 %3068
    %v3070 = vmul.f32 %v3066, %v3057
    %v3071 = vmul.f32 %v3069, %v3057
    %v3072 = vadd.f32 %v3070, 1e-05
    %v3073 = vadd.f32 %v3071, 1e-05
    %v3074 = vrsqrt.pop %v3072
    %v3075 = vrsqrt.pop %v3073
    %v3076 = vmul.f32 %v3060, %v3074
    %v3077 = vmul.f32 %v3061, %v3075
    %v3079 = vlaneseq
    %v3080 = vshrl.u32 %v3079, 7
    %v3081 = vsub.s32 0, %v3080
    %v3082 = vrot.slane %v3049, %v3081
    %v3084 = vmul.f32 %v3076, %v3082
    %v3085 = vmul.f32 %v3077, %v3082
    %v3087 = vlaneseq
    %v3088 = vshrl.u32 %v3087, 7
    %v3089 = vsub.s32 0, %v3088
    %v3090 = vrot.slane %v3050, %v3089
    %v3092 = vadd.f32 %v3084, %v3090
    %v3093 = vadd.f32 %v3085, %v3090
    %v3094 = vld [vmem:[%s8] sm:$0xff]
    %v3095 = vld [vmem:[%s8 + $0x8] sm:$0xff]
    %v3096 = vld [vmem:[%s8 + $0x10] sm:$0xff]
    %v3097 = vld [vmem:[%s8 + $0x18] sm:$0xff]
    %v3098 = vld [vmem:[%s8 + $0x20] sm:$0xff]
    %v3099 = vld [vmem:[%s8 + $0x28] sm:$0xff]
    %v3100 = vld [vmem:[%s8 + $0x30] sm:$0xff]
    %v3101 = vld [vmem:[%s8 + $0x38] sm:$0xff]
    %v3102 = vld [vmem:[%s8 + $0x40] sm:$0xff]
    %v3103 = vld [vmem:[%s8 + $0x48] sm:$0xff]
    %v3104 = vld [vmem:[%s8 + $0x50] sm:$0xff]
    %v3105 = vld [vmem:[%s8 + $0x58] sm:$0xff]
    %v3106 = vld [vmem:[%s9] sm:$0x3]
    %v3108 = vlaneseq
    %v3109 = vshrl.u32 %v3108, 7
    %v3110 = vsub.s32 0, %v3109
    %v3111 = vrot.slane %v3106, %v3110
    %v3112 = vlaneseq
    %v3113 = vshrl.u32 %v3112, 7
    %v3114 = vsub.s32 1, %v3113
    %v3115 = vrot.slane %v3106, %v3114
    %v3119 = vsel %vm74, %v3092, 0
    %v3122 = vsel %vm74, %v3093, 0
    %3124 = vmatprep.subr.mxu0 %v3095
    %3125 = vmatpush1.msra.mxu0 %v3094
    %3126 = vmatprep.subr.mxu0 %v3097
    %3127 = vmatpush1.msra.mxu0 %v3096
    %3128 = vmatprep.subr.mxu0 %v3099
    %3129 = vmatpush1.msra.mxu0 %v3098
    %3130 = vmatprep.subr.mxu0 %v3101
    %3131 = vmatpush1.msra.mxu0 %v3100
    %3132 = vmatprep.subr.mxu0 %v3103
    %3133 = vmatpush1.msra.mxu0 %v3102
    %3134 = vmatprep.subr.mxu0 %v3105
    %3135 = vmatpush1.msra.mxu0 %v3104
    %3136 = vmatprep.subr.mxu0 0.0
    %3137 = vmatpush1.msra.mxu0 0.0
    %3138 = vmatprep.subr.mxu0 0.0
    %3139 = vmatpush1.msra.mxu0 0.0
    %3140 = vmatprep.subr.mxu0 0.0
    %3141 = vmatpush1.msra.mxu0 0.0
    %3142 = vmatprep.subr.mxu0 0.0
    %3143 = vmatpush1.msra.mxu0 0.0
    %3144 = vmatprep.subr.mxu0 0.0
    %3145 = vmatpush1.msra.mxu0 0.0
    %3146 = vmatprep.subr.mxu0 0.0
    %3147 = vmatpush1.msra.mxu0 0.0
    %3148 = vmatprep.subr.mxu0 0.0
    %3149 = vmatpush1.msra.mxu0 0.0
    %3150 = vmatprep.subr.mxu0 0.0
    %3151 = vmatpush1.msra.mxu0 0.0
    %3152 = vmatprep.subr.mxu0 0.0
    %3153 = vmatpush1.msra.mxu0 0.0
    %3154 = vmatprep.subr.mxu0 0.0
    %3155 = vmatpush1.msra.mxu0 0.0
    %3156 = vmatprep.subr.mxu0 0.0
    %3157 = vmatpush1.msra.mxu0 0.0
    %3158 = vmatprep.subr.mxu0 0.0
    %3159 = vmatpush1.msra.mxu0 0.0
    %3160 = vmatprep.subr.mxu0 0.0
    %3161 = vmatpush1.msra.mxu0 0.0
    %3162 = vmatprep.subr.mxu0 0.0
    %3163 = vmatpush1.msra.mxu0 0.0
    %3164 = vmatprep.subr.mxu0 0.0
    %3165 = vmatpush1.msra.mxu0 0.0
    %3166 = vmatprep.subr.mxu0 0.0
    %3167 = vmatpush1.msra.mxu0 0.0
    %3168 = vmatprep.subr.mxu0 0.0
    %3169 = vmatpush1.msra.mxu0 0.0
    %3170 = vmatprep.subr.mxu0 0.0
    %3171 = vmatpush1.msra.mxu0 0.0
    %3172 = vmatprep.subr.mxu0 0.0
    %3173 = vmatpush1.msra.mxu0 0.0
    %3174 = vmatprep.subr.mxu0 0.0
    %3175 = vmatpush1.msra.mxu0 0.0
    %3176 = vmatprep.subr.mxu0 0.0
    %3177 = vmatpush1.msra.mxu0 0.0
    %3178 = vmatprep.subr.mxu0 0.0
    %3179 = vmatpush1.msra.mxu0 0.0
    %3180 = vmatprep.subr.mxu0 0.0
    %3181 = vmatpush1.msra.mxu0 0.0
    %3182 = vmatprep.subr.mxu0 0.0
    %3183 = vmatpush1.msra.mxu0 0.0
    %3184 = vmatprep.subr.mxu0 0.0
    %3185 = vmatpush1.msra.mxu0 0.0
    %3186 = vmatprep.subr.mxu0 0.0
    %3187 = vmatpush1.msra.mxu0 0.0
    %3188 = vmatprep.mubr.f32.mxu0 0.0
    %3189 = vmatmul.mubr.f32.gmra.mrb[0].mxu0 %v3119
    %v3190 = vpop.f32.mrb[0].mxu0
    %v3191 = vadd.f32 %v3111, %v3190
    %v3192 = vpop.f32.mrb[0].mxu0
    %v3193 = vadd.f32 %v3115, %v3192
    %3194 = vmatprep.mubr.f32.mxu0 0.0
    %3195 = vmatmul.mubr.f32.gmra.mrb[0].mxu0 %v3122
    %v3196 = vpop.f32.mrb[0].mxu0
    %v3197 = vadd.f32 %v3111, %v3196
    %v3198 = vpop.f32.mrb[0].mxu0
    %v3199 = vadd.f32 %v3115, %v3198
    %3200 = vdwg.mxu0
    %v3201 = vmul.f32 %v3191, 0.5
    %v3202 = vmul.f32 %v3193, 0.5
    %v3203 = vmul.f32 %v3197, 0.5
    %v3204 = vmul.f32 %v3199, 0.5
    %v3205 = vmul.f32 %v3191, 0.70710677
    %v3206 = vmul.f32 %v3193, 0.70710677
    %v3207 = vmul.f32 %v3197, 0.70710677
    %v3208 = vmul.f32 %v3199, 0.70710677
    %v3209 = verf.f32.pop %v3205
    %v3210 = verf.f32.pop %v3206
    %v3211 = verf.f32.pop %v3207
    %v3212 = verf.f32.pop %v3208
    %v3213 = vadd.f32 %v3209, 1.0
    %v3214 = vadd.f32 %v3210, 1.0
    %v3215 = vadd.f32 %v3211, 1.0
    %v3216 = vadd.f32 %v3212, 1.0
    %v3217 = vmul.f32 %v3201, %v3213
    %v3218 = vmul.f32 %v3202, %v3214
    %v3219 = vmul.f32 %v3203, %v3215
    %v3220 = vmul.f32 %v3204, %v3216
    %v3221 = vld [vmem:[%s10] sm:$0xff]
    %v3222 = vld [vmem:[%s10 + $0x8] sm:$0xff]
    %v3223 = vld [vmem:[%s10 + $0x10] sm:$0xff]
    %v3224 = vld [vmem:[%s10 + $0x18] sm:$0xff]
    %v3225 = vld [vmem:[%s10 + $0x20] sm:$0xff]
    %v3226 = vld [vmem:[%s10 + $0x28] sm:$0xff]
    %v3227 = vld [vmem:[%s10 + $0x30] sm:$0xff]
    %v3228 = vld [vmem:[%s10 + $0x38] sm:$0xff]
    %v3229 = vld [vmem:[%s10 + $0x40] sm:$0xff]
    %v3230 = vld [vmem:[%s10 + $0x48] sm:$0xff]
    %v3231 = vld [vmem:[%s10 + $0x50] sm:$0xff]
    %v3232 = vld [vmem:[%s10 + $0x58] sm:$0xff]
    %v3233 = vld [vmem:[%s10 + $0x60] sm:$0xff]
    %v3234 = vld [vmem:[%s10 + $0x68] sm:$0xff]
    %v3235 = vld [vmem:[%s10 + $0x70] sm:$0xff]
    %v3236 = vld [vmem:[%s10 + $0x78] sm:$0xff]
    %v3237 = vld [vmem:[%s10 + $0x80] sm:$0xff]
    %v3238 = vld [vmem:[%s10 + $0x88] sm:$0xff]
    %v3239 = vld [vmem:[%s10 + $0x90] sm:$0xff]
    %v3240 = vld [vmem:[%s10 + $0x98] sm:$0xff]
    %v3241 = vld [vmem:[%s10 + $0xa0] sm:$0xff]
    %v3242 = vld [vmem:[%s10 + $0xa8] sm:$0xff]
    %v3243 = vld [vmem:[%s10 + $0xb0] sm:$0xff]
    %v3244 = vld [vmem:[%s10 + $0xb8] sm:$0xff]
    %v3245 = vld [vmem:[%s11] sm:$0x1]
    %v3247 = vlaneseq
    %v3248 = vshrl.u32 %v3247, 7
    %v3249 = vsub.s32 0, %v3248
    %v3250 = vrot.slane %v3245, %v3249
    %vm3252 = vcmask 523264
    %v3254 = vsel %vm3252, %v3218, 0
    %v3257 = vsel %vm3252, %v3220, 0
    %3259 = vmatprep.subr.mxu0 0.0
    %3260 = vmatpush1.msra.mxu0 %v3221
    %3261 = vmatprep.subr.mxu0 0.0
    %3262 = vmatpush1.msra.mxu0 %v3222
    %3263 = vmatprep.subr.mxu0 0.0
    %3264 = vmatpush1.msra.mxu0 %v3223
    %3265 = vmatprep.subr.mxu0 0.0
    %3266 = vmatpush1.msra.mxu0 %v3224
    %3267 = vmatprep.subr.mxu0 0.0
    %3268 = vmatpush1.msra.mxu0 %v3225
    %3269 = vmatprep.subr.mxu0 0.0
    %3270 = vmatpush1.msra.mxu0 %v3226
    %3271 = vmatprep.subr.mxu0 0.0
    %3272 = vmatpush1.msra.mxu0 %v3227
    %3273 = vmatprep.subr.mxu0 0.0
    %3274 = vmatpush1.msra.mxu0 %v3228
    %3275 = vmatprep.subr.mxu0 0.0
    %3276 = vmatpush1.msra.mxu0 %v3229
    %3277 = vmatprep.subr.mxu0 0.0
    %3278 = vmatpush1.msra.mxu0 %v3230
    %3279 = vmatprep.subr.mxu0 0.0
    %3280 = vmatpush1.msra.mxu0 %v3231
    %3281 = vmatprep.subr.mxu0 0.0
    %3282 = vmatpush1.msra.mxu0 %v3232
    %3283 = vmatprep.subr.mxu0 0.0
    %3284 = vmatpush1.msra.mxu0 %v3233
    %3285 = vmatprep.subr.mxu0 0.0
    %3286 = vmatpush1.msra.mxu0 %v3234
    %3287 = vmatprep.subr.mxu0 0.0
    %3288 = vmatpush1.msra.mxu0 %v3235
    %3289 = vmatprep.subr.mxu0 0.0
    %3290 = vmatpush1.msra.mxu0 %v3236
    %3291 = vmatprep.subr.mxu0 0.0
    %3292 = vmatpush1.msra.mxu0 %v3237
    %3293 = vmatprep.subr.mxu0 0.0
    %3294 = vmatpush1.msra.mxu0 %v3238
    %3295 = vmatprep.subr.mxu0 0.0
    %3296 = vmatpush1.msra.mxu0 %v3239
    %3297 = vmatprep.subr.mxu0 0.0
    %3298 = vmatpush1.msra.mxu0 %v3240
    %3299 = vmatprep.subr.mxu0 0.0
    %3300 = vmatpush1.msra.mxu0 %v3241
    %3301 = vmatprep.subr.mxu0 0.0
    %3302 = vmatpush1.msra.mxu0 %v3242
    %3303 = vmatprep.subr.mxu0 0.0
    %3304 = vmatpush1.msra.mxu0 %v3243
    %3305 = vmatprep.subr.mxu0 0.0
    %3306 = vmatpush1.msra.mxu0 %v3244
    %3307 = vmatprep.subr.mxu0 0.0
    %3308 = vmatpush1.msra.mxu0 0.0
    %3309 = vmatprep.subr.mxu0 0.0
    %3310 = vmatpush1.msra.mxu0 0.0
    %3311 = vmatprep.subr.mxu0 0.0
    %3312 = vmatpush1.msra.mxu0 0.0
    %3313 = vmatprep.subr.mxu0 0.0
    %3314 = vmatpush1.msra.mxu0 0.0
    %3315 = vmatprep.subr.mxu0 0.0
    %3316 = vmatpush1.msra.mxu0 0.0
    %3317 = vmatprep.subr.mxu0 0.0
    %3318 = vmatpush1.msra.mxu0 0.0
    %3319 = vmatprep.subr.mxu0 0.0
    %3320 = vmatpush1.msra.mxu0 0.0
    %3321 = vmatprep.subr.mxu0 0.0
    %3322 = vmatpush1.msra.mxu0 0.0
    %3323 = vmatprep.mubr.f32.mxu0 %v3254
    %3324 = vmatmul.mubr.f32.gmra.mrb[0].mxu0 %v3217
    %v3325 = vpop.f32.mrb[0].mxu0
    %v3326 = vadd.f32 %v3250, %v3325
    %v3327 = vpop.f32.mrb[0].mxu0
    %3328 = vmatprep.mubr.f32.mxu0 %v3257
    %3329 = vmatmul.mubr.f32.gmra.mrb[0].mxu0 %v3219
    %v3330 = vpop.f32.mrb[0].mxu0
    %v3331 = vadd.f32 %v3250, %v3330
    %v3332 = vpop.f32.mrb[0].mxu0
    %3333 = vdwg.mxu0
    %v3334 = vadd.f32 %v3092, %v3326
    %v3335 = vadd.f32 %v3093, %v3331
    %v3336 = vld [vmem:[%s12] sm:$0x1]
    %v3337 = vld [vmem:[%s13] sm:$0x1]
    %v3338 = vsel %vm74, %v3334, 0.0
    %3339 = vadd.xlane.f32.xlu0 %v3338
    %v3340 = vpop.xlane.xlu0 %3339
    %v3341 = vsel %vm74, %v3335, 0.0
    %3342 = vadd.xlane.f32.xlu0 %v3341
    %v3343 = vpop.xlane.xlu0 %3342
    %v3344 = vmul.f32 %v3340, %v3057
    %v3345 = vmul.f32 %v3343, %v3057
    %v3346 = vsub.f32 %v3334, %v3344
    %v3347 = vsub.f32 %v3335, %v3345
    %v3348 = vmul.f32 %v3346, %v3346
    %v3349 = vmul.f32 %v3347, %v3347
    %v3350 = vsel %vm74, %v3348, 0.0
    %3351 = vadd.xlane.f32.xlu0 %v3350
    %v3352 = vpop.xlane.xlu0 %3351
    %v3353 = vsel %vm74, %v3349, 0.0
    %3354 = vadd.xlane.f32.xlu0 %v3353
    %v3355 = vpop.xlane.xlu0 %3354
    %v3356 = vmul.f32 %v3352, %v3057
    %v3357 = vmul.f32 %v3355, %v3057
    %v3358 = vadd.f32 %v3356, 1e-05
    %v3359 = vadd.f32 %v3357, 1e-05
    %v3360 = vrsqrt.pop %v3358
    %v3361 = vrsqrt.pop %v3359
    %v3362 = vmul.f32 %v3346, %v3360
    %v3363 = vmul.f32 %v3347, %v3361
    %v3365 = vlaneseq
    %v3366 = vshrl.u32 %v3365, 7
    %v3367 = vsub.s32 0, %v3366
    %v3368 = vrot.slane %v3336, %v3367
    %v3370 = vmul.f32 %v3362, %v3368
    %v3371 = vmul.f32 %v3363, %v3368
    %v3373 = vlaneseq
    %v3374 = vshrl.u32 %v3373, 7
    %v3375 = vsub.s32 0, %v3374
    %v3376 = vrot.slane %v3337, %v3375
    %v3378 = vadd.f32 %v3370, %v3376
    %v3379 = vadd.f32 %v3371, %v3376
    %3380 = vst.msk [vmem:[#allocation2] sm:$0xff] %vm74, %v3378
    %3381 = vst.msk [vmem:[#allocation2 + $0x8] sm:$0xff] %vm74, %v3379
    // Predicated region
    $region58: #{encoder_layer.1} parent=1 // pred_check
      _
    $region59: #{encoder_layer.1} parent=1 // pred_check_branch
      %3383 = sbr.rel (0) target = $region61
    $region60: #{encoder_layer.1} parent=1 // pred_region
      %s3385 = ssub.s32 256, 256
      %3386 = vsyncadd [#allocation3], %s3385
      %s3387 = sshll.u32 [#allocation2], 4
      %s3388 = int_to_ptr.vmem [resolvable:$true] %s3387
      %3393 = dma.vmem_to_hbm [thread:$0]  %s3388, 256, %s14, [#allocation3], 128, 128, 8
    $region61: #{encoder_layer.1} parent=1 // pred_fallthru
      _
    // Predicated region
    $region62: #{encoder_layer.1} parent=1 // pred_check
      _
    $region63: #{encoder_layer.1} parent=1 // pred_check_branch
      %3395 = sbr.rel (0) target = $region65
    $region64: #{encoder_layer.1} parent=1 // pred_region
      %3396 = dma.done [#allocation3], 256
    $region65: #{encoder_layer.1} parent=1 // pred_fallthru
      _
    %3397 = vsyncpa [#allocation3], 1

</llo_original>
